<compile_context>
chip_gen: v5e
topology: v5e:2x2
jax: 0.10.0
libtpu: 0.0.40
codegen_flags: <defaults>
</compile_context>

<pallas_src>
import jax
import jax.numpy as jnp
import numpy as np
from jax.experimental import pallas as pl
from jax.experimental.pallas import tpu as pltpu


_LANE = 128     # channel tile = one lane width (always dense after padding)
_ROW_BLK = 8    # output rows per grid step (sublane-sized accumulator)


def _make_xcorr_kernel(Hz, Wz, Hx, Wx, Ho, Wo, row_blk):
    """Builds the per-(batch, channel-tile, row-chunk) kernel body."""
    n_full = Ho // row_blk
    rt_tail = Ho - n_full * row_blk

    def kernel(z_ref, x_ref, o_ref, xs_ref):
        # z_ref : (Hz, Wz, 128)                template tile (channels on lanes)
        # x_ref : (Hx, Wx, 128)                search tile, resident across row steps
        # o_ref : (row_blk, Wo, 128)           output row chunk for this grid step
        # xs_ref: (Wz, row_blk+Hz-1, Wo, 128)  f32 pre-shifted / pre-cast bands
        ri = pl.program_id(2)
        z = z_ref[...].astype(jnp.float32)     # tiny; keep resident in f32

        def chunk(r0, rt):
            band = rt + Hz - 1
            # (1) Hoist the unaligned q-shift out of the p loop and
            # (2) cast to f32 exactly once: fill one pre-shifted slab per q.
            for q in range(Wz):
                xs_ref[q, 0:band, :, :] = (
                    x_ref[pl.ds(r0, band), pl.ds(q, Wo), :].astype(jnp.float32))
            # Hot loop: aligned major-axis window loads + fma into the
            # vreg-resident accumulator (mul + add = 2 VALU ops / element).
            # acc starts as the first tap's product (no zeros+add).
            acc = None
            for p in range(Hz):
                for q in range(Wz):
                    window = xs_ref[q, p:p + rt, :, :]
                    term = window * z[p, q]
                    acc = term if acc is None else acc + term
            o_ref[0:rt, :, :] = acc.astype(o_ref.dtype)

        if rt_tail == 0:
            chunk(pl.multiple_of(ri * row_blk, row_blk), row_blk)
        else:
            if n_full > 0:
                @pl.when(ri < n_full)
                def _():
                    chunk(pl.multiple_of(ri * row_blk, row_blk), row_blk)

            @pl.when(ri == n_full)
            def _():
                # Tail row chunk: static offset, fewer rows; out-of-bounds rows
                # of the output block are clipped by Pallas on writeback.
                chunk(n_full * row_blk, rt_tail)

    return kernel


def depthwise_xcorr_nhwc(z_nhwc, x_nhwc):
    """Depthwise cross-correlation on NHWC inputs (preferred model-boundary layout).

    Args:
      z_nhwc: template features, (B, Hz, Wz, C)
      x_nhwc: search  features, (B, Hx, Wx, C)
    Returns:
      correlation map, (B, Hx-Hz+1, Wx-Wz+1, C), dtype of x_nhwc.
    """
    B, Hz, Wz, C = z_nhwc.shape
    Bx, Hx, Wx, Cx = x_nhwc.shape
    assert B == Bx and C == Cx
    Ho, Wo = Hx - Hz + 1, Wx - Wz + 1
    assert Ho > 0 and Wo > 0

    # Lane-dense channels: pad C to a multiple of 128 so every block's last dim
    # is a full 128-lane tile (no ragged blocks / masked partial stores).
    # TODO(synk): ideally the producing conv emits lane-aligned channels so the
    #             pad (and NCHW transposes) never materialize in HBM.
    Cp = ((C + _LANE - 1) // _LANE) * _LANE
    if Cp != C:
        pad = [(0, 0), (0, 0), (0, 0), (0, Cp - C)]
        z_nhwc = jnp.pad(z_nhwc, pad)
        x_nhwc = jnp.pad(x_nhwc, pad)
    n_ct = Cp // _LANE

    row_blk = min(_ROW_BLK, Ho)
    n_rows = pl.cdiv(Ho, row_blk)

    kernel = _make_xcorr_kernel(Hz, Wz, Hx, Wx, Ho, Wo, row_blk)

    out_dtype = x_nhwc.dtype
    cost = pl.CostEstimate(
        flops=2 * B * Cp * Ho * Wo * Hz * Wz,
        transcendentals=0,
        bytes_accessed=(z_nhwc.size * z_nhwc.dtype.itemsize
                        + x_nhwc.size * x_nhwc.dtype.itemsize
                        + B * Ho * Wo * Cp * jnp.dtype(out_dtype).itemsize),
    )

    out = pl.pallas_call(
        kernel,
        out_shape=jax.ShapeDtypeStruct((B, Ho, Wo, Cp), out_dtype),
        grid_spec=pltpu.PrefetchScalarGridSpec(
            num_scalar_prefetch=0,
            # Row axis innermost: the x/z blocks (index_map independent of r)
            # stay resident in VMEM across consecutive row steps (no re-DMA).
            grid=(B, n_ct, n_rows),
            in_specs=[
                pl.BlockSpec((None, Hz, Wz, _LANE), lambda b, c, r: (b, 0, 0, c)),
                pl.BlockSpec((None, Hx, Wx, _LANE), lambda b, c, r: (b, 0, 0, c)),
            ],
            out_specs=pl.BlockSpec((None, row_blk, Wo, _LANE),
                                   lambda b, c, r: (b, r, 0, c)),
            scratch_shapes=[
                pltpu.VMEM((Wz, row_blk + Hz - 1, Wo, _LANE), jnp.float32)],
        ),
        compiler_params=pltpu.CompilerParams(
            dimension_semantics=("parallel", "parallel", "parallel")),
        cost_estimate=cost,
    )(z_nhwc, x_nhwc)

    if Cp != C:
        out = out[..., :C]
    return out


def depthwise_xcorr(z_f, x_f):
    """Depthwise cross-correlation on PyTorch-style NCHW tensors.

    NOTE: the NCHW<->NHWC transposes exist only for PyTorch layout parity;
    call `depthwise_xcorr_nhwc` directly at the model boundary to avoid two
    extra HBM passes around this small, VALU-bound head.
    """
    B, C, Hz, Wz = z_f.shape
    Bx, Cx, Hx, Wx = x_f.shape
    assert B == Bx and C == Cx
    z_nhwc = jnp.transpose(z_f, (0, 2, 3, 1))
    x_nhwc = jnp.transpose(x_f, (0, 2, 3, 1))
    out_nhwc = depthwise_xcorr_nhwc(z_nhwc, x_nhwc)
    return jnp.transpose(out_nhwc, (0, 3, 1, 2))


class MaskPallas:
    """JAX/Pallas counterpart of the PyTorch `Mask` module.

    The PyTorch base class declares no parameters in __init__; forward(z_f, x_f)
    is realized as the depthwise cross-correlation used by its concrete
    subclasses (e.g. MaskCorr).
    """

    def __init__(self):
        pass  # no parameters, matching nn.Module Mask.__init__

    def forward(self, z_f, x_f):
        return depthwise_xcorr(z_f, x_f)

    def template(self, template):
        # TODO(synk): abstract in the reference module.
        raise NotImplementedError

    def track(self, search):
        # TODO(synk): abstract in the reference module.
        raise NotImplementedError

    def param_groups(self, start_lr, feature_mult=1):
        # No trainable parameters in the base class.
        return []


def _reference_xcorr(z_f, x_f):
    """Plain-JAX reference (NCHW) for correctness checking."""
    B, C, Hz, Wz = z_f.shape
    _, _, Hx, Wx = x_f.shape
    Ho, Wo = Hx - Hz + 1, Wx - Wz + 1
    out = jnp.zeros((B, C, Ho, Wo), jnp.float32)
    for p in range(Hz):
        for q in range(Wz):
            out = out + (x_f[:, :, p:p + Ho, q:q + Wo].astype(jnp.float32)
                         * z_f[:, :, p, q][:, :, None, None].astype(jnp.float32))
    return out.astype(x_f.dtype)


if __name__ == "__main__":
    key = jax.random.PRNGKey(0)
    k1, k2, k3, k4 = jax.random.split(key, 4)

    mask = MaskPallas()

    # Case 1: small C (padded 8 -> 128 lanes), tail row chunk (Ho = 13 = 8 + 5).
    B, C, Hz, Wz = 2, 8, 4, 4
    Hx, Wx = 16, 16
    z1 = jax.random.normal(k1, (B, C, Hz, Wz), dtype=jnp.float32)
    x1 = jax.random.normal(k2, (B, C, Hx, Wx), dtype=jnp.float32)
    out1 = jax.block_until_ready(mask.forward(z1, x1))
    np.testing.assert_allclose(np.asarray(out1),
                               np.asarray(_reference_xcorr(z1, x1)),
                               rtol=1e-5, atol=1e-5)

    # Case 2: channel-tiled path (C=256 -> 2 lane tiles, second "parallel" grid
    # axis), bf16 inputs exercising the cast-once-into-scratch path, exact row
    # chunks (Ho = 8).
    B2, C2, Hz2, Wz2 = 1, 256, 3, 3
    Hx2, Wx2 = 10, 10
    z2 = jax.random.normal(k3, (B2, C2, Hz2, Wz2), dtype=jnp.bfloat16)
    x2 = jax.random.normal(k4, (B2, C2, Hx2, Wx2), dtype=jnp.bfloat16)
    out2 = jax.block_until_ready(mask.forward(z2, x2))
    ref2 = _reference_xcorr(z2, x2)
    np.testing.assert_allclose(np.asarray(out2.astype(jnp.float32)),
                               np.asarray(ref2.astype(jnp.float32)),
                               rtol=2e-2, atol=2e-2)

    print("KERNEL_OK")
</pallas_src>

<mosaic_0001>
module attributes {stable_mosaic.version = 11 : i64} {
  func.func @kernel(%arg0: i32, %arg1: i32, %arg2: i32, %arg3: memref<1x4x4x128xf32, #tpu.memory_space<vmem>>, %arg4: memref<1x16x16x128xf32, #tpu.memory_space<vmem>>, %arg5: memref<1x8x13x128xf32, #tpu.memory_space<vmem>>, %arg6: memref<4x11x13x128xf32, #tpu.memory_space<vmem>>) attributes {dimension_semantics = [#tpu.dimension_semantics<parallel>, #tpu.dimension_semantics<parallel>, #tpu.dimension_semantics<parallel>], iteration_bounds = array<i64: 2, 1, 2>, scalar_prefetch = 0 : i64, scratch_operands = 1 : i64, tpu.core_type = #tpu.core_type<tc>, window_params = [{transform_indices = @transform_0, window_bounds = array<i64: 1, 4, 4, 128>}, {transform_indices = @transform_1, window_bounds = array<i64: 1, 16, 16, 128>}, {transform_indices = @transform_2, window_bounds = array<i64: 1, 8, 13, 128>}]} {
    %c0 = arith.constant 0 : index
    %c0_0 = arith.constant 0 : index
    %c0_1 = arith.constant 0 : index
    %c0_2 = arith.constant 0 : index
    %0 = vector.load %arg3[%c0, %c0_0, %c0_1, %c0_2] : memref<1x4x4x128xf32, #tpu.memory_space<vmem>>, vector<1x4x4x128xf32>
    %1 = vector.shape_cast %0 : vector<1x4x4x128xf32> to vector<4x4x128xf32>
    %c1_i32 = arith.constant 1 : i32
    %2 = arith.cmpi slt, %arg2, %c1_i32 : i32
    %3 = arith.extui %2 : i1 to i32
    %c0_i32 = arith.constant 0 : i32
    %4 = arith.cmpi ne, %3, %c0_i32 : i32
    scf.if %4 {
      %c8_i32 = arith.constant 8 : i32
      %8 = arith.muli %arg2, %c8_i32 : i32
      %9 = tpu.assume_multiple %8, 8 : i32
      %c0_5 = arith.constant 0 : index
      %10 = arith.index_cast %9 : i32 to index
      %c0_6 = arith.constant 0 : index
      %c0_7 = arith.constant 0 : index
      %11 = vector.load %arg4[%c0_5, %10, %c0_6, %c0_7] : memref<1x16x16x128xf32, #tpu.memory_space<vmem>>, vector<1x11x13x128xf32>
      %12 = vector.shape_cast %11 : vector<1x11x13x128xf32> to vector<11x13x128xf32>
      %c0_8 = arith.constant 0 : index
      %c0_9 = arith.constant 0 : index
      %c0_10 = arith.constant 0 : index
      %c0_11 = arith.constant 0 : index
      %13 = vector.load %arg6[%c0_8, %c0_9, %c0_10, %c0_11] : memref<4x11x13x128xf32, #tpu.memory_space<vmem>>, vector<1x11x13x128xf32>
      %14 = vector.shape_cast %13 : vector<1x11x13x128xf32> to vector<11x13x128xf32>
      %15 = vector.shape_cast %12 : vector<11x13x128xf32> to vector<1x11x13x128xf32>
      tpu.vector_store %arg6[%c0_8, %c0_9, %c0_10, %c0_11], %15 {strides = array<i32>} : memref<4x11x13x128xf32, #tpu.memory_space<vmem>>, vector<1x11x13x128xf32>,
      %c0_12 = arith.constant 0 : index
      %16 = arith.index_cast %9 : i32 to index
      %c1 = arith.constant 1 : index
      %c0_13 = arith.constant 0 : index
      %17 = vector.load %arg4[%c0_12, %16, %c1, %c0_13] : memref<1x16x16x128xf32, #tpu.memory_space<vmem>>, vector<1x11x13x128xf32>
      %18 = vector.shape_cast %17 : vector<1x11x13x128xf32> to vector<11x13x128xf32>
      %c1_14 = arith.constant 1 : index
      %c0_15 = arith.constant 0 : index
      %c0_16 = arith.constant 0 : index
      %c0_17 = arith.constant 0 : index
      %19 = vector.load %arg6[%c1_14, %c0_15, %c0_16, %c0_17] : memref<4x11x13x128xf32, #tpu.memory_space<vmem>>, vector<1x11x13x128xf32>
      %20 = vector.shape_cast %19 : vector<1x11x13x128xf32> to vector<11x13x128xf32>
      %21 = vector.shape_cast %18 : vector<11x13x128xf32> to vector<1x11x13x128xf32>
      tpu.vector_store %arg6[%c1_14, %c0_15, %c0_16, %c0_17], %21 {strides = array<i32>} : memref<4x11x13x128xf32, #tpu.memory_space<vmem>>, vector<1x11x13x128xf32>,
      %c0_18 = arith.constant 0 : index
      %22 = arith.index_cast %9 : i32 to index
      %c2 = arith.constant 2 : index
      %c0_19 = arith.constant 0 : index
      %23 = vector.load %arg4[%c0_18, %22, %c2, %c0_19] : memref<1x16x16x128xf32, #tpu.memory_space<vmem>>, vector<1x11x13x128xf32>
      %24 = vector.shape_cast %23 : vector<1x11x13x128xf32> to vector<11x13x128xf32>
      %c2_20 = arith.constant 2 : index
      %c0_21 = arith.constant 0 : index
      %c0_22 = arith.constant 0 : index
      %c0_23 = arith.constant 0 : index
      %25 = vector.load %arg6[%c2_20, %c0_21, %c0_22, %c0_23] : memref<4x11x13x128xf32, #tpu.memory_space<vmem>>, vector<1x11x13x128xf32>
      %26 = vector.shape_cast %25 : vector<1x11x13x128xf32> to vector<11x13x128xf32>
      %27 = vector.shape_cast %24 : vector<11x13x128xf32> to vector<1x11x13x128xf32>
      tpu.vector_store %arg6[%c2_20, %c0_21, %c0_22, %c0_23], %27 {strides = array<i32>} : memref<4x11x13x128xf32, #tpu.memory_space<vmem>>, vector<1x11x13x128xf32>,
      %c0_24 = arith.constant 0 : index
      %28 = arith.index_cast %9 : i32 to index
      %c3 = arith.constant 3 : index
      %c0_25 = arith.constant 0 : index
      %29 = vector.load %arg4[%c0_24, %28, %c3, %c0_25] : memref<1x16x16x128xf32, #tpu.memory_space<vmem>>, vector<1x11x13x128xf32>
      %30 = vector.shape_cast %29 : vector<1x11x13x128xf32> to vector<11x13x128xf32>
      %c3_26 = arith.constant 3 : index
      %c0_27 = arith.constant 0 : index
      %c0_28 = arith.constant 0 : index
      %c0_29 = arith.constant 0 : index
      %31 = vector.load %arg6[%c3_26, %c0_27, %c0_28, %c0_29] : memref<4x11x13x128xf32, #tpu.memory_space<vmem>>, vector<1x11x13x128xf32>
      %32 = vector.shape_cast %31 : vector<1x11x13x128xf32> to vector<11x13x128xf32>
      %33 = vector.shape_cast %30 : vector<11x13x128xf32> to vector<1x11x13x128xf32>
      tpu.vector_store %arg6[%c3_26, %c0_27, %c0_28, %c0_29], %33 {strides = array<i32>} : memref<4x11x13x128xf32, #tpu.memory_space<vmem>>, vector<1x11x13x128xf32>,
      %c0_30 = arith.constant 0 : index
      %c0_31 = arith.constant 0 : index
      %c0_32 = arith.constant 0 : index
      %c0_33 = arith.constant 0 : index
      %34 = vector.load %arg6[%c0_30, %c0_31, %c0_32, %c0_33] : memref<4x11x13x128xf32, #tpu.memory_space<vmem>>, vector<1x8x13x128xf32>
      %35 = vector.shape_cast %34 : vector<1x8x13x128xf32> to vector<8x13x128xf32>
      %36 = vector.extract_strided_slice %1 {offsets = [0, 0, 0], sizes = [1, 1, 128], strides = [1, 1, 1]} : vector<4x4x128xf32> to vector<1x1x128xf32>
      %37 = vector.shape_cast %36 : vector<1x1x128xf32> to vector<128xf32>
      %38 = vector.shape_cast %37 : vector<128xf32> to vector<1x1x128xf32>
      %39 = vector.broadcast %38 : vector<1x1x128xf32> to vector<8x13x128xf32>
      %40 = arith.mulf %35, %39 : vector<8x13x128xf32>
      %c1_34 = arith.constant 1 : index
      %c0_35 = arith.constant 0 : index
      %c0_36 = arith.constant 0 : index
      %c0_37 = arith.constant 0 : index
      %41 = vector.load %arg6[%c1_34, %c0_35, %c0_36, %c0_37] : memref<4x11x13x128xf32, #tpu.memory_space<vmem>>, vector<1x8x13x128xf32>
      %42 = vector.shape_cast %41 : vector<1x8x13x128xf32> to vector<8x13x128xf32>
      %43 = vector.extract_strided_slice %1 {offsets = [0, 1, 0], sizes = [1, 1, 128], strides = [1, 1, 1]} : vector<4x4x128xf32> to vector<1x1x128xf32>
      %44 = vector.shape_cast %43 : vector<1x1x128xf32> to vector<128xf32>
      %45 = vector.shape_cast %44 : vector<128xf32> to vector<1x1x128xf32>
      %46 = vector.broadcast %45 : vector<1x1x128xf32> to vector<8x13x128xf32>
      %47 = arith.mulf %42, %46 : vector<8x13x128xf32>
      %48 = arith.addf %40, %47 : vector<8x13x128xf32>
      %c2_38 = arith.constant 2 : index
      %c0_39 = arith.constant 0 : index
      %c0_40 = arith.constant 0 : index
      %c0_41 = arith.constant 0 : index
      %49 = vector.load %arg6[%c2_38, %c0_39, %c0_40, %c0_41] : memref<4x11x13x128xf32, #tpu.memory_space<vmem>>, vector<1x8x13x128xf32>
      %50 = vector.shape_cast %49 : vector<1x8x13x128xf32> to vector<8x13x128xf32>
      %51 = vector.extract_strided_slice %1 {offsets = [0, 2, 0], sizes = [1, 1, 128], strides = [1, 1, 1]} : vector<4x4x128xf32> to vector<1x1x128xf32>
      %52 = vector.shape_cast %51 : vector<1x1x128xf32> to vector<128xf32>
      %53 = vector.shape_cast %52 : vector<128xf32> to vector<1x1x128xf32>
      %54 = vector.broadcast %53 : vector<1x1x128xf32> to vector<8x13x128xf32>
      %55 = arith.mulf %50, %54 : vector<8x13x128xf32>
      %56 = arith.addf %48, %55 : vector<8x13x128xf32>
      %c3_42 = arith.constant 3 : index
      %c0_43 = arith.constant 0 : index
      %c0_44 = arith.constant 0 : index
      %c0_45 = arith.constant 0 : index
      %57 = vector.load %arg6[%c3_42, %c0_43, %c0_44, %c0_45] : memref<4x11x13x128xf32, #tpu.memory_space<vmem>>, vector<1x8x13x128xf32>
      %58 = vector.shape_cast %57 : vector<1x8x13x128xf32> to vector<8x13x128xf32>
      %59 = vector.extract_strided_slice %1 {offsets = [0, 3, 0], sizes = [1, 1, 128], strides = [1, 1, 1]} : vector<4x4x128xf32> to vector<1x1x128xf32>
      %60 = vector.shape_cast %59 : vector<1x1x128xf32> to vector<128xf32>
      %61 = vector.shape_cast %60 : vector<128xf32> to vector<1x1x128xf32>
      %62 = vector.broadcast %61 : vector<1x1x128xf32> to vector<8x13x128xf32>
      %63 = arith.mulf %58, %62 : vector<8x13x128xf32>
      %64 = arith.addf %56, %63 : vector<8x13x128xf32>
      %c0_46 = arith.constant 0 : index
      %c1_47 = arith.constant 1 : index
      %c0_48 = arith.constant 0 : index
      %c0_49 = arith.constant 0 : index
      %65 = vector.load %arg6[%c0_46, %c1_47, %c0_48, %c0_49] : memref<4x11x13x128xf32, #tpu.memory_space<vmem>>, vector<1x8x13x128xf32>
      %66 = vector.shape_cast %65 : vector<1x8x13x128xf32> to vector<8x13x128xf32>
      %67 = vector.extract_strided_slice %1 {offsets = [1, 0, 0], sizes = [1, 1, 128], strides = [1, 1, 1]} : vector<4x4x128xf32> to vector<1x1x128xf32>
      %68 = vector.shape_cast %67 : vector<1x1x128xf32> to vector<128xf32>
      %69 = vector.shape_cast %68 : vector<128xf32> to vector<1x1x128xf32>
      %70 = vector.broadcast %69 : vector<1x1x128xf32> to vector<8x13x128xf32>
      %71 = arith.mulf %66, %70 : vector<8x13x128xf32>
      %72 = arith.addf %64, %71 : vector<8x13x128xf32>
      %c1_50 = arith.constant 1 : index
      %c1_51 = arith.constant 1 : index
      %c0_52 = arith.constant 0 : index
      %c0_53 = arith.constant 0 : index
      %73 = vector.load %arg6[%c1_50, %c1_51, %c0_52, %c0_53] : memref<4x11x13x128xf32, #tpu.memory_space<vmem>>, vector<1x8x13x128xf32>
      %74 = vector.shape_cast %73 : vector<1x8x13x128xf32> to vector<8x13x128xf32>
      %75 = vector.extract_strided_slice %1 {offsets = [1, 1, 0], sizes = [1, 1, 128], strides = [1, 1, 1]} : vector<4x4x128xf32> to vector<1x1x128xf32>
      %76 = vector.shape_cast %75 : vector<1x1x128xf32> to vector<128xf32>
      %77 = vector.shape_cast %76 : vector<128xf32> to vector<1x1x128xf32>
      %78 = vector.broadcast %77 : vector<1x1x128xf32> to vector<8x13x128xf32>
      %79 = arith.mulf %74, %78 : vector<8x13x128xf32>
      %80 = arith.addf %72, %79 : vector<8x13x128xf32>
      %c2_54 = arith.constant 2 : index
      %c1_55 = arith.constant 1 : index
      %c0_56 = arith.constant 0 : index
      %c0_57 = arith.constant 0 : index
      %81 = vector.load %arg6[%c2_54, %c1_55, %c0_56, %c0_57] : memref<4x11x13x128xf32, #tpu.memory_space<vmem>>, vector<1x8x13x128xf32>
      %82 = vector.shape_cast %81 : vector<1x8x13x128xf32> to vector<8x13x128xf32>
      %83 = vector.extract_strided_slice %1 {offsets = [1, 2, 0], sizes = [1, 1, 128], strides = [1, 1, 1]} : vector<4x4x128xf32> to vector<1x1x128xf32>
      %84 = vector.shape_cast %83 : vector<1x1x128xf32> to vector<128xf32>
      %85 = vector.shape_cast %84 : vector<128xf32> to vector<1x1x128xf32>
      %86 = vector.broadcast %85 : vector<1x1x128xf32> to vector<8x13x128xf32>
      %87 = arith.mulf %82, %86 : vector<8x13x128xf32>
      %88 = arith.addf %80, %87 : vector<8x13x128xf32>
      %c3_58 = arith.constant 3 : index
      %c1_59 = arith.constant 1 : index
      %c0_60 = arith.constant 0 : index
      %c0_61 = arith.constant 0 : index
      %89 = vector.load %arg6[%c3_58, %c1_59, %c0_60, %c0_61] : memref<4x11x13x128xf32, #tpu.memory_space<vmem>>, vector<1x8x13x128xf32>
      %90 = vector.shape_cast %89 : vector<1x8x13x128xf32> to vector<8x13x128xf32>
      %91 = vector.extract_strided_slice %1 {offsets = [1, 3, 0], sizes = [1, 1, 128], strides = [1, 1, 1]} : vector<4x4x128xf32> to vector<1x1x128xf32>
      %92 = vector.shape_cast %91 : vector<1x1x128xf32> to vector<128xf32>
      %93 = vector.shape_cast %92 : vector<128xf32> to vector<1x1x128xf32>
      %94 = vector.broadcast %93 : vector<1x1x128xf32> to vector<8x13x128xf32>
      %95 = arith.mulf %90, %94 : vector<8x13x128xf32>
      %96 = arith.addf %88, %95 : vector<8x13x128xf32>
      %c0_62 = arith.constant 0 : index
      %c2_63 = arith.constant 2 : index
      %c0_64 = arith.constant 0 : index
      %c0_65 = arith.constant 0 : index
      %97 = vector.load %arg6[%c0_62, %c2_63, %c0_64, %c0_65] : memref<4x11x13x128xf32, #tpu.memory_space<vmem>>, vector<1x8x13x128xf32>
      %98 = vector.shape_cast %97 : vector<1x8x13x128xf32> to vector<8x13x128xf32>
      %99 = vector.extract_strided_slice %1 {offsets = [2, 0, 0], sizes = [1, 1, 128], strides = [1, 1, 1]} : vector<4x4x128xf32> to vector<1x1x128xf32>
      %100 = vector.shape_cast %99 : vector<1x1x128xf32> to vector<128xf32>
      %101 = vector.shape_cast %100 : vector<128xf32> to vector<1x1x128xf32>
      %102 = vector.broadcast %101 : vector<1x1x128xf32> to vector<8x13x128xf32>
      %103 = arith.mulf %98, %102 : vector<8x13x128xf32>
      %104 = arith.addf %96, %103 : vector<8x13x128xf32>
      %c1_66 = arith.constant 1 : index
      %c2_67 = arith.constant 2 : index
      %c0_68 = arith.constant 0 : index
      %c0_69 = arith.constant 0 : index
      %105 = vector.load %arg6[%c1_66, %c2_67, %c0_68, %c0_69] : memref<4x11x13x128xf32, #tpu.memory_space<vmem>>, vector<1x8x13x128xf32>
      %106 = vector.shape_cast %105 : vector<1x8x13x128xf32> to vector<8x13x128xf32>
      %107 = vector.extract_strided_slice %1 {offsets = [2, 1, 0], sizes = [1, 1, 128], strides = [1, 1, 1]} : vector<4x4x128xf32> to vector<1x1x128xf32>
      %108 = vector.shape_cast %107 : vector<1x1x128xf32> to vector<128xf32>
      %109 = vector.shape_cast %108 : vector<128xf32> to vector<1x1x128xf32>
      %110 = vector.broadcast %109 : vector<1x1x128xf32> to vector<8x13x128xf32>
      %111 = arith.mulf %106, %110 : vector<8x13x128xf32>
      %112 = arith.addf %104, %111 : vector<8x13x128xf32>
      %c2_70 = arith.constant 2 : index
      %c2_71 = arith.constant 2 : index
      %c0_72 = arith.constant 0 : index
      %c0_73 = arith.constant 0 : index
      %113 = vector.load %arg6[%c2_70, %c2_71, %c0_72, %c0_73] : memref<4x11x13x128xf32, #tpu.memory_space<vmem>>, vector<1x8x13x128xf32>
      %114 = vector.shape_cast %113 : vector<1x8x13x128xf32> to vector<8x13x128xf32>
      %115 = vector.extract_strided_slice %1 {offsets = [2, 2, 0], sizes = [1, 1, 128], strides = [1, 1, 1]} : vector<4x4x128xf32> to vector<1x1x128xf32>
      %116 = vector.shape_cast %115 : vector<1x1x128xf32> to vector<128xf32>
      %117 = vector.shape_cast %116 : vector<128xf32> to vector<1x1x128xf32>
      %118 = vector.broadcast %117 : vector<1x1x128xf32> to vector<8x13x128xf32>
      %119 = arith.mulf %114, %118 : vector<8x13x128xf32>
      %120 = arith.addf %112, %119 : vector<8x13x128xf32>
      %c3_74 = arith.constant 3 : index
      %c2_75 = arith.constant 2 : index
      %c0_76 = arith.constant 0 : index
      %c0_77 = arith.constant 0 : index
      %121 = vector.load %arg6[%c3_74, %c2_75, %c0_76, %c0_77] : memref<4x11x13x128xf32, #tpu.memory_space<vmem>>, vector<1x8x13x128xf32>
      %122 = vector.shape_cast %121 : vector<1x8x13x128xf32> to vector<8x13x128xf32>
      %123 = vector.extract_strided_slice %1 {offsets = [2, 3, 0], sizes = [1, 1, 128], strides = [1, 1, 1]} : vector<4x4x128xf32> to vector<1x1x128xf32>
      %124 = vector.shape_cast %123 : vector<1x1x128xf32> to vector<128xf32>
      %125 = vector.shape_cast %124 : vector<128xf32> to vector<1x1x128xf32>
      %126 = vector.broadcast %125 : vector<1x1x128xf32> to vector<8x13x128xf32>
      %127 = arith.mulf %122, %126 : vector<8x13x128xf32>
      %128 = arith.addf %120, %127 : vector<8x13x128xf32>
      %c0_78 = arith.constant 0 : index
      %c3_79 = arith.constant 3 : index
      %c0_80 = arith.constant 0 : index
      %c0_81 = arith.constant 0 : index
      %129 = vector.load %arg6[%c0_78, %c3_79, %c0_80, %c0_81] : memref<4x11x13x128xf32, #tpu.memory_space<vmem>>, vector<1x8x13x128xf32>
      %130 = vector.shape_cast %129 : vector<1x8x13x128xf32> to vector<8x13x128xf32>
      %131 = vector.extract_strided_slice %1 {offsets = [3, 0, 0], sizes = [1, 1, 128], strides = [1, 1, 1]} : vector<4x4x128xf32> to vector<1x1x128xf32>
      %132 = vector.shape_cast %131 : vector<1x1x128xf32> to vector<128xf32>
      %133 = vector.shape_cast %132 : vector<128xf32> to vector<1x1x128xf32>
      %134 = vector.broadcast %133 : vector<1x1x128xf32> to vector<8x13x128xf32>
      %135 = arith.mulf %130, %134 : vector<8x13x128xf32>
      %136 = arith.addf %128, %135 : vector<8x13x128xf32>
      %c1_82 = arith.constant 1 : index
      %c3_83 = arith.constant 3 : index
      %c0_84 = arith.constant 0 : index
      %c0_85 = arith.constant 0 : index
      %137 = vector.load %arg6[%c1_82, %c3_83, %c0_84, %c0_85] : memref<4x11x13x128xf32, #tpu.memory_space<vmem>>, vector<1x8x13x128xf32>
      %138 = vector.shape_cast %137 : vector<1x8x13x128xf32> to vector<8x13x128xf32>
      %139 = vector.extract_strided_slice %1 {offsets = [3, 1, 0], sizes = [1, 1, 128], strides = [1, 1, 1]} : vector<4x4x128xf32> to vector<1x1x128xf32>
      %140 = vector.shape_cast %139 : vector<1x1x128xf32> to vector<128xf32>
      %141 = vector.shape_cast %140 : vector<128xf32> to vector<1x1x128xf32>
      %142 = vector.broadcast %141 : vector<1x1x128xf32> to vector<8x13x128xf32>
      %143 = arith.mulf %138, %142 : vector<8x13x128xf32>
      %144 = arith.addf %136, %143 : vector<8x13x128xf32>
      %c2_86 = arith.constant 2 : index
      %c3_87 = arith.constant 3 : index
      %c0_88 = arith.constant 0 : index
      %c0_89 = arith.constant 0 : index
      %145 = vector.load %arg6[%c2_86, %c3_87, %c0_88, %c0_89] : memref<4x11x13x128xf32, #tpu.memory_space<vmem>>, vector<1x8x13x128xf32>
      %146 = vector.shape_cast %145 : vector<1x8x13x128xf32> to vector<8x13x128xf32>
      %147 = vector.extract_strided_slice %1 {offsets = [3, 2, 0], sizes = [1, 1, 128], strides = [1, 1, 1]} : vector<4x4x128xf32> to vector<1x1x128xf32>
      %148 = vector.shape_cast %147 : vector<1x1x128xf32> to vector<128xf32>
      %149 = vector.shape_cast %148 : vector<128xf32> to vector<1x1x128xf32>
      %150 = vector.broadcast %149 : vector<1x1x128xf32> to vector<8x13x128xf32>
      %151 = arith.mulf %146, %150 : vector<8x13x128xf32>
      %152 = arith.addf %144, %151 : vector<8x13x128xf32>
      %c3_90 = arith.constant 3 : index
      %c3_91 = arith.constant 3 : index
      %c0_92 = arith.constant 0 : index
      %c0_93 = arith.constant 0 : index
      %153 = vector.load %arg6[%c3_90, %c3_91, %c0_92, %c0_93] : memref<4x11x13x128xf32, #tpu.memory_space<vmem>>, vector<1x8x13x128xf32>
      %154 = vector.shape_cast %153 : vector<1x8x13x128xf32> to vector<8x13x128xf32>
      %155 = vector.extract_strided_slice %1 {offsets = [3, 3, 0], sizes = [1, 1, 128], strides = [1, 1, 1]} : vector<4x4x128xf32> to vector<1x1x128xf32>
      %156 = vector.shape_cast %155 : vector<1x1x128xf32> to vector<128xf32>
      %157 = vector.shape_cast %156 : vector<128xf32> to vector<1x1x128xf32>
      %158 = vector.broadcast %157 : vector<1x1x128xf32> to vector<8x13x128xf32>
      %159 = arith.mulf %154, %158 : vector<8x13x128xf32>
      %160 = arith.addf %152, %159 : vector<8x13x128xf32>
      %c0_94 = arith.constant 0 : index
      %c0_95 = arith.constant 0 : index
      %c0_96 = arith.constant 0 : index
      %c0_97 = arith.constant 0 : index
      %161 = vector.load %arg5[%c0_94, %c0_95, %c0_96, %c0_97] : memref<1x8x13x128xf32, #tpu.memory_space<vmem>>, vector<1x8x13x128xf32>
      %162 = vector.shape_cast %161 : vector<1x8x13x128xf32> to vector<8x13x128xf32>
      %163 = vector.shape_cast %160 : vector<8x13x128xf32> to vector<1x8x13x128xf32>
      tpu.vector_store %arg5[%c0_94, %c0_95, %c0_96, %c0_97], %163 {strides = array<i32>} : memref<1x8x13x128xf32, #tpu.memory_space<vmem>>, vector<1x8x13x128xf32>,
    } else {
    }
    %c1_i32_3 = arith.constant 1 : i32
    %5 = arith.cmpi eq, %arg2, %c1_i32_3 : i32
    %6 = arith.extui %5 : i1 to i32
    %c0_i32_4 = arith.constant 0 : i32
    %7 = arith.cmpi ne, %6, %c0_i32_4 : i32
    scf.if %7 {
      %c0_5 = arith.constant 0 : index
      %c8 = arith.constant 8 : index
      %c0_6 = arith.constant 0 : index
      %c0_7 = arith.constant 0 : index
      %8 = vector.load %arg4[%c0_5, %c8, %c0_6, %c0_7] : memref<1x16x16x128xf32, #tpu.memory_space<vmem>>, vector<1x8x13x128xf32>
      %9 = vector.shape_cast %8 : vector<1x8x13x128xf32> to vector<8x13x128xf32>
      %c0_8 = arith.constant 0 : index
      %c0_9 = arith.constant 0 : index
      %c0_10 = arith.constant 0 : index
      %c0_11 = arith.constant 0 : index
      %10 = vector.load %arg6[%c0_8, %c0_9, %c0_10, %c0_11] : memref<4x11x13x128xf32, #tpu.memory_space<vmem>>, vector<1x8x13x128xf32>
      %11 = vector.shape_cast %10 : vector<1x8x13x128xf32> to vector<8x13x128xf32>
      %12 = vector.shape_cast %9 : vector<8x13x128xf32> to vector<1x8x13x128xf32>
      tpu.vector_store %arg6[%c0_8, %c0_9, %c0_10, %c0_11], %12 {strides = array<i32>} : memref<4x11x13x128xf32, #tpu.memory_space<vmem>>, vector<1x8x13x128xf32>,
      %c0_12 = arith.constant 0 : index
      %c8_13 = arith.constant 8 : index
      %c1 = arith.constant 1 : index
      %c0_14 = arith.constant 0 : index
      %13 = vector.load %arg4[%c0_12, %c8_13, %c1, %c0_14] : memref<1x16x16x128xf32, #tpu.memory_space<vmem>>, vector<1x8x13x128xf32>
      %14 = vector.shape_cast %13 : vector<1x8x13x128xf32> to vector<8x13x128xf32>
      %c1_15 = arith.constant 1 : index
      %c0_16 = arith.constant 0 : index
      %c0_17 = arith.constant 0 : index
      %c0_18 = arith.constant 0 : index
      %15 = vector.load %arg6[%c1_15, %c0_16, %c0_17, %c0_18] : memref<4x11x13x128xf32, #tpu.memory_space<vmem>>, vector<1x8x13x128xf32>
      %16 = vector.shape_cast %15 : vector<1x8x13x128xf32> to vector<8x13x128xf32>
      %17 = vector.shape_cast %14 : vector<8x13x128xf32> to vector<1x8x13x128xf32>
      tpu.vector_store %arg6[%c1_15, %c0_16, %c0_17, %c0_18], %17 {strides = array<i32>} : memref<4x11x13x128xf32, #tpu.memory_space<vmem>>, vector<1x8x13x128xf32>,
      %c0_19 = arith.constant 0 : index
      %c8_20 = arith.constant 8 : index
      %c2 = arith.constant 2 : index
      %c0_21 = arith.constant 0 : index
      %18 = vector.load %arg4[%c0_19, %c8_20, %c2, %c0_21] : memref<1x16x16x128xf32, #tpu.memory_space<vmem>>, vector<1x8x13x128xf32>
      %19 = vector.shape_cast %18 : vector<1x8x13x128xf32> to vector<8x13x128xf32>
      %c2_22 = arith.constant 2 : index
      %c0_23 = arith.constant 0 : index
      %c0_24 = arith.constant 0 : index
      %c0_25 = arith.constant 0 : index
      %20 = vector.load %arg6[%c2_22, %c0_23, %c0_24, %c0_25] : memref<4x11x13x128xf32, #tpu.memory_space<vmem>>, vector<1x8x13x128xf32>
      %21 = vector.shape_cast %20 : vector<1x8x13x128xf32> to vector<8x13x128xf32>
      %22 = vector.shape_cast %19 : vector<8x13x128xf32> to vector<1x8x13x128xf32>
      tpu.vector_store %arg6[%c2_22, %c0_23, %c0_24, %c0_25], %22 {strides = array<i32>} : memref<4x11x13x128xf32, #tpu.memory_space<vmem>>, vector<1x8x13x128xf32>,
      %c0_26 = arith.constant 0 : index
      %c8_27 = arith.constant 8 : index
      %c3 = arith.constant 3 : index
      %c0_28 = arith.constant 0 : index
      %23 = vector.load %arg4[%c0_26, %c8_27, %c3, %c0_28] : memref<1x16x16x128xf32, #tpu.memory_space<vmem>>, vector<1x8x13x128xf32>
      %24 = vector.shape_cast %23 : vector<1x8x13x128xf32> to vector<8x13x128xf32>
      %c3_29 = arith.constant 3 : index
      %c0_30 = arith.constant 0 : index
      %c0_31 = arith.constant 0 : index
      %c0_32 = arith.constant 0 : index
      %25 = vector.load %arg6[%c3_29, %c0_30, %c0_31, %c0_32] : memref<4x11x13x128xf32, #tpu.memory_space<vmem>>, vector<1x8x13x128xf32>
      %26 = vector.shape_cast %25 : vector<1x8x13x128xf32> to vector<8x13x128xf32>
      %27 = vector.shape_cast %24 : vector<8x13x128xf32> to vector<1x8x13x128xf32>
      tpu.vector_store %arg6[%c3_29, %c0_30, %c0_31, %c0_32], %27 {strides = array<i32>} : memref<4x11x13x128xf32, #tpu.memory_space<vmem>>, vector<1x8x13x128xf32>,
      %c0_33 = arith.constant 0 : index
      %c0_34 = arith.constant 0 : index
      %c0_35 = arith.constant 0 : index
      %c0_36 = arith.constant 0 : index
      %28 = vector.load %arg6[%c0_33, %c0_34, %c0_35, %c0_36] : memref<4x11x13x128xf32, #tpu.memory_space<vmem>>, vector<1x5x13x128xf32>
      %29 = vector.shape_cast %28 : vector<1x5x13x128xf32> to vector<5x13x128xf32>
      %30 = vector.extract_strided_slice %1 {offsets = [0, 0, 0], sizes = [1, 1, 128], strides = [1, 1, 1]} : vector<4x4x128xf32> to vector<1x1x128xf32>
      %31 = vector.shape_cast %30 : vector<1x1x128xf32> to vector<128xf32>
      %32 = vector.shape_cast %31 : vector<128xf32> to vector<1x1x128xf32>
      %33 = vector.broadcast %32 : vector<1x1x128xf32> to vector<5x13x128xf32>
      %34 = arith.mulf %29, %33 : vector<5x13x128xf32>
      %c1_37 = arith.constant 1 : index
      %c0_38 = arith.constant 0 : index
      %c0_39 = arith.constant 0 : index
      %c0_40 = arith.constant 0 : index
      %35 = vector.load %arg6[%c1_37, %c0_38, %c0_39, %c0_40] : memref<4x11x13x128xf32, #tpu.memory_space<vmem>>, vector<1x5x13x128xf32>
      %36 = vector.shape_cast %35 : vector<1x5x13x128xf32> to vector<5x13x128xf32>
      %37 = vector.extract_strided_slice %1 {offsets = [0, 1, 0], sizes = [1, 1, 128], strides = [1, 1, 1]} : vector<4x4x128xf32> to vector<1x1x128xf32>
      %38 = vector.shape_cast %37 : vector<1x1x128xf32> to vector<128xf32>
      %39 = vector.shape_cast %38 : vector<128xf32> to vector<1x1x128xf32>
      %40 = vector.broadcast %39 : vector<1x1x128xf32> to vector<5x13x128xf32>
      %41 = arith.mulf %36, %40 : vector<5x13x128xf32>
      %42 = arith.addf %34, %41 : vector<5x13x128xf32>
      %c2_41 = arith.constant 2 : index
      %c0_42 = arith.constant 0 : index
      %c0_43 = arith.constant 0 : index
      %c0_44 = arith.constant 0 : index
      %43 = vector.load %arg6[%c2_41, %c0_42, %c0_43, %c0_44] : memref<4x11x13x128xf32, #tpu.memory_space<vmem>>, vector<1x5x13x128xf32>
      %44 = vector.shape_cast %43 : vector<1x5x13x128xf32> to vector<5x13x128xf32>
      %45 = vector.extract_strided_slice %1 {offsets = [0, 2, 0], sizes = [1, 1, 128], strides = [1, 1, 1]} : vector<4x4x128xf32> to vector<1x1x128xf32>
      %46 = vector.shape_cast %45 : vector<1x1x128xf32> to vector<128xf32>
      %47 = vector.shape_cast %46 : vector<128xf32> to vector<1x1x128xf32>
      %48 = vector.broadcast %47 : vector<1x1x128xf32> to vector<5x13x128xf32>
      %49 = arith.mulf %44, %48 : vector<5x13x128xf32>
      %50 = arith.addf %42, %49 : vector<5x13x128xf32>
      %c3_45 = arith.constant 3 : index
      %c0_46 = arith.constant 0 : index
      %c0_47 = arith.constant 0 : index
      %c0_48 = arith.constant 0 : index
      %51 = vector.load %arg6[%c3_45, %c0_46, %c0_47, %c0_48] : memref<4x11x13x128xf32, #tpu.memory_space<vmem>>, vector<1x5x13x128xf32>
      %52 = vector.shape_cast %51 : vector<1x5x13x128xf32> to vector<5x13x128xf32>
      %53 = vector.extract_strided_slice %1 {offsets = [0, 3, 0], sizes = [1, 1, 128], strides = [1, 1, 1]} : vector<4x4x128xf32> to vector<1x1x128xf32>
      %54 = vector.shape_cast %53 : vector<1x1x128xf32> to vector<128xf32>
      %55 = vector.shape_cast %54 : vector<128xf32> to vector<1x1x128xf32>
      %56 = vector.broadcast %55 : vector<1x1x128xf32> to vector<5x13x128xf32>
      %57 = arith.mulf %52, %56 : vector<5x13x128xf32>
      %58 = arith.addf %50, %57 : vector<5x13x128xf32>
      %c0_49 = arith.constant 0 : index
      %c1_50 = arith.constant 1 : index
      %c0_51 = arith.constant 0 : index
      %c0_52 = arith.constant 0 : index
      %59 = vector.load %arg6[%c0_49, %c1_50, %c0_51, %c0_52] : memref<4x11x13x128xf32, #tpu.memory_space<vmem>>, vector<1x5x13x128xf32>
      %60 = vector.shape_cast %59 : vector<1x5x13x128xf32> to vector<5x13x128xf32>
      %61 = vector.extract_strided_slice %1 {offsets = [1, 0, 0], sizes = [1, 1, 128], strides = [1, 1, 1]} : vector<4x4x128xf32> to vector<1x1x128xf32>
      %62 = vector.shape_cast %61 : vector<1x1x128xf32> to vector<128xf32>
      %63 = vector.shape_cast %62 : vector<128xf32> to vector<1x1x128xf32>
      %64 = vector.broadcast %63 : vector<1x1x128xf32> to vector<5x13x128xf32>
      %65 = arith.mulf %60, %64 : vector<5x13x128xf32>
      %66 = arith.addf %58, %65 : vector<5x13x128xf32>
      %c1_53 = arith.constant 1 : index
      %c1_54 = arith.constant 1 : index
      %c0_55 = arith.constant 0 : index
      %c0_56 = arith.constant 0 : index
      %67 = vector.load %arg6[%c1_53, %c1_54, %c0_55, %c0_56] : memref<4x11x13x128xf32, #tpu.memory_space<vmem>>, vector<1x5x13x128xf32>
      %68 = vector.shape_cast %67 : vector<1x5x13x128xf32> to vector<5x13x128xf32>
      %69 = vector.extract_strided_slice %1 {offsets = [1, 1, 0], sizes = [1, 1, 128], strides = [1, 1, 1]} : vector<4x4x128xf32> to vector<1x1x128xf32>
      %70 = vector.shape_cast %69 : vector<1x1x128xf32> to vector<128xf32>
      %71 = vector.shape_cast %70 : vector<128xf32> to vector<1x1x128xf32>
      %72 = vector.broadcast %71 : vector<1x1x128xf32> to vector<5x13x128xf32>
      %73 = arith.mulf %68, %72 : vector<5x13x128xf32>
      %74 = arith.addf %66, %73 : vector<5x13x128xf32>
      %c2_57 = arith.constant 2 : index
      %c1_58 = arith.constant 1 : index
      %c0_59 = arith.constant 0 : index
      %c0_60 = arith.constant 0 : index
      %75 = vector.load %arg6[%c2_57, %c1_58, %c0_59, %c0_60] : memref<4x11x13x128xf32, #tpu.memory_space<vmem>>, vector<1x5x13x128xf32>
      %76 = vector.shape_cast %75 : vector<1x5x13x128xf32> to vector<5x13x128xf32>
      %77 = vector.extract_strided_slice %1 {offsets = [1, 2, 0], sizes = [1, 1, 128], strides = [1, 1, 1]} : vector<4x4x128xf32> to vector<1x1x128xf32>
      %78 = vector.shape_cast %77 : vector<1x1x128xf32> to vector<128xf32>
      %79 = vector.shape_cast %78 : vector<128xf32> to vector<1x1x128xf32>
      %80 = vector.broadcast %79 : vector<1x1x128xf32> to vector<5x13x128xf32>
      %81 = arith.mulf %76, %80 : vector<5x13x128xf32>
      %82 = arith.addf %74, %81 : vector<5x13x128xf32>
      %c3_61 = arith.constant 3 : index
      %c1_62 = arith.constant 1 : index
      %c0_63 = arith.constant 0 : index
      %c0_64 = arith.constant 0 : index
      %83 = vector.load %arg6[%c3_61, %c1_62, %c0_63, %c0_64] : memref<4x11x13x128xf32, #tpu.memory_space<vmem>>, vector<1x5x13x128xf32>
      %84 = vector.shape_cast %83 : vector<1x5x13x128xf32> to vector<5x13x128xf32>
      %85 = vector.extract_strided_slice %1 {offsets = [1, 3, 0], sizes = [1, 1, 128], strides = [1, 1, 1]} : vector<4x4x128xf32> to vector<1x1x128xf32>
      %86 = vector.shape_cast %85 : vector<1x1x128xf32> to vector<128xf32>
      %87 = vector.shape_cast %86 : vector<128xf32> to vector<1x1x128xf32>
      %88 = vector.broadcast %87 : vector<1x1x128xf32> to vector<5x13x128xf32>
      %89 = arith.mulf %84, %88 : vector<5x13x128xf32>
      %90 = arith.addf %82, %89 : vector<5x13x128xf32>
      %c0_65 = arith.constant 0 : index
      %c2_66 = arith.constant 2 : index
      %c0_67 = arith.constant 0 : index
      %c0_68 = arith.constant 0 : index
      %91 = vector.load %arg6[%c0_65, %c2_66, %c0_67, %c0_68] : memref<4x11x13x128xf32, #tpu.memory_space<vmem>>, vector<1x5x13x128xf32>
      %92 = vector.shape_cast %91 : vector<1x5x13x128xf32> to vector<5x13x128xf32>
      %93 = vector.extract_strided_slice %1 {offsets = [2, 0, 0], sizes = [1, 1, 128], strides = [1, 1, 1]} : vector<4x4x128xf32> to vector<1x1x128xf32>
      %94 = vector.shape_cast %93 : vector<1x1x128xf32> to vector<128xf32>
      %95 = vector.shape_cast %94 : vector<128xf32> to vector<1x1x128xf32>
      %96 = vector.broadcast %95 : vector<1x1x128xf32> to vector<5x13x128xf32>
      %97 = arith.mulf %92, %96 : vector<5x13x128xf32>
      %98 = arith.addf %90, %97 : vector<5x13x128xf32>
      %c1_69 = arith.constant 1 : index
      %c2_70 = arith.constant 2 : index
      %c0_71 = arith.constant 0 : index
      %c0_72 = arith.constant 0 : index
      %99 = vector.load %arg6[%c1_69, %c2_70, %c0_71, %c0_72] : memref<4x11x13x128xf32, #tpu.memory_space<vmem>>, vector<1x5x13x128xf32>
      %100 = vector.shape_cast %99 : vector<1x5x13x128xf32> to vector<5x13x128xf32>
      %101 = vector.extract_strided_slice %1 {offsets = [2, 1, 0], sizes = [1, 1, 128], strides = [1, 1, 1]} : vector<4x4x128xf32> to vector<1x1x128xf32>
      %102 = vector.shape_cast %101 : vector<1x1x128xf32> to vector<128xf32>
      %103 = vector.shape_cast %102 : vector<128xf32> to vector<1x1x128xf32>
      %104 = vector.broadcast %103 : vector<1x1x128xf32> to vector<5x13x128xf32>
      %105 = arith.mulf %100, %104 : vector<5x13x128xf32>
      %106 = arith.addf %98, %105 : vector<5x13x128xf32>
      %c2_73 = arith.constant 2 : index
      %c2_74 = arith.constant 2 : index
      %c0_75 = arith.constant 0 : index
      %c0_76 = arith.constant 0 : index
      %107 = vector.load %arg6[%c2_73, %c2_74, %c0_75, %c0_76] : memref<4x11x13x128xf32, #tpu.memory_space<vmem>>, vector<1x5x13x128xf32>
      %108 = vector.shape_cast %107 : vector<1x5x13x128xf32> to vector<5x13x128xf32>
      %109 = vector.extract_strided_slice %1 {offsets = [2, 2, 0], sizes = [1, 1, 128], strides = [1, 1, 1]} : vector<4x4x128xf32> to vector<1x1x128xf32>
      %110 = vector.shape_cast %109 : vector<1x1x128xf32> to vector<128xf32>
      %111 = vector.shape_cast %110 : vector<128xf32> to vector<1x1x128xf32>
      %112 = vector.broadcast %111 : vector<1x1x128xf32> to vector<5x13x128xf32>
      %113 = arith.mulf %108, %112 : vector<5x13x128xf32>
      %114 = arith.addf %106, %113 : vector<5x13x128xf32>
      %c3_77 = arith.constant 3 : index
      %c2_78 = arith.constant 2 : index
      %c0_79 = arith.constant 0 : index
      %c0_80 = arith.constant 0 : index
      %115 = vector.load %arg6[%c3_77, %c2_78, %c0_79, %c0_80] : memref<4x11x13x128xf32, #tpu.memory_space<vmem>>, vector<1x5x13x128xf32>
      %116 = vector.shape_cast %115 : vector<1x5x13x128xf32> to vector<5x13x128xf32>
      %117 = vector.extract_strided_slice %1 {offsets = [2, 3, 0], sizes = [1, 1, 128], strides = [1, 1, 1]} : vector<4x4x128xf32> to vector<1x1x128xf32>
      %118 = vector.shape_cast %117 : vector<1x1x128xf32> to vector<128xf32>
      %119 = vector.shape_cast %118 : vector<128xf32> to vector<1x1x128xf32>
      %120 = vector.broadcast %119 : vector<1x1x128xf32> to vector<5x13x128xf32>
      %121 = arith.mulf %116, %120 : vector<5x13x128xf32>
      %122 = arith.addf %114, %121 : vector<5x13x128xf32>
      %c0_81 = arith.constant 0 : index
      %c3_82 = arith.constant 3 : index
      %c0_83 = arith.constant 0 : index
      %c0_84 = arith.constant 0 : index
      %123 = vector.load %arg6[%c0_81, %c3_82, %c0_83, %c0_84] : memref<4x11x13x128xf32, #tpu.memory_space<vmem>>, vector<1x5x13x128xf32>
      %124 = vector.shape_cast %123 : vector<1x5x13x128xf32> to vector<5x13x128xf32>
      %125 = vector.extract_strided_slice %1 {offsets = [3, 0, 0], sizes = [1, 1, 128], strides = [1, 1, 1]} : vector<4x4x128xf32> to vector<1x1x128xf32>
      %126 = vector.shape_cast %125 : vector<1x1x128xf32> to vector<128xf32>
      %127 = vector.shape_cast %126 : vector<128xf32> to vector<1x1x128xf32>
      %128 = vector.broadcast %127 : vector<1x1x128xf32> to vector<5x13x128xf32>
      %129 = arith.mulf %124, %128 : vector<5x13x128xf32>
      %130 = arith.addf %122, %129 : vector<5x13x128xf32>
      %c1_85 = arith.constant 1 : index
      %c3_86 = arith.constant 3 : index
      %c0_87 = arith.constant 0 : index
      %c0_88 = arith.constant 0 : index
      %131 = vector.load %arg6[%c1_85, %c3_86, %c0_87, %c0_88] : memref<4x11x13x128xf32, #tpu.memory_space<vmem>>, vector<1x5x13x128xf32>
      %132 = vector.shape_cast %131 : vector<1x5x13x128xf32> to vector<5x13x128xf32>
      %133 = vector.extract_strided_slice %1 {offsets = [3, 1, 0], sizes = [1, 1, 128], strides = [1, 1, 1]} : vector<4x4x128xf32> to vector<1x1x128xf32>
      %134 = vector.shape_cast %133 : vector<1x1x128xf32> to vector<128xf32>
      %135 = vector.shape_cast %134 : vector<128xf32> to vector<1x1x128xf32>
      %136 = vector.broadcast %135 : vector<1x1x128xf32> to vector<5x13x128xf32>
      %137 = arith.mulf %132, %136 : vector<5x13x128xf32>
      %138 = arith.addf %130, %137 : vector<5x13x128xf32>
      %c2_89 = arith.constant 2 : index
      %c3_90 = arith.constant 3 : index
      %c0_91 = arith.constant 0 : index
      %c0_92 = arith.constant 0 : index
      %139 = vector.load %arg6[%c2_89, %c3_90, %c0_91, %c0_92] : memref<4x11x13x128xf32, #tpu.memory_space<vmem>>, vector<1x5x13x128xf32>
      %140 = vector.shape_cast %139 : vector<1x5x13x128xf32> to vector<5x13x128xf32>
      %141 = vector.extract_strided_slice %1 {offsets = [3, 2, 0], sizes = [1, 1, 128], strides = [1, 1, 1]} : vector<4x4x128xf32> to vector<1x1x128xf32>
      %142 = vector.shape_cast %141 : vector<1x1x128xf32> to vector<128xf32>
      %143 = vector.shape_cast %142 : vector<128xf32> to vector<1x1x128xf32>
      %144 = vector.broadcast %143 : vector<1x1x128xf32> to vector<5x13x128xf32>
      %145 = arith.mulf %140, %144 : vector<5x13x128xf32>
      %146 = arith.addf %138, %145 : vector<5x13x128xf32>
      %c3_93 = arith.constant 3 : index
      %c3_94 = arith.constant 3 : index
      %c0_95 = arith.constant 0 : index
      %c0_96 = arith.constant 0 : index
      %147 = vector.load %arg6[%c3_93, %c3_94, %c0_95, %c0_96] : memref<4x11x13x128xf32, #tpu.memory_space<vmem>>, vector<1x5x13x128xf32>
      %148 = vector.shape_cast %147 : vector<1x5x13x128xf32> to vector<5x13x128xf32>
      %149 = vector.extract_strided_slice %1 {offsets = [3, 3, 0], sizes = [1, 1, 128], strides = [1, 1, 1]} : vector<4x4x128xf32> to vector<1x1x128xf32>
      %150 = vector.shape_cast %149 : vector<1x1x128xf32> to vector<128xf32>
      %151 = vector.shape_cast %150 : vector<128xf32> to vector<1x1x128xf32>
      %152 = vector.broadcast %151 : vector<1x1x128xf32> to vector<5x13x128xf32>
      %153 = arith.mulf %148, %152 : vector<5x13x128xf32>
      %154 = arith.addf %146, %153 : vector<5x13x128xf32>
      %c0_97 = arith.constant 0 : index
      %c0_98 = arith.constant 0 : index
      %c0_99 = arith.constant 0 : index
      %c0_100 = arith.constant 0 : index
      %155 = vector.load %arg5[%c0_97, %c0_98, %c0_99, %c0_100] : memref<1x8x13x128xf32, #tpu.memory_space<vmem>>, vector<1x5x13x128xf32>
      %156 = vector.shape_cast %155 : vector<1x5x13x128xf32> to vector<5x13x128xf32>
      %157 = vector.shape_cast %154 : vector<5x13x128xf32> to vector<1x5x13x128xf32>
      tpu.vector_store %arg5[%c0_97, %c0_98, %c0_99, %c0_100], %157 {strides = array<i32>} : memref<1x8x13x128xf32, #tpu.memory_space<vmem>>, vector<1x5x13x128xf32>,
    } else {
    }
    return
  }
  func.func @transform_0(%arg0: i32, %arg1: i32, %arg2: i32) -> (i32, i32, i32, i32) {
    %c0_i32 = arith.constant 0 : i32
    %c0_i32_0 = arith.constant 0 : i32
    %c0_i32_1 = arith.constant 0 : i32
    return %arg0, %c0_i32, %c0_i32_0, %arg1 : i32, i32, i32, i32
  }
  func.func @transform_1(%arg0: i32, %arg1: i32, %arg2: i32) -> (i32, i32, i32, i32) {
    %c0_i32 = arith.constant 0 : i32
    %c0_i32_0 = arith.constant 0 : i32
    %c0_i32_1 = arith.constant 0 : i32
    return %arg0, %c0_i32, %c0_i32_0, %arg1 : i32, i32, i32, i32
  }
  func.func @transform_2(%arg0: i32, %arg1: i32, %arg2: i32) -> (i32, i32, i32, i32) {
    %c0_i32 = arith.constant 0 : i32
    %c0_i32_0 = arith.constant 0 : i32
    return %arg0, %arg2, %c0_i32, %arg1 : i32, i32, i32, i32
  }
}

</mosaic_0001>

<llo_original>
// kernel: tpu_custom_call.1
$region0: #{tpu_custom_call.1}
  #allocation0 [shape = 'u32[]', space=smem, size = 0x4, offset = 0x4, fixed_abs, tag = 'smem constant byte address 0x4 - core index']
  #allocation1 [shape = 'u32[72,128]{1,0:T(1,128)}', space=vmem, size = 0x9000, scoped, tag = 'internal scratch']
  #allocation2 [shape = 'f32[4,11,13,128]{3,2,1,0:T(8,128)}', space=vmem, size = 0x58000, scoped, tag = 'scratch operand']
  %s0 = inlined_call_operand.hbm [shape: f32[2,4,4,128], index: 0, kind: input, shape index: {}]
  %s1 = inlined_call_operand.hbm [shape: f32[2,16,16,128], index: 1, kind: input, shape index: {}]
  %s2 = inlined_call_operand.vmem [shape: f32[2,13,13,128], index: 2, kind: output, shape index: {}]
  %s3 = sld [smem:[#allocation0]]
  $region105: #{tpu_custom_call.1} parent=0
    _
  %s5 = ssub.s32 1, %s3
  %s6 = scalar_select 0, %s5, %s3
  $region1: #{tpu_custom_call.1} parent=0
    #allocation3 [shape = 'u8[16384]{0}', space=vmem, size = 0x4000, scoped, tag = 'input window, operand 0']
    #allocation4 [shape = 's32[2]{0}', space=sflag, size = 0x8, scoped, tag = 'scoped memory for tpu_custom_call.1']
    #allocation5 [shape = 'u8[262144]{0}', space=vmem, size = 0x40000, scoped, tag = 'input window, operand 1']
    #allocation6 [shape = 's32[2]{0}', space=sflag, size = 0x8, scoped, tag = 'scoped memory for tpu_custom_call.1']
    #allocation7 [shape = 'u8[131072]{0}', space=vmem, size = 0x20000, scoped, tag = 'output window, operand 0']
    %7 = vsyncpa [#allocation4], 0
    %s8 = scalar_lea.sflag [#allocation4], 1
    %9 = vsyncpa %s8, 0
    %10 = vsyncpa [#allocation6], 0
    %s11 = scalar_lea.sflag [#allocation6], 1
    %12 = vsyncpa %s11, 0
    loop: start=0, step=1, limit=6
    $region2: #{tpu_custom_call.1} parent=1 // loop_pre_header
      _
    $region3: #{tpu_custom_call.1} parent=1 // loop_header
      %s14 = sphi 0, %s18
      %p15 = scmp.ge.s32.totalorder %s14, 6
      %s21 = sphi 0, %s40
      %s22 = sphi 0, %s36
      %s23 = sphi 0, %s32
      %s24 = sphi 0, %s21
      %s25 = sphi 0, %s22
      %s26 = sphi 0, %s23
      %s27 = sphi 0, %s24
      %s28 = sphi 0, %s25
      %s29 = sphi 0, %s26
      %s45 = sphi 0, %s47
      %s48 = sphi 0, %s45
      %s49 = sphi 0, %s48
      %s65 = sphi 0, %s49
      %s73 = sphi 0, %s75
      %s76 = sphi 0, %s73
      %s77 = sphi 0, %s76
      %s93 = sphi 0, %s77
      %s103 = sphi 0, %s105
      %s106 = sphi 0, %s103
      %s107 = sphi 0, %s106
      %s123 = sphi 0, %s107
    $region4: #{tpu_custom_call.1} parent=1 // loop_header_branch
      %17 = sbr.rel (%p15) target = $region8
    $region5: #{tpu_custom_call.1} parent=1 // loop_body
      %s19 = ssub.s32 %s14, 1
      %s20 = ssub.s32 %s14, 2
      %s30 = sadd.s32 1, %s23
      %p31 = scmp.ge.s32.totalorder %s30, 2
      %s32 = scalar_select %p31, 0, %s30
      %s33 = sadd.s32 1, %s22
      %s34 = scalar_select %p31, %s33, %s22
      %p35 = scmp.ge.s32.totalorder %s34, 1
      %s36 = scalar_select %p35, 0, %s34
      %s37 = sadd.s32 1, %s21
      %s38 = scalar_select %p35, %s37, %s21
      %p39 = scmp.ge.s32.totalorder %s38, 2
      %s40 = scalar_select %p39, 0, %s38
      %s41 = ssub.s32 %s21, %s40
      %s42 = ssub.s32 %s22, %s36
      %s43 = sor.u32 %s41, %s42
      %p44 = scmp.eq.s32.totalorder %s43, 0
      %s46 = sadd.s32 %s45, 1
      %s47 = scalar_select %p44, %s45, %s46
      %p50 = pneg %p44
      %p51 = scmp.eq.s32.totalorder %s14, 3
      %p52 = por %p50, %p51
      %p53 = scmp.ne.s32.totalorder %s45, %s48
      %p54 = scmp.eq.s32.totalorder %s14, 0
      %p55 = por %p53, %p54
      %p56 = scmp.ne.s32.totalorder %s45, %s48
      %p57 = scmp.eq.s32.totalorder %s19, 3
      %p58 = por %p56, %p57
      %p59 = scmp.ne.s32.totalorder %s48, %s49
      %p60 = scmp.eq.s32.totalorder %s19, 0
      %p61 = por %p59, %p60
      %p62 = scmp.ne.s32.totalorder %s48, %s49
      %p63 = scmp.eq.s32.totalorder %s20, 3
      %p64 = por %p62, %p63
      %p66 = scmp.ne.s32.totalorder %s49, %s65
      %p67 = scmp.eq.s32.totalorder %s20, 0
      %p68 = por %p66, %p67
      %s69 = ssub.s32 %s21, %s40
      %s70 = ssub.s32 %s22, %s36
      %s71 = sor.u32 %s69, %s70
      %p72 = scmp.eq.s32.totalorder %s71, 0
      %s74 = sadd.s32 %s73, 1
      %s75 = scalar_select %p72, %s73, %s74
      %p78 = pneg %p72
      %p79 = scmp.eq.s32.totalorder %s14, 3
      %p80 = por %p78, %p79
      %p81 = scmp.ne.s32.totalorder %s73, %s76
      %p82 = scmp.eq.s32.totalorder %s14, 0
      %p83 = por %p81, %p82
      %p84 = scmp.ne.s32.totalorder %s73, %s76
      %p85 = scmp.eq.s32.totalorder %s19, 3
      %p86 = por %p84, %p85
      %p87 = scmp.ne.s32.totalorder %s76, %s77
      %p88 = scmp.eq.s32.totalorder %s19, 0
      %p89 = por %p87, %p88
      %p90 = scmp.ne.s32.totalorder %s76, %s77
      %p91 = scmp.eq.s32.totalorder %s20, 3
      %p92 = por %p90, %p91
      %p94 = scmp.ne.s32.totalorder %s77, %s93
      %p95 = scmp.eq.s32.totalorder %s20, 0
      %p96 = por %p94, %p95
      %s97 = ssub.s32 %s21, %s40
      %s98 = ssub.s32 %s23, %s32
      %s99 = sor.u32 %s97, %s98
      %s100 = ssub.s32 %s22, %s36
      %s101 = sor.u32 %s99, %s100
      %p102 = scmp.eq.s32.totalorder %s101, 0
      %s104 = sadd.s32 %s103, 1
      %s105 = scalar_select %p102, %s103, %s104
      %p108 = pneg %p102
      %p109 = scmp.eq.s32.totalorder %s14, 3
      %p110 = por %p108, %p109
      %p111 = scmp.ne.s32.totalorder %s103, %s106
      %p112 = scmp.eq.s32.totalorder %s14, 0
      %p113 = por %p111, %p112
      %p114 = scmp.ne.s32.totalorder %s103, %s106
      %p115 = scmp.eq.s32.totalorder %s19, 3
      %p116 = por %p114, %p115
      %p117 = scmp.ne.s32.totalorder %s106, %s107
      %p118 = scmp.eq.s32.totalorder %s19, 0
      %p119 = por %p117, %p118
      %p120 = scmp.ne.s32.totalorder %s106, %s107
      %p121 = scmp.eq.s32.totalorder %s20, 3
      %p122 = por %p120, %p121
      %p124 = scmp.ne.s32.totalorder %s107, %s123
      %p125 = scmp.eq.s32.totalorder %s20, 0
      %p126 = por %p124, %p125
      %p127 = scmp.le.s32.totalorder 1, %s14
      %p128 = scmp.lt.s32.totalorder %s14, 5
      %p129 = pnand %p127, %p128
      %p130 = pneg %p129
      // Predicated region
      $region9: #{tpu_custom_call.1} parent=5 // pred_check
        _
      $region10: #{tpu_custom_call.1} parent=5 // pred_check_branch
        %132 = sbr.rel (%p129) target = $region12
      $region11: #{tpu_custom_call.1} parent=5 // pred_region
        %s133 = ssub.s32 %s14, 1
      $region12: #{tpu_custom_call.1} parent=5 // pred_fallthru
        _
      %p134 = scmp.lt.s32.totalorder %s14, 4
      // Predicated region
      $region13: #{tpu_custom_call.1} parent=5 // pred_check
        %p135 = pneg %p134
      $region14: #{tpu_custom_call.1} parent=5 // pred_check_branch
        %137 = sbr.rel (%p135) target = $region16
      $region15: #{tpu_custom_call.1} parent=5 // pred_region
        // Predicated region
        $region17: #{tpu_custom_call.1} parent=15 // pred_check
          %p138 = pneg %p55
        $region18: #{tpu_custom_call.1} parent=15 // pred_check_branch
          %140 = sbr.rel (%p138) target = $region20
        $region19: #{tpu_custom_call.1} parent=15 // pred_region
          %s141 = sand.u32 %s45, 1
          %s142 = scalar_lea.sflag [#allocation4], %s141
          %s143 = sand.u32 %s45, 1
          %s144 = smul.addr %s143, 16
          %s145 = scalar_lea.vmem [#allocation3], %s144
          %147 = vsyncadd %s142, 0
          %s148 = smul.addr %s21, 4
          %s149 = sadd.s32 %s22, %s148
          %s150 = smul.addr %s149, 4
          %s151 = scalar_lea.hbm %s0, %s150
          %s152 = sshll.u32 %s151, 4
          %s153 = int_to_ptr.hbm [resolvable:$true] %s152
          %s154 = sshll.u32 %s145, 4
          %s155 = int_to_ptr.vmem [resolvable:$true] %s154
          %160 = dma.hbm_to_vmem [thread:$0]  %s153, 256, %s155, %s142, 64, 64, 4
        $region20: #{tpu_custom_call.1} parent=15 // pred_fallthru
          _
        // Predicated region
        $region21: #{tpu_custom_call.1} parent=15 // pred_check
          %p161 = pneg %p83
        $region22: #{tpu_custom_call.1} parent=15 // pred_check_branch
          %163 = sbr.rel (%p161) target = $region24
        $region23: #{tpu_custom_call.1} parent=15 // pred_region
          %s164 = sand.u32 %s73, 1
          %s165 = scalar_lea.sflag [#allocation6], %s164
          %s166 = sand.u32 %s73, 1
          %s167 = smul.addr %s166, 256
          %s168 = scalar_lea.vmem [#allocation5], %s167
          %170 = vsyncadd %s165, 0
          %s171 = smul.addr %s21, 32
          %s172 = sadd.s32 %s22, %s171
          %s173 = smul.addr %s172, 8
          %s174 = scalar_lea.hbm %s1, %s173
          %s175 = sshll.u32 %s174, 4
          %s176 = int_to_ptr.hbm [resolvable:$true] %s175
          %s177 = sshll.u32 %s168, 4
          %s178 = int_to_ptr.vmem [resolvable:$true] %s177
          %183 = dma.hbm_to_vmem [thread:$0]  %s176, 4096, %s178, %s165, 128, 128, 8
        $region24: #{tpu_custom_call.1} parent=15 // pred_fallthru
          _
      $region16: #{tpu_custom_call.1} parent=5 // pred_fallthru
        _
      %p184 = scmp.le.s32.totalorder 1, %s14
      %p185 = scmp.lt.s32.totalorder %s14, 5
      %p186 = pnand %p184, %p185
      %p187 = pneg %p186
      // Predicated region
      $region25: #{tpu_custom_call.1} parent=5 // pred_check
        _
      $region26: #{tpu_custom_call.1} parent=5 // pred_check_branch
        %189 = sbr.rel (%p186) target = $region28
      $region27: #{tpu_custom_call.1} parent=5 // pred_region
        %s190 = ssub.s32 %s14, 1
        %s191 = sand.u32 %s48, 1
        %s192 = scalar_lea.sflag [#allocation4], %s191
        %s193 = sand.u32 %s48, 1
        %s194 = smul.addr %s193, 16
        %s195 = scalar_lea.vmem [#allocation3], %s194
        // Predicated region
        $region29: #{tpu_custom_call.1} parent=27 // pred_check
          %p196 = pneg %p61
        $region30: #{tpu_custom_call.1} parent=27 // pred_check_branch
          %198 = sbr.rel (%p196) target = $region32
        $region31: #{tpu_custom_call.1} parent=27 // pred_region
          %200 = dma.done %s192, 256
        $region32: #{tpu_custom_call.1} parent=27 // pred_fallthru
          _
        %s201 = sand.u32 %s76, 1
        %s202 = scalar_lea.sflag [#allocation6], %s201
        %s203 = sand.u32 %s76, 1
        %s204 = smul.addr %s203, 256
        %s205 = scalar_lea.vmem [#allocation5], %s204
        // Predicated region
        $region33: #{tpu_custom_call.1} parent=27 // pred_check
          %p206 = pneg %p89
        $region34: #{tpu_custom_call.1} parent=27 // pred_check_branch
          %208 = sbr.rel (%p206) target = $region36
        $region35: #{tpu_custom_call.1} parent=27 // pred_region
          %210 = dma.done %s202, 4096
        $region36: #{tpu_custom_call.1} parent=27 // pred_fallthru
          _
        %s211 = sand.u32 %s48, 1
        %s212 = scalar_lea.sflag [#allocation4], %s211
        %s213 = sand.u32 %s48, 1
        %s214 = smul.addr %s213, 16
        %s215 = scalar_lea.vmem [#allocation3], %s214
        %p216 = pneg %p61
        %p217 = pneg %p58
        %s218 = sand.u32 %s76, 1
        %s219 = scalar_lea.sflag [#allocation6], %s218
        %s220 = sand.u32 %s76, 1
        %s221 = smul.addr %s220, 256
        %s222 = scalar_lea.vmem [#allocation5], %s221
        %p223 = pneg %p89
        %p224 = pneg %p86
        %p225 = pneg %p119
        %p226 = pneg %p116
        %s227 = sand.u32 %s106, 1
        %s228 = sand.u32 %s106, 1
        %s229 = smul.addr %s228, 128
        %s230 = scalar_lea.vmem [#allocation7], %s229
        %s231 = smul.u32 8, %s26
        %s232 = ssub.s32 13, %s231
        %p233 = scmp.lt.s32.totalorder %s232, 8
        %s234 = scalar_select %p233, %s232, 8
        %s235 = smul.u32 8, %s234
        %s236 = smul.u32 %s235, 2
        %v237 = vld [vmem:[%s195] sm:$0xf]
        %v238 = vld [vmem:[%s195 + $0x4] sm:$0xf]
        %v239 = vld [vmem:[%s195 + $0x8] sm:$0xf]
        %v240 = vld [vmem:[%s195 + $0xc] sm:$0xf]
        %p241 = scmp.lt.s32.totalorder %s26, 1
        // Predicated region
        $region37: #{tpu_custom_call.1} parent=27 // pred_check
          %p242 = pneg %p241
        $region38: #{tpu_custom_call.1} parent=27 // pred_check_branch
          %244 = sbr.rel (%p242) target = $region40
        $region39: #{tpu_custom_call.1} parent=27 // pred_region
          %s245 = smul.u32 %s26, 8
          %s246 = smul.u32 %s245, 16
          %s247 = scalar_lea.vmem %s205, %s246 [#allocation5]
          %v248 = vld [vmem:[%s247] sm:$0xff]
          %v249 = vld [vmem:[%s247 + $0x8] sm:$0x1f]
          %v250 = vld [vmem:[%s247 + $0x10] sm:$0xff]
          %v251 = vld [vmem:[%s247 + $0x18] sm:$0x1f]
          %v252 = vld [vmem:[%s247 + $0x20] sm:$0xff]
          %v253 = vld [vmem:[%s247 + $0x28] sm:$0x1f]
          %v254 = vld [vmem:[%s247 + $0x30] sm:$0xff]
          %v255 = vld [vmem:[%s247 + $0x38] sm:$0x1f]
          %v256 = vld [vmem:[%s247 + $0x40] sm:$0xff]
          %v257 = vld [vmem:[%s247 + $0x48] sm:$0x1f]
          %v258 = vld [vmem:[%s247 + $0x50] sm:$0xff]
          %v259 = vld [vmem:[%s247 + $0x58] sm:$0x1f]
          %v260 = vld [vmem:[%s247 + $0x60] sm:$0xff]
          %v261 = vld [vmem:[%s247 + $0x68] sm:$0x1f]
          %v262 = vld [vmem:[%s247 + $0x70] sm:$0xff]
          %v263 = vld [vmem:[%s247 + $0x78] sm:$0x1f]
          %v264 = vld [vmem:[%s247 + $0x80] sm:$0xff]
          %v265 = vld [vmem:[%s247 + $0x88] sm:$0x1f]
          %v266 = vld [vmem:[%s247 + $0x90] sm:$0xff]
          %v267 = vld [vmem:[%s247 + $0x98] sm:$0x1f]
          %v268 = vld [vmem:[%s247 + $0xa0] sm:$0xff]
          %v269 = vld [vmem:[%s247 + $0xa8] sm:$0x1f]
          %270 = vst [vmem:[#allocation2] sm:$0xff] %v248
          %271 = vst [vmem:[#allocation2 + $0x8] sm:$0x1f] %v249
          %272 = vst [vmem:[#allocation2 + $0x10] sm:$0xff] %v250
          %273 = vst [vmem:[#allocation2 + $0x18] sm:$0x1f] %v251
          %274 = vst [vmem:[#allocation2 + $0x20] sm:$0xff] %v252
          %275 = vst [vmem:[#allocation2 + $0x28] sm:$0x1f] %v253
          %276 = vst [vmem:[#allocation2 + $0x30] sm:$0xff] %v254
          %277 = vst [vmem:[#allocation2 + $0x38] sm:$0x1f] %v255
          %278 = vst [vmem:[#allocation2 + $0x40] sm:$0xff] %v256
          %279 = vst [vmem:[#allocation2 + $0x48] sm:$0x1f] %v257
          %280 = vst [vmem:[#allocation2 + $0x50] sm:$0xff] %v258
          %281 = vst [vmem:[#allocation2 + $0x58] sm:$0x1f] %v259
          %282 = vst [vmem:[#allocation2 + $0x60] sm:$0xff] %v260
          %283 = vst [vmem:[#allocation2 + $0x68] sm:$0x1f] %v261
          %284 = vst [vmem:[#allocation2 + $0x70] sm:$0xff] %v262
          %285 = vst [vmem:[#allocation2 + $0x78] sm:$0x1f] %v263
          %286 = vst [vmem:[#allocation2 + $0x80] sm:$0xff] %v264
          %287 = vst [vmem:[#allocation2 + $0x88] sm:$0x1f] %v265
          %288 = vst [vmem:[#allocation2 + $0x90] sm:$0xff] %v266
          %289 = vst [vmem:[#allocation2 + $0x98] sm:$0x1f] %v267
          %290 = vst [vmem:[#allocation2 + $0xa0] sm:$0xff] %v268
          %291 = vst [vmem:[#allocation2 + $0xa8] sm:$0x1f] %v269
          %v292 = vld [vmem:[%s247 + $0x1] sm:$0xff]
          %v293 = vld [vmem:[%s247 + $0x9] sm:$0x1f]
          %v294 = vld [vmem:[%s247 + $0x11] sm:$0xff]
          %v295 = vld [vmem:[%s247 + $0x19] sm:$0x1f]
          %v296 = vld [vmem:[%s247 + $0x21] sm:$0xff]
          %v297 = vld [vmem:[%s247 + $0x29] sm:$0x1f]
          %v298 = vld [vmem:[%s247 + $0x31] sm:$0xff]
          %v299 = vld [vmem:[%s247 + $0x39] sm:$0x1f]
          %v300 = vld [vmem:[%s247 + $0x41] sm:$0xff]
          %v301 = vld [vmem:[%s247 + $0x49] sm:$0x1f]
          %v302 = vld [vmem:[%s247 + $0x51] sm:$0xff]
          %v303 = vld [vmem:[%s247 + $0x59] sm:$0x1f]
          %v304 = vld [vmem:[%s247 + $0x61] sm:$0xff]
          %v305 = vld [vmem:[%s247 + $0x69] sm:$0x1f]
          %v306 = vld [vmem:[%s247 + $0x71] sm:$0xff]
          %v307 = vld [vmem:[%s247 + $0x79] sm:$0x1f]
          %v308 = vld [vmem:[%s247 + $0x81] sm:$0xff]
          %v309 = vld [vmem:[%s247 + $0x89] sm:$0x1f]
          %v310 = vld [vmem:[%s247 + $0x91] sm:$0xff]
          %v311 = vld [vmem:[%s247 + $0x99] sm:$0x1f]
          %v312 = vld [vmem:[%s247 + $0xa1] sm:$0xff]
          %v313 = vld [vmem:[%s247 + $0xa9] sm:$0x1f]
          %s314 = scalar_lea.vmem [#allocation2], 176
          %315 = vst [vmem:[%s314] sm:$0xff] %v292
          %316 = vst [vmem:[%s314 + $0x8] sm:$0x1f] %v293
          %317 = vst [vmem:[%s314 + $0x10] sm:$0xff] %v294
          %318 = vst [vmem:[%s314 + $0x18] sm:$0x1f] %v295
          %319 = vst [vmem:[%s314 + $0x20] sm:$0xff] %v296
          %320 = vst [vmem:[%s314 + $0x28] sm:$0x1f] %v297
          %321 = vst [vmem:[%s314 + $0x30] sm:$0xff] %v298
          %322 = vst [vmem:[%s314 + $0x38] sm:$0x1f] %v299
          %323 = vst [vmem:[%s314 + $0x40] sm:$0xff] %v300
          %324 = vst [vmem:[%s314 + $0x48] sm:$0x1f] %v301
          %325 = vst [vmem:[%s314 + $0x50] sm:$0xff] %v302
          %326 = vst [vmem:[%s314 + $0x58] sm:$0x1f] %v303
          %327 = vst [vmem:[%s314 + $0x60] sm:$0xff] %v304
          %328 = vst [vmem:[%s314 + $0x68] sm:$0x1f] %v305
          %329 = vst [vmem:[%s314 + $0x70] sm:$0xff] %v306
          %330 = vst [vmem:[%s314 + $0x78] sm:$0x1f] %v307
          %331 = vst [vmem:[%s314 + $0x80] sm:$0xff] %v308
          %332 = vst [vmem:[%s314 + $0x88] sm:$0x1f] %v309
          %333 = vst [vmem:[%s314 + $0x90] sm:$0xff] %v310
          %334 = vst [vmem:[%s314 + $0x98] sm:$0x1f] %v311
          %335 = vst [vmem:[%s314 + $0xa0] sm:$0xff] %v312
          %336 = vst [vmem:[%s314 + $0xa8] sm:$0x1f] %v313
          %v337 = vld [vmem:[%s247 + $0x2] sm:$0xff]
          %v338 = vld [vmem:[%s247 + $0xa] sm:$0x1f]
          %v339 = vld [vmem:[%s247 + $0x12] sm:$0xff]
          %v340 = vld [vmem:[%s247 + $0x1a] sm:$0x1f]
          %v341 = vld [vmem:[%s247 + $0x22] sm:$0xff]
          %v342 = vld [vmem:[%s247 + $0x2a] sm:$0x1f]
          %v343 = vld [vmem:[%s247 + $0x32] sm:$0xff]
          %v344 = vld [vmem:[%s247 + $0x3a] sm:$0x1f]
          %v345 = vld [vmem:[%s247 + $0x42] sm:$0xff]
          %v346 = vld [vmem:[%s247 + $0x4a] sm:$0x1f]
          %v347 = vld [vmem:[%s247 + $0x52] sm:$0xff]
          %v348 = vld [vmem:[%s247 + $0x5a] sm:$0x1f]
          %v349 = vld [vmem:[%s247 + $0x62] sm:$0xff]
          %v350 = vld [vmem:[%s247 + $0x6a] sm:$0x1f]
          %v351 = vld [vmem:[%s247 + $0x72] sm:$0xff]
          %v352 = vld [vmem:[%s247 + $0x7a] sm:$0x1f]
          %v353 = vld [vmem:[%s247 + $0x82] sm:$0xff]
          %v354 = vld [vmem:[%s247 + $0x8a] sm:$0x1f]
          %v355 = vld [vmem:[%s247 + $0x92] sm:$0xff]
          %v356 = vld [vmem:[%s247 + $0x9a] sm:$0x1f]
          %v357 = vld [vmem:[%s247 + $0xa2] sm:$0xff]
          %v358 = vld [vmem:[%s247 + $0xaa] sm:$0x1f]
          %s359 = scalar_lea.vmem [#allocation2], 352
          %360 = vst [vmem:[%s359] sm:$0xff] %v337
          %361 = vst [vmem:[%s359 + $0x8] sm:$0x1f] %v338
          %362 = vst [vmem:[%s359 + $0x10] sm:$0xff] %v339
          %363 = vst [vmem:[%s359 + $0x18] sm:$0x1f] %v340
          %364 = vst [vmem:[%s359 + $0x20] sm:$0xff] %v341
          %365 = vst [vmem:[%s359 + $0x28] sm:$0x1f] %v342
          %366 = vst [vmem:[%s359 + $0x30] sm:$0xff] %v343
          %367 = vst [vmem:[%s359 + $0x38] sm:$0x1f] %v344
          %368 = vst [vmem:[%s359 + $0x40] sm:$0xff] %v345
          %369 = vst [vmem:[%s359 + $0x48] sm:$0x1f] %v346
          %370 = vst [vmem:[%s359 + $0x50] sm:$0xff] %v347
          %371 = vst [vmem:[%s359 + $0x58] sm:$0x1f] %v348
          %372 = vst [vmem:[%s359 + $0x60] sm:$0xff] %v349
          %373 = vst [vmem:[%s359 + $0x68] sm:$0x1f] %v350
          %374 = vst [vmem:[%s359 + $0x70] sm:$0xff] %v351
          %375 = vst [vmem:[%s359 + $0x78] sm:$0x1f] %v352
          %376 = vst [vmem:[%s359 + $0x80] sm:$0xff] %v353
          %377 = vst [vmem:[%s359 + $0x88] sm:$0x1f] %v354
          %378 = vst [vmem:[%s359 + $0x90] sm:$0xff] %v355
          %379 = vst [vmem:[%s359 + $0x98] sm:$0x1f] %v356
          %380 = vst [vmem:[%s359 + $0xa0] sm:$0xff] %v357
          %381 = vst [vmem:[%s359 + $0xa8] sm:$0x1f] %v358
          %v382 = vld [vmem:[%s247 + $0x3] sm:$0xff]
          %v383 = vld [vmem:[%s247 + $0xb] sm:$0x1f]
          %v384 = vld [vmem:[%s247 + $0x13] sm:$0xff]
          %v385 = vld [vmem:[%s247 + $0x1b] sm:$0x1f]
          %v386 = vld [vmem:[%s247 + $0x23] sm:$0xff]
          %v387 = vld [vmem:[%s247 + $0x2b] sm:$0x1f]
          %v388 = vld [vmem:[%s247 + $0x33] sm:$0xff]
          %v389 = vld [vmem:[%s247 + $0x3b] sm:$0x1f]
          %v390 = vld [vmem:[%s247 + $0x43] sm:$0xff]
          %v391 = vld [vmem:[%s247 + $0x4b] sm:$0x1f]
          %v392 = vld [vmem:[%s247 + $0x53] sm:$0xff]
          %v393 = vld [vmem:[%s247 + $0x5b] sm:$0x1f]
          %v394 = vld [vmem:[%s247 + $0x63] sm:$0xff]
          %v395 = vld [vmem:[%s247 + $0x6b] sm:$0x1f]
          %v396 = vld [vmem:[%s247 + $0x73] sm:$0xff]
          %v397 = vld [vmem:[%s247 + $0x7b] sm:$0x1f]
          %v398 = vld [vmem:[%s247 + $0x83] sm:$0xff]
          %v399 = vld [vmem:[%s247 + $0x8b] sm:$0x1f]
          %v400 = vld [vmem:[%s247 + $0x93] sm:$0xff]
          %v401 = vld [vmem:[%s247 + $0x9b] sm:$0x1f]
          %v402 = vld [vmem:[%s247 + $0xa3] sm:$0xff]
          %v403 = vld [vmem:[%s247 + $0xab] sm:$0x1f]
          %s404 = scalar_lea.vmem [#allocation2], 528
          %405 = vst [vmem:[%s404] sm:$0xff] %v382
          %406 = vst [vmem:[%s404 + $0x8] sm:$0x1f] %v383
          %407 = vst [vmem:[%s404 + $0x10] sm:$0xff] %v384
          %408 = vst [vmem:[%s404 + $0x18] sm:$0x1f] %v385
          %409 = vst [vmem:[%s404 + $0x20] sm:$0xff] %v386
          %410 = vst [vmem:[%s404 + $0x28] sm:$0x1f] %v387
          %411 = vst [vmem:[%s404 + $0x30] sm:$0xff] %v388
          %412 = vst [vmem:[%s404 + $0x38] sm:$0x1f] %v389
          %413 = vst [vmem:[%s404 + $0x40] sm:$0xff] %v390
          %414 = vst [vmem:[%s404 + $0x48] sm:$0x1f] %v391
          %415 = vst [vmem:[%s404 + $0x50] sm:$0xff] %v392
          %416 = vst [vmem:[%s404 + $0x58] sm:$0x1f] %v393
          %417 = vst [vmem:[%s404 + $0x60] sm:$0xff] %v394
          %418 = vst [vmem:[%s404 + $0x68] sm:$0x1f] %v395
          %419 = vst [vmem:[%s404 + $0x70] sm:$0xff] %v396
          %420 = vst [vmem:[%s404 + $0x78] sm:$0x1f] %v397
          %421 = vst [vmem:[%s404 + $0x80] sm:$0xff] %v398
          %422 = vst [vmem:[%s404 + $0x88] sm:$0x1f] %v399
          %423 = vst [vmem:[%s404 + $0x90] sm:$0xff] %v400
          %424 = vst [vmem:[%s404 + $0x98] sm:$0x1f] %v401
          %425 = vst [vmem:[%s404 + $0xa0] sm:$0xff] %v402
          %426 = vst [vmem:[%s404 + $0xa8] sm:$0x1f] %v403
          %v427 = vld [vmem:[#allocation2] sm:$0xff]
          %v428 = vld [vmem:[#allocation2 + $0x8] sm:$0x1f]
          %v429 = vld [vmem:[#allocation2 + $0x10] sm:$0xff]
          %v430 = vld [vmem:[#allocation2 + $0x18] sm:$0x1f]
          %v431 = vld [vmem:[#allocation2 + $0x20] sm:$0xff]
          %v432 = vld [vmem:[#allocation2 + $0x28] sm:$0x1f]
          %v433 = vld [vmem:[#allocation2 + $0x30] sm:$0xff]
          %v434 = vld [vmem:[#allocation2 + $0x38] sm:$0x1f]
          %v435 = vld [vmem:[#allocation2 + $0x40] sm:$0xff]
          %v436 = vld [vmem:[#allocation2 + $0x48] sm:$0x1f]
          %v437 = vld [vmem:[#allocation2 + $0x50] sm:$0xff]
          %v438 = vld [vmem:[#allocation2 + $0x58] sm:$0x1f]
          %v439 = vld [vmem:[#allocation2 + $0x60] sm:$0xff]
          %v440 = vld [vmem:[#allocation2 + $0x68] sm:$0x1f]
          %v441 = vld [vmem:[#allocation2 + $0x70] sm:$0xff]
          %v442 = vld [vmem:[#allocation2 + $0x78] sm:$0x1f]
          %v443 = vperm.slane %v237, 0
          %v444 = vmul.f32 %v427, %v443
          %v445 = vmul.f32 %v428, %v443
          %v446 = vmul.f32 %v429, %v443
          %v447 = vmul.f32 %v430, %v443
          %v448 = vmul.f32 %v431, %v443
          %v449 = vmul.f32 %v432, %v443
          %v450 = vmul.f32 %v433, %v443
          %v451 = vmul.f32 %v434, %v443
          %v452 = vmul.f32 %v435, %v443
          %v453 = vmul.f32 %v436, %v443
          %v454 = vmul.f32 %v437, %v443
          %v455 = vmul.f32 %v438, %v443
          %v456 = vmul.f32 %v439, %v443
          %v457 = vmul.f32 %v440, %v443
          %v458 = vmul.f32 %v441, %v443
          %v459 = vmul.f32 %v442, %v443
          %v460 = vld [vmem:[%s314] sm:$0xff]
          %v461 = vld [vmem:[%s314 + $0x8] sm:$0x1f]
          %v462 = vld [vmem:[%s314 + $0x10] sm:$0xff]
          %v463 = vld [vmem:[%s314 + $0x18] sm:$0x1f]
          %v464 = vld [vmem:[%s314 + $0x20] sm:$0xff]
          %v465 = vld [vmem:[%s314 + $0x28] sm:$0x1f]
          %v466 = vld [vmem:[%s314 + $0x30] sm:$0xff]
          %v467 = vld [vmem:[%s314 + $0x38] sm:$0x1f]
          %v468 = vld [vmem:[%s314 + $0x40] sm:$0xff]
          %v469 = vld [vmem:[%s314 + $0x48] sm:$0x1f]
          %v470 = vld [vmem:[%s314 + $0x50] sm:$0xff]
          %v471 = vld [vmem:[%s314 + $0x58] sm:$0x1f]
          %v472 = vld [vmem:[%s314 + $0x60] sm:$0xff]
          %v473 = vld [vmem:[%s314 + $0x68] sm:$0x1f]
          %v474 = vld [vmem:[%s314 + $0x70] sm:$0xff]
          %v475 = vld [vmem:[%s314 + $0x78] sm:$0x1f]
          %v476 = vperm.slane %v237, 1
          %v477 = vmul.f32 %v460, %v476
          %v478 = vmul.f32 %v461, %v476
          %v479 = vmul.f32 %v462, %v476
          %v480 = vmul.f32 %v463, %v476
          %v481 = vmul.f32 %v464, %v476
          %v482 = vmul.f32 %v465, %v476
          %v483 = vmul.f32 %v466, %v476
          %v484 = vmul.f32 %v467, %v476
          %v485 = vmul.f32 %v468, %v476
          %v486 = vmul.f32 %v469, %v476
          %v487 = vmul.f32 %v470, %v476
          %v488 = vmul.f32 %v471, %v476
          %v489 = vmul.f32 %v472, %v476
          %v490 = vmul.f32 %v473, %v476
          %v491 = vmul.f32 %v474, %v476
          %v492 = vmul.f32 %v475, %v476
          %v493 = vadd.f32 %v444, %v477
          %v494 = vadd.f32 %v445, %v478
          %v495 = vadd.f32 %v446, %v479
          %v496 = vadd.f32 %v447, %v480
          %v497 = vadd.f32 %v448, %v481
          %v498 = vadd.f32 %v449, %v482
          %v499 = vadd.f32 %v450, %v483
          %v500 = vadd.f32 %v451, %v484
          %v501 = vadd.f32 %v452, %v485
          %v502 = vadd.f32 %v453, %v486
          %v503 = vadd.f32 %v454, %v487
          %v504 = vadd.f32 %v455, %v488
          %v505 = vadd.f32 %v456, %v489
          %v506 = vadd.f32 %v457, %v490
          %v507 = vadd.f32 %v458, %v491
          %v508 = vadd.f32 %v459, %v492
          %v509 = vld [vmem:[%s359] sm:$0xff]
          %v510 = vld [vmem:[%s359 + $0x8] sm:$0x1f]
          %v511 = vld [vmem:[%s359 + $0x10] sm:$0xff]
          %v512 = vld [vmem:[%s359 + $0x18] sm:$0x1f]
          %v513 = vld [vmem:[%s359 + $0x20] sm:$0xff]
          %v514 = vld [vmem:[%s359 + $0x28] sm:$0x1f]
          %v515 = vld [vmem:[%s359 + $0x30] sm:$0xff]
          %v516 = vld [vmem:[%s359 + $0x38] sm:$0x1f]
          %v517 = vld [vmem:[%s359 + $0x40] sm:$0xff]
          %v518 = vld [vmem:[%s359 + $0x48] sm:$0x1f]
          %v519 = vld [vmem:[%s359 + $0x50] sm:$0xff]
          %v520 = vld [vmem:[%s359 + $0x58] sm:$0x1f]
          %v521 = vld [vmem:[%s359 + $0x60] sm:$0xff]
          %v522 = vld [vmem:[%s359 + $0x68] sm:$0x1f]
          %v523 = vld [vmem:[%s359 + $0x70] sm:$0xff]
          %v524 = vld [vmem:[%s359 + $0x78] sm:$0x1f]
          %v525 = vperm.slane %v237, 2
          %v526 = vmul.f32 %v509, %v525
          %v527 = vmul.f32 %v510, %v525
          %v528 = vmul.f32 %v511, %v525
          %v529 = vmul.f32 %v512, %v525
          %v530 = vmul.f32 %v513, %v525
          %v531 = vmul.f32 %v514, %v525
          %v532 = vmul.f32 %v515, %v525
          %v533 = vmul.f32 %v516, %v525
          %v534 = vmul.f32 %v517, %v525
          %v535 = vmul.f32 %v518, %v525
          %v536 = vmul.f32 %v519, %v525
          %v537 = vmul.f32 %v520, %v525
          %v538 = vmul.f32 %v521, %v525
          %v539 = vmul.f32 %v522, %v525
          %v540 = vmul.f32 %v523, %v525
          %v541 = vmul.f32 %v524, %v525
          %v542 = vadd.f32 %v493, %v526
          %v543 = vadd.f32 %v494, %v527
          %v544 = vadd.f32 %v495, %v528
          %v545 = vadd.f32 %v496, %v529
          %v546 = vadd.f32 %v497, %v530
          %v547 = vadd.f32 %v498, %v531
          %v548 = vadd.f32 %v499, %v532
          %v549 = vadd.f32 %v500, %v533
          %v550 = vadd.f32 %v501, %v534
          %v551 = vadd.f32 %v502, %v535
          %v552 = vadd.f32 %v503, %v536
          %v553 = vadd.f32 %v504, %v537
          %v554 = vadd.f32 %v505, %v538
          %v555 = vadd.f32 %v506, %v539
          %v556 = vadd.f32 %v507, %v540
          %v557 = vadd.f32 %v508, %v541
          %v558 = vld [vmem:[%s404] sm:$0xff]
          %v559 = vld [vmem:[%s404 + $0x8] sm:$0x1f]
          %v560 = vld [vmem:[%s404 + $0x10] sm:$0xff]
          %v561 = vld [vmem:[%s404 + $0x18] sm:$0x1f]
          %v562 = vld [vmem:[%s404 + $0x20] sm:$0xff]
          %v563 = vld [vmem:[%s404 + $0x28] sm:$0x1f]
          %v564 = vld [vmem:[%s404 + $0x30] sm:$0xff]
          %v565 = vld [vmem:[%s404 + $0x38] sm:$0x1f]
          %v566 = vld [vmem:[%s404 + $0x40] sm:$0xff]
          %v567 = vld [vmem:[%s404 + $0x48] sm:$0x1f]
          %v568 = vld [vmem:[%s404 + $0x50] sm:$0xff]
          %v569 = vld [vmem:[%s404 + $0x58] sm:$0x1f]
          %v570 = vld [vmem:[%s404 + $0x60] sm:$0xff]
          %v571 = vld [vmem:[%s404 + $0x68] sm:$0x1f]
          %v572 = vld [vmem:[%s404 + $0x70] sm:$0xff]
          %v573 = vld [vmem:[%s404 + $0x78] sm:$0x1f]
          %v574 = vperm.slane %v237, 3
          %v575 = vmul.f32 %v558, %v574
          %v576 = vmul.f32 %v559, %v574
          %v577 = vmul.f32 %v560, %v574
          %v578 = vmul.f32 %v561, %v574
          %v579 = vmul.f32 %v562, %v574
          %v580 = vmul.f32 %v563, %v574
          %v581 = vmul.f32 %v564, %v574
          %v582 = vmul.f32 %v565, %v574
          %v583 = vmul.f32 %v566, %v574
          %v584 = vmul.f32 %v567, %v574
          %v585 = vmul.f32 %v568, %v574
          %v586 = vmul.f32 %v569, %v574
          %v587 = vmul.f32 %v570, %v574
          %v588 = vmul.f32 %v571, %v574
          %v589 = vmul.f32 %v572, %v574
          %v590 = vmul.f32 %v573, %v574
          %v591 = vadd.f32 %v542, %v575
          %v592 = vadd.f32 %v543, %v576
          %v593 = vadd.f32 %v544, %v577
          %v594 = vadd.f32 %v545, %v578
          %v595 = vadd.f32 %v546, %v579
          %v596 = vadd.f32 %v547, %v580
          %v597 = vadd.f32 %v548, %v581
          %v598 = vadd.f32 %v549, %v582
          %v599 = vadd.f32 %v550, %v583
          %v600 = vadd.f32 %v551, %v584
          %v601 = vadd.f32 %v552, %v585
          %v602 = vadd.f32 %v553, %v586
          %v603 = vadd.f32 %v554, %v587
          %v604 = vadd.f32 %v555, %v588
          %v605 = vadd.f32 %v556, %v589
          %v606 = vadd.f32 %v557, %v590
          %s607 = scalar_lea.vmem [#allocation2], 16
          %v608 = vld [vmem:[%s607] sm:$0xff]
          %v609 = vld [vmem:[%s607 + $0x8] sm:$0x1f]
          %v610 = vld [vmem:[%s607 + $0x10] sm:$0xff]
          %v611 = vld [vmem:[%s607 + $0x18] sm:$0x1f]
          %v612 = vld [vmem:[%s607 + $0x20] sm:$0xff]
          %v613 = vld [vmem:[%s607 + $0x28] sm:$0x1f]
          %v614 = vld [vmem:[%s607 + $0x30] sm:$0xff]
          %v615 = vld [vmem:[%s607 + $0x38] sm:$0x1f]
          %v616 = vld [vmem:[%s607 + $0x40] sm:$0xff]
          %v617 = vld [vmem:[%s607 + $0x48] sm:$0x1f]
          %v618 = vld [vmem:[%s607 + $0x50] sm:$0xff]
          %v619 = vld [vmem:[%s607 + $0x58] sm:$0x1f]
          %v620 = vld [vmem:[%s607 + $0x60] sm:$0xff]
          %v621 = vld [vmem:[%s607 + $0x68] sm:$0x1f]
          %v622 = vld [vmem:[%s607 + $0x70] sm:$0xff]
          %v623 = vld [vmem:[%s607 + $0x78] sm:$0x1f]
          %v624 = vperm.slane %v238, 0
          %v625 = vmul.f32 %v608, %v624
          %v626 = vmul.f32 %v609, %v624
          %v627 = vmul.f32 %v610, %v624
          %v628 = vmul.f32 %v611, %v624
          %v629 = vmul.f32 %v612, %v624
          %v630 = vmul.f32 %v613, %v624
          %v631 = vmul.f32 %v614, %v624
          %v632 = vmul.f32 %v615, %v624
          %v633 = vmul.f32 %v616, %v624
          %v634 = vmul.f32 %v617, %v624
          %v635 = vmul.f32 %v618, %v624
          %v636 = vmul.f32 %v619, %v624
          %v637 = vmul.f32 %v620, %v624
          %v638 = vmul.f32 %v621, %v624
          %v639 = vmul.f32 %v622, %v624
          %v640 = vmul.f32 %v623, %v624
          %v641 = vadd.f32 %v591, %v625
          %v642 = vadd.f32 %v592, %v626
          %v643 = vadd.f32 %v593, %v627
          %v644 = vadd.f32 %v594, %v628
          %v645 = vadd.f32 %v595, %v629
          %v646 = vadd.f32 %v596, %v630
          %v647 = vadd.f32 %v597, %v631
          %v648 = vadd.f32 %v598, %v632
          %v649 = vadd.f32 %v599, %v633
          %v650 = vadd.f32 %v600, %v634
          %v651 = vadd.f32 %v601, %v635
          %v652 = vadd.f32 %v602, %v636
          %v653 = vadd.f32 %v603, %v637
          %v654 = vadd.f32 %v604, %v638
          %v655 = vadd.f32 %v605, %v639
          %v656 = vadd.f32 %v606, %v640
          %s657 = scalar_lea.vmem [#allocation2], 192
          %v658 = vld [vmem:[%s657] sm:$0xff]
          %v659 = vld [vmem:[%s657 + $0x8] sm:$0x1f]
          %v660 = vld [vmem:[%s657 + $0x10] sm:$0xff]
          %v661 = vld [vmem:[%s657 + $0x18] sm:$0x1f]
          %v662 = vld [vmem:[%s657 + $0x20] sm:$0xff]
          %v663 = vld [vmem:[%s657 + $0x28] sm:$0x1f]
          %v664 = vld [vmem:[%s657 + $0x30] sm:$0xff]
          %v665 = vld [vmem:[%s657 + $0x38] sm:$0x1f]
          %v666 = vld [vmem:[%s657 + $0x40] sm:$0xff]
          %v667 = vld [vmem:[%s657 + $0x48] sm:$0x1f]
          %v668 = vld [vmem:[%s657 + $0x50] sm:$0xff]
          %v669 = vld [vmem:[%s657 + $0x58] sm:$0x1f]
          %v670 = vld [vmem:[%s657 + $0x60] sm:$0xff]
          %v671 = vld [vmem:[%s657 + $0x68] sm:$0x1f]
          %v672 = vld [vmem:[%s657 + $0x70] sm:$0xff]
          %v673 = vld [vmem:[%s657 + $0x78] sm:$0x1f]
          %v674 = vperm.slane %v238, 1
          %v675 = vmul.f32 %v658, %v674
          %v676 = vmul.f32 %v659, %v674
          %v677 = vmul.f32 %v660, %v674
          %v678 = vmul.f32 %v661, %v674
          %v679 = vmul.f32 %v662, %v674
          %v680 = vmul.f32 %v663, %v674
          %v681 = vmul.f32 %v664, %v674
          %v682 = vmul.f32 %v665, %v674
          %v683 = vmul.f32 %v666, %v674
          %v684 = vmul.f32 %v667, %v674
          %v685 = vmul.f32 %v668, %v674
          %v686 = vmul.f32 %v669, %v674
          %v687 = vmul.f32 %v670, %v674
          %v688 = vmul.f32 %v671, %v674
          %v689 = vmul.f32 %v672, %v674
          %v690 = vmul.f32 %v673, %v674
          %v691 = vadd.f32 %v641, %v675
          %v692 = vadd.f32 %v642, %v676
          %v693 = vadd.f32 %v643, %v677
          %v694 = vadd.f32 %v644, %v678
          %v695 = vadd.f32 %v645, %v679
          %v696 = vadd.f32 %v646, %v680
          %v697 = vadd.f32 %v647, %v681
          %v698 = vadd.f32 %v648, %v682
          %v699 = vadd.f32 %v649, %v683
          %v700 = vadd.f32 %v650, %v684
          %v701 = vadd.f32 %v651, %v685
          %v702 = vadd.f32 %v652, %v686
          %v703 = vadd.f32 %v653, %v687
          %v704 = vadd.f32 %v654, %v688
          %v705 = vadd.f32 %v655, %v689
          %v706 = vadd.f32 %v656, %v690
          %s707 = scalar_lea.vmem [#allocation2], 368
          %v708 = vld [vmem:[%s707] sm:$0xff]
          %v709 = vld [vmem:[%s707 + $0x8] sm:$0x1f]
          %v710 = vld [vmem:[%s707 + $0x10] sm:$0xff]
          %v711 = vld [vmem:[%s707 + $0x18] sm:$0x1f]
          %v712 = vld [vmem:[%s707 + $0x20] sm:$0xff]
          %v713 = vld [vmem:[%s707 + $0x28] sm:$0x1f]
          %v714 = vld [vmem:[%s707 + $0x30] sm:$0xff]
          %v715 = vld [vmem:[%s707 + $0x38] sm:$0x1f]
          %v716 = vld [vmem:[%s707 + $0x40] sm:$0xff]
          %v717 = vld [vmem:[%s707 + $0x48] sm:$0x1f]
          %v718 = vld [vmem:[%s707 + $0x50] sm:$0xff]
          %v719 = vld [vmem:[%s707 + $0x58] sm:$0x1f]
          %v720 = vld [vmem:[%s707 + $0x60] sm:$0xff]
          %v721 = vld [vmem:[%s707 + $0x68] sm:$0x1f]
          %v722 = vld [vmem:[%s707 + $0x70] sm:$0xff]
          %v723 = vld [vmem:[%s707 + $0x78] sm:$0x1f]
          %v724 = vperm.slane %v238, 2
          %v725 = vmul.f32 %v708, %v724
          %v726 = vmul.f32 %v709, %v724
          %v727 = vmul.f32 %v710, %v724
          %v728 = vmul.f32 %v711, %v724
          %v729 = vmul.f32 %v712, %v724
          %v730 = vmul.f32 %v713, %v724
          %v731 = vmul.f32 %v714, %v724
          %v732 = vmul.f32 %v715, %v724
          %v733 = vmul.f32 %v716, %v724
          %v734 = vmul.f32 %v717, %v724
          %v735 = vmul.f32 %v718, %v724
          %v736 = vmul.f32 %v719, %v724
          %v737 = vmul.f32 %v720, %v724
          %v738 = vmul.f32 %v721, %v724
          %v739 = vmul.f32 %v722, %v724
          %v740 = vmul.f32 %v723, %v724
          %v741 = vadd.f32 %v691, %v725
          %v742 = vadd.f32 %v692, %v726
          %v743 = vadd.f32 %v693, %v727
          %v744 = vadd.f32 %v694, %v728
          %v745 = vadd.f32 %v695, %v729
          %v746 = vadd.f32 %v696, %v730
          %v747 = vadd.f32 %v697, %v731
          %v748 = vadd.f32 %v698, %v732
          %v749 = vadd.f32 %v699, %v733
          %v750 = vadd.f32 %v700, %v734
          %v751 = vadd.f32 %v701, %v735
          %v752 = vadd.f32 %v702, %v736
          %v753 = vadd.f32 %v703, %v737
          %v754 = vadd.f32 %v704, %v738
          %v755 = vadd.f32 %v705, %v739
          %v756 = vadd.f32 %v706, %v740
          %s757 = scalar_lea.vmem [#allocation2], 544
          %v758 = vld [vmem:[%s757] sm:$0xff]
          %v759 = vld [vmem:[%s757 + $0x8] sm:$0x1f]
          %v760 = vld [vmem:[%s757 + $0x10] sm:$0xff]
          %v761 = vld [vmem:[%s757 + $0x18] sm:$0x1f]
          %v762 = vld [vmem:[%s757 + $0x20] sm:$0xff]
          %v763 = vld [vmem:[%s757 + $0x28] sm:$0x1f]
          %v764 = vld [vmem:[%s757 + $0x30] sm:$0xff]
          %v765 = vld [vmem:[%s757 + $0x38] sm:$0x1f]
          %v766 = vld [vmem:[%s757 + $0x40] sm:$0xff]
          %v767 = vld [vmem:[%s757 + $0x48] sm:$0x1f]
          %v768 = vld [vmem:[%s757 + $0x50] sm:$0xff]
          %v769 = vld [vmem:[%s757 + $0x58] sm:$0x1f]
          %v770 = vld [vmem:[%s757 + $0x60] sm:$0xff]
          %v771 = vld [vmem:[%s757 + $0x68] sm:$0x1f]
          %v772 = vld [vmem:[%s757 + $0x70] sm:$0xff]
          %v773 = vld [vmem:[%s757 + $0x78] sm:$0x1f]
          %v774 = vperm.slane %v238, 3
          %v775 = vmul.f32 %v758, %v774
          %v776 = vmul.f32 %v759, %v774
          %v777 = vmul.f32 %v760, %v774
          %v778 = vmul.f32 %v761, %v774
          %v779 = vmul.f32 %v762, %v774
          %v780 = vmul.f32 %v763, %v774
          %v781 = vmul.f32 %v764, %v774
          %v782 = vmul.f32 %v765, %v774
          %v783 = vmul.f32 %v766, %v774
          %v784 = vmul.f32 %v767, %v774
          %v785 = vmul.f32 %v768, %v774
          %v786 = vmul.f32 %v769, %v774
          %v787 = vmul.f32 %v770, %v774
          %v788 = vmul.f32 %v771, %v774
          %v789 = vmul.f32 %v772, %v774
          %v790 = vmul.f32 %v773, %v774
          %v791 = vadd.f32 %v741, %v775
          %v792 = vadd.f32 %v742, %v776
          %v793 = vadd.f32 %v743, %v777
          %v794 = vadd.f32 %v744, %v778
          %v795 = vadd.f32 %v745, %v779
          %v796 = vadd.f32 %v746, %v780
          %v797 = vadd.f32 %v747, %v781
          %v798 = vadd.f32 %v748, %v782
          %v799 = vadd.f32 %v749, %v783
          %v800 = vadd.f32 %v750, %v784
          %v801 = vadd.f32 %v751, %v785
          %v802 = vadd.f32 %v752, %v786
          %v803 = vadd.f32 %v753, %v787
          %v804 = vadd.f32 %v754, %v788
          %v805 = vadd.f32 %v755, %v789
          %v806 = vadd.f32 %v756, %v790
          %s807 = scalar_lea.vmem [#allocation2], 32
          %v808 = vld [vmem:[%s807] sm:$0xff]
          %v809 = vld [vmem:[%s807 + $0x8] sm:$0x1f]
          %v810 = vld [vmem:[%s807 + $0x10] sm:$0xff]
          %v811 = vld [vmem:[%s807 + $0x18] sm:$0x1f]
          %v812 = vld [vmem:[%s807 + $0x20] sm:$0xff]
          %v813 = vld [vmem:[%s807 + $0x28] sm:$0x1f]
          %v814 = vld [vmem:[%s807 + $0x30] sm:$0xff]
          %v815 = vld [vmem:[%s807 + $0x38] sm:$0x1f]
          %v816 = vld [vmem:[%s807 + $0x40] sm:$0xff]
          %v817 = vld [vmem:[%s807 + $0x48] sm:$0x1f]
          %v818 = vld [vmem:[%s807 + $0x50] sm:$0xff]
          %v819 = vld [vmem:[%s807 + $0x58] sm:$0x1f]
          %v820 = vld [vmem:[%s807 + $0x60] sm:$0xff]
          %v821 = vld [vmem:[%s807 + $0x68] sm:$0x1f]
          %v822 = vld [vmem:[%s807 + $0x70] sm:$0xff]
          %v823 = vld [vmem:[%s807 + $0x78] sm:$0x1f]
          %v824 = vperm.slane %v239, 0
          %v825 = vmul.f32 %v808, %v824
          %v826 = vmul.f32 %v809, %v824
          %v827 = vmul.f32 %v810, %v824
          %v828 = vmul.f32 %v811, %v824
          %v829 = vmul.f32 %v812, %v824
          %v830 = vmul.f32 %v813, %v824
          %v831 = vmul.f32 %v814, %v824
          %v832 = vmul.f32 %v815, %v824
          %v833 = vmul.f32 %v816, %v824
          %v834 = vmul.f32 %v817, %v824
          %v835 = vmul.f32 %v818, %v824
          %v836 = vmul.f32 %v819, %v824
          %v837 = vmul.f32 %v820, %v824
          %v838 = vmul.f32 %v821, %v824
          %v839 = vmul.f32 %v822, %v824
          %v840 = vmul.f32 %v823, %v824
          %v841 = vadd.f32 %v791, %v825
          %v842 = vadd.f32 %v792, %v826
          %v843 = vadd.f32 %v793, %v827
          %v844 = vadd.f32 %v794, %v828
          %v845 = vadd.f32 %v795, %v829
          %v846 = vadd.f32 %v796, %v830
          %v847 = vadd.f32 %v797, %v831
          %v848 = vadd.f32 %v798, %v832
          %v849 = vadd.f32 %v799, %v833
          %v850 = vadd.f32 %v800, %v834
          %v851 = vadd.f32 %v801, %v835
          %v852 = vadd.f32 %v802, %v836
          %v853 = vadd.f32 %v803, %v837
          %v854 = vadd.f32 %v804, %v838
          %v855 = vadd.f32 %v805, %v839
          %v856 = vadd.f32 %v806, %v840
          %s857 = scalar_lea.vmem [#allocation2], 208
          %v858 = vld [vmem:[%s857] sm:$0xff]
          %v859 = vld [vmem:[%s857 + $0x8] sm:$0x1f]
          %v860 = vld [vmem:[%s857 + $0x10] sm:$0xff]
          %v861 = vld [vmem:[%s857 + $0x18] sm:$0x1f]
          %v862 = vld [vmem:[%s857 + $0x20] sm:$0xff]
          %v863 = vld [vmem:[%s857 + $0x28] sm:$0x1f]
          %v864 = vld [vmem:[%s857 + $0x30] sm:$0xff]
          %v865 = vld [vmem:[%s857 + $0x38] sm:$0x1f]
          %v866 = vld [vmem:[%s857 + $0x40] sm:$0xff]
          %v867 = vld [vmem:[%s857 + $0x48] sm:$0x1f]
          %v868 = vld [vmem:[%s857 + $0x50] sm:$0xff]
          %v869 = vld [vmem:[%s857 + $0x58] sm:$0x1f]
          %v870 = vld [vmem:[%s857 + $0x60] sm:$0xff]
          %v871 = vld [vmem:[%s857 + $0x68] sm:$0x1f]
          %v872 = vld [vmem:[%s857 + $0x70] sm:$0xff]
          %v873 = vld [vmem:[%s857 + $0x78] sm:$0x1f]
          %v874 = vperm.slane %v239, 1
          %v875 = vmul.f32 %v858, %v874
          %v876 = vmul.f32 %v859, %v874
          %v877 = vmul.f32 %v860, %v874
          %v878 = vmul.f32 %v861, %v874
          %v879 = vmul.f32 %v862, %v874
          %v880 = vmul.f32 %v863, %v874
          %v881 = vmul.f32 %v864, %v874
          %v882 = vmul.f32 %v865, %v874
          %v883 = vmul.f32 %v866, %v874
          %v884 = vmul.f32 %v867, %v874
          %v885 = vmul.f32 %v868, %v874
          %v886 = vmul.f32 %v869, %v874
          %v887 = vmul.f32 %v870, %v874
          %v888 = vmul.f32 %v871, %v874
          %v889 = vmul.f32 %v872, %v874
          %v890 = vmul.f32 %v873, %v874
          %v891 = vadd.f32 %v841, %v875
          %v892 = vadd.f32 %v842, %v876
          %v893 = vadd.f32 %v843, %v877
          %v894 = vadd.f32 %v844, %v878
          %v895 = vadd.f32 %v845, %v879
          %v896 = vadd.f32 %v846, %v880
          %v897 = vadd.f32 %v847, %v881
          %v898 = vadd.f32 %v848, %v882
          %v899 = vadd.f32 %v849, %v883
          %v900 = vadd.f32 %v850, %v884
          %v901 = vadd.f32 %v851, %v885
          %v902 = vadd.f32 %v852, %v886
          %v903 = vadd.f32 %v853, %v887
          %v904 = vadd.f32 %v854, %v888
          %v905 = vadd.f32 %v855, %v889
          %v906 = vadd.f32 %v856, %v890
          %s907 = scalar_lea.vmem [#allocation2], 384
          %v908 = vld [vmem:[%s907] sm:$0xff]
          %v909 = vld [vmem:[%s907 + $0x8] sm:$0x1f]
          %v910 = vld [vmem:[%s907 + $0x10] sm:$0xff]
          %v911 = vld [vmem:[%s907 + $0x18] sm:$0x1f]
          %v912 = vld [vmem:[%s907 + $0x20] sm:$0xff]
          %v913 = vld [vmem:[%s907 + $0x28] sm:$0x1f]
          %v914 = vld [vmem:[%s907 + $0x30] sm:$0xff]
          %v915 = vld [vmem:[%s907 + $0x38] sm:$0x1f]
          %v916 = vld [vmem:[%s907 + $0x40] sm:$0xff]
          %v917 = vld [vmem:[%s907 + $0x48] sm:$0x1f]
          %v918 = vld [vmem:[%s907 + $0x50] sm:$0xff]
          %v919 = vld [vmem:[%s907 + $0x58] sm:$0x1f]
          %v920 = vld [vmem:[%s907 + $0x60] sm:$0xff]
          %v921 = vld [vmem:[%s907 + $0x68] sm:$0x1f]
          %v922 = vld [vmem:[%s907 + $0x70] sm:$0xff]
          %v923 = vld [vmem:[%s907 + $0x78] sm:$0x1f]
          %v924 = vperm.slane %v239, 2
          %v925 = vmul.f32 %v908, %v924
          %v926 = vmul.f32 %v909, %v924
          %v927 = vmul.f32 %v910, %v924
          %v928 = vmul.f32 %v911, %v924
          %v929 = vmul.f32 %v912, %v924
          %v930 = vmul.f32 %v913, %v924
          %v931 = vmul.f32 %v914, %v924
          %v932 = vmul.f32 %v915, %v924
          %v933 = vmul.f32 %v916, %v924
          %v934 = vmul.f32 %v917, %v924
          %v935 = vmul.f32 %v918, %v924
          %v936 = vmul.f32 %v919, %v924
          %v937 = vmul.f32 %v920, %v924
          %v938 = vmul.f32 %v921, %v924
          %v939 = vmul.f32 %v922, %v924
          %v940 = vmul.f32 %v923, %v924
          %v941 = vadd.f32 %v891, %v925
          %v942 = vadd.f32 %v892, %v926
          %v943 = vadd.f32 %v893, %v927
          %v944 = vadd.f32 %v894, %v928
          %v945 = vadd.f32 %v895, %v929
          %v946 = vadd.f32 %v896, %v930
          %v947 = vadd.f32 %v897, %v931
          %v948 = vadd.f32 %v898, %v932
          %v949 = vadd.f32 %v899, %v933
          %v950 = vadd.f32 %v900, %v934
          %v951 = vadd.f32 %v901, %v935
          %v952 = vadd.f32 %v902, %v936
          %v953 = vadd.f32 %v903, %v937
          %v954 = vadd.f32 %v904, %v938
          %v955 = vadd.f32 %v905, %v939
          %v956 = vadd.f32 %v906, %v940
          %s957 = scalar_lea.vmem [#allocation2], 560
          %v958 = vld [vmem:[%s957] sm:$0xff]
          %v959 = vld [vmem:[%s957 + $0x8] sm:$0x1f]
          %v960 = vld [vmem:[%s957 + $0x10] sm:$0xff]
          %v961 = vld [vmem:[%s957 + $0x18] sm:$0x1f]
          %v962 = vld [vmem:[%s957 + $0x20] sm:$0xff]
          %v963 = vld [vmem:[%s957 + $0x28] sm:$0x1f]
          %v964 = vld [vmem:[%s957 + $0x30] sm:$0xff]
          %v965 = vld [vmem:[%s957 + $0x38] sm:$0x1f]
          %v966 = vld [vmem:[%s957 + $0x40] sm:$0xff]
          %v967 = vld [vmem:[%s957 + $0x48] sm:$0x1f]
          %v968 = vld [vmem:[%s957 + $0x50] sm:$0xff]
          %v969 = vld [vmem:[%s957 + $0x58] sm:$0x1f]
          %v970 = vld [vmem:[%s957 + $0x60] sm:$0xff]
          %v971 = vld [vmem:[%s957 + $0x68] sm:$0x1f]
          %v972 = vld [vmem:[%s957 + $0x70] sm:$0xff]
          %v973 = vld [vmem:[%s957 + $0x78] sm:$0x1f]
          %v974 = vperm.slane %v239, 3
          %v975 = vmul.f32 %v958, %v974
          %v976 = vmul.f32 %v959, %v974
          %v977 = vmul.f32 %v960, %v974
          %v978 = vmul.f32 %v961, %v974
          %v979 = vmul.f32 %v962, %v974
          %v980 = vmul.f32 %v963, %v974
          %v981 = vmul.f32 %v964, %v974
          %v982 = vmul.f32 %v965, %v974
          %v983 = vmul.f32 %v966, %v974
          %v984 = vmul.f32 %v967, %v974
          %v985 = vmul.f32 %v968, %v974
          %v986 = vmul.f32 %v969, %v974
          %v987 = vmul.f32 %v970, %v974
          %v988 = vmul.f32 %v971, %v974
          %v989 = vmul.f32 %v972, %v974
          %v990 = vmul.f32 %v973, %v974
          %v991 = vadd.f32 %v941, %v975
          %v992 = vadd.f32 %v942, %v976
          %v993 = vadd.f32 %v943, %v977
          %v994 = vadd.f32 %v944, %v978
          %v995 = vadd.f32 %v945, %v979
          %v996 = vadd.f32 %v946, %v980
          %v997 = vadd.f32 %v947, %v981
          %v998 = vadd.f32 %v948, %v982
          %v999 = vadd.f32 %v949, %v983
          %v1000 = vadd.f32 %v950, %v984
          %v1001 = vadd.f32 %v951, %v985
          %v1002 = vadd.f32 %v952, %v986
          %v1003 = vadd.f32 %v953, %v987
          %v1004 = vadd.f32 %v954, %v988
          %v1005 = vadd.f32 %v955, %v989
          %v1006 = vadd.f32 %v956, %v990
          %s1007 = scalar_lea.vmem [#allocation2], 48
          %v1008 = vld [vmem:[%s1007] sm:$0xff]
          %v1009 = vld [vmem:[%s1007 + $0x8] sm:$0x1f]
          %v1010 = vld [vmem:[%s1007 + $0x10] sm:$0xff]
          %v1011 = vld [vmem:[%s1007 + $0x18] sm:$0x1f]
          %v1012 = vld [vmem:[%s1007 + $0x20] sm:$0xff]
          %v1013 = vld [vmem:[%s1007 + $0x28] sm:$0x1f]
          %v1014 = vld [vmem:[%s1007 + $0x30] sm:$0xff]
          %v1015 = vld [vmem:[%s1007 + $0x38] sm:$0x1f]
          %v1016 = vld [vmem:[%s1007 + $0x40] sm:$0xff]
          %v1017 = vld [vmem:[%s1007 + $0x48] sm:$0x1f]
          %v1018 = vld [vmem:[%s1007 + $0x50] sm:$0xff]
          %v1019 = vld [vmem:[%s1007 + $0x58] sm:$0x1f]
          %v1020 = vld [vmem:[%s1007 + $0x60] sm:$0xff]
          %v1021 = vld [vmem:[%s1007 + $0x68] sm:$0x1f]
          %v1022 = vld [vmem:[%s1007 + $0x70] sm:$0xff]
          %v1023 = vld [vmem:[%s1007 + $0x78] sm:$0x1f]
          %v1024 = vperm.slane %v240, 0
          %v1025 = vmul.f32 %v1008, %v1024
          %v1026 = vmul.f32 %v1009, %v1024
          %v1027 = vmul.f32 %v1010, %v1024
          %v1028 = vmul.f32 %v1011, %v1024
          %v1029 = vmul.f32 %v1012, %v1024
          %v1030 = vmul.f32 %v1013, %v1024
          %v1031 = vmul.f32 %v1014, %v1024
          %v1032 = vmul.f32 %v1015, %v1024
          %v1033 = vmul.f32 %v1016, %v1024
          %v1034 = vmul.f32 %v1017, %v1024
          %v1035 = vmul.f32 %v1018, %v1024
          %v1036 = vmul.f32 %v1019, %v1024
          %v1037 = vmul.f32 %v1020, %v1024
          %v1038 = vmul.f32 %v1021, %v1024
          %v1039 = vmul.f32 %v1022, %v1024
          %v1040 = vmul.f32 %v1023, %v1024
          %v1041 = vadd.f32 %v991, %v1025
          %v1042 = vadd.f32 %v992, %v1026
          %v1043 = vadd.f32 %v993, %v1027
          %v1044 = vadd.f32 %v994, %v1028
          %v1045 = vadd.f32 %v995, %v1029
          %v1046 = vadd.f32 %v996, %v1030
          %v1047 = vadd.f32 %v997, %v1031
          %v1048 = vadd.f32 %v998, %v1032
          %v1049 = vadd.f32 %v999, %v1033
          %v1050 = vadd.f32 %v1000, %v1034
          %v1051 = vadd.f32 %v1001, %v1035
          %v1052 = vadd.f32 %v1002, %v1036
          %v1053 = vadd.f32 %v1003, %v1037
          %v1054 = vadd.f32 %v1004, %v1038
          %v1055 = vadd.f32 %v1005, %v1039
          %v1056 = vadd.f32 %v1006, %v1040
          %s1057 = scalar_lea.vmem [#allocation2], 224
          %v1058 = vld [vmem:[%s1057] sm:$0xff]
          %v1059 = vld [vmem:[%s1057 + $0x8] sm:$0x1f]
          %v1060 = vld [vmem:[%s1057 + $0x10] sm:$0xff]
          %v1061 = vld [vmem:[%s1057 + $0x18] sm:$0x1f]
          %v1062 = vld [vmem:[%s1057 + $0x20] sm:$0xff]
          %v1063 = vld [vmem:[%s1057 + $0x28] sm:$0x1f]
          %v1064 = vld [vmem:[%s1057 + $0x30] sm:$0xff]
          %v1065 = vld [vmem:[%s1057 + $0x38] sm:$0x1f]
          %v1066 = vld [vmem:[%s1057 + $0x40] sm:$0xff]
          %v1067 = vld [vmem:[%s1057 + $0x48] sm:$0x1f]
          %v1068 = vld [vmem:[%s1057 + $0x50] sm:$0xff]
          %v1069 = vld [vmem:[%s1057 + $0x58] sm:$0x1f]
          %v1070 = vld [vmem:[%s1057 + $0x60] sm:$0xff]
          %v1071 = vld [vmem:[%s1057 + $0x68] sm:$0x1f]
          %v1072 = vld [vmem:[%s1057 + $0x70] sm:$0xff]
          %v1073 = vld [vmem:[%s1057 + $0x78] sm:$0x1f]
          %v1074 = vperm.slane %v240, 1
          %v1075 = vmul.f32 %v1058, %v1074
          %v1076 = vmul.f32 %v1059, %v1074
          %v1077 = vmul.f32 %v1060, %v1074
          %v1078 = vmul.f32 %v1061, %v1074
          %v1079 = vmul.f32 %v1062, %v1074
          %v1080 = vmul.f32 %v1063, %v1074
          %v1081 = vmul.f32 %v1064, %v1074
          %v1082 = vmul.f32 %v1065, %v1074
          %v1083 = vmul.f32 %v1066, %v1074
          %v1084 = vmul.f32 %v1067, %v1074
          %v1085 = vmul.f32 %v1068, %v1074
          %v1086 = vmul.f32 %v1069, %v1074
          %v1087 = vmul.f32 %v1070, %v1074
          %v1088 = vmul.f32 %v1071, %v1074
          %v1089 = vmul.f32 %v1072, %v1074
          %v1090 = vmul.f32 %v1073, %v1074
          %v1091 = vadd.f32 %v1041, %v1075
          %v1092 = vadd.f32 %v1042, %v1076
          %v1093 = vadd.f32 %v1043, %v1077
          %v1094 = vadd.f32 %v1044, %v1078
          %v1095 = vadd.f32 %v1045, %v1079
          %v1096 = vadd.f32 %v1046, %v1080
          %v1097 = vadd.f32 %v1047, %v1081
          %v1098 = vadd.f32 %v1048, %v1082
          %v1099 = vadd.f32 %v1049, %v1083
          %v1100 = vadd.f32 %v1050, %v1084
          %v1101 = vadd.f32 %v1051, %v1085
          %v1102 = vadd.f32 %v1052, %v1086
          %v1103 = vadd.f32 %v1053, %v1087
          %v1104 = vadd.f32 %v1054, %v1088
          %v1105 = vadd.f32 %v1055, %v1089
          %v1106 = vadd.f32 %v1056, %v1090
          %s1107 = scalar_lea.vmem [#allocation2], 400
          %v1108 = vld [vmem:[%s1107] sm:$0xff]
          %v1109 = vld [vmem:[%s1107 + $0x8] sm:$0x1f]
          %v1110 = vld [vmem:[%s1107 + $0x10] sm:$0xff]
          %v1111 = vld [vmem:[%s1107 + $0x18] sm:$0x1f]
          %v1112 = vld [vmem:[%s1107 + $0x20] sm:$0xff]
          %v1113 = vld [vmem:[%s1107 + $0x28] sm:$0x1f]
          %v1114 = vld [vmem:[%s1107 + $0x30] sm:$0xff]
          %v1115 = vld [vmem:[%s1107 + $0x38] sm:$0x1f]
          %v1116 = vld [vmem:[%s1107 + $0x40] sm:$0xff]
          %v1117 = vld [vmem:[%s1107 + $0x48] sm:$0x1f]
          %v1118 = vld [vmem:[%s1107 + $0x50] sm:$0xff]
          %v1119 = vld [vmem:[%s1107 + $0x58] sm:$0x1f]
          %v1120 = vld [vmem:[%s1107 + $0x60] sm:$0xff]
          %v1121 = vld [vmem:[%s1107 + $0x68] sm:$0x1f]
          %v1122 = vld [vmem:[%s1107 + $0x70] sm:$0xff]
          %v1123 = vld [vmem:[%s1107 + $0x78] sm:$0x1f]
          %v1124 = vperm.slane %v240, 2
          %v1125 = vmul.f32 %v1108, %v1124
          %v1126 = vmul.f32 %v1109, %v1124
          %v1127 = vmul.f32 %v1110, %v1124
          %v1128 = vmul.f32 %v1111, %v1124
          %v1129 = vmul.f32 %v1112, %v1124
          %v1130 = vmul.f32 %v1113, %v1124
          %v1131 = vmul.f32 %v1114, %v1124
          %v1132 = vmul.f32 %v1115, %v1124
          %v1133 = vmul.f32 %v1116, %v1124
          %v1134 = vmul.f32 %v1117, %v1124
          %v1135 = vmul.f32 %v1118, %v1124
          %v1136 = vmul.f32 %v1119, %v1124
          %v1137 = vmul.f32 %v1120, %v1124
          %v1138 = vmul.f32 %v1121, %v1124
          %v1139 = vmul.f32 %v1122, %v1124
          %v1140 = vmul.f32 %v1123, %v1124
          %v1141 = vadd.f32 %v1091, %v1125
          %v1142 = vadd.f32 %v1092, %v1126
          %v1143 = vadd.f32 %v1093, %v1127
          %v1144 = vadd.f32 %v1094, %v1128
          %v1145 = vadd.f32 %v1095, %v1129
          %v1146 = vadd.f32 %v1096, %v1130
          %v1147 = vadd.f32 %v1097, %v1131
          %v1148 = vadd.f32 %v1098, %v1132
          %v1149 = vadd.f32 %v1099, %v1133
          %v1150 = vadd.f32 %v1100, %v1134
          %v1151 = vadd.f32 %v1101, %v1135
          %v1152 = vadd.f32 %v1102, %v1136
          %v1153 = vadd.f32 %v1103, %v1137
          %v1154 = vadd.f32 %v1104, %v1138
          %v1155 = vadd.f32 %v1105, %v1139
          %v1156 = vadd.f32 %v1106, %v1140
          %s1157 = scalar_lea.vmem [#allocation2], 576
          %v1158 = vld [vmem:[%s1157] sm:$0xff]
          %v1159 = vld [vmem:[%s1157 + $0x8] sm:$0x1f]
          %v1160 = vld [vmem:[%s1157 + $0x10] sm:$0xff]
          %v1161 = vld [vmem:[%s1157 + $0x18] sm:$0x1f]
          %v1162 = vld [vmem:[%s1157 + $0x20] sm:$0xff]
          %v1163 = vld [vmem:[%s1157 + $0x28] sm:$0x1f]
          %v1164 = vld [vmem:[%s1157 + $0x30] sm:$0xff]
          %v1165 = vld [vmem:[%s1157 + $0x38] sm:$0x1f]
          %v1166 = vld [vmem:[%s1157 + $0x40] sm:$0xff]
          %v1167 = vld [vmem:[%s1157 + $0x48] sm:$0x1f]
          %v1168 = vld [vmem:[%s1157 + $0x50] sm:$0xff]
          %v1169 = vld [vmem:[%s1157 + $0x58] sm:$0x1f]
          %v1170 = vld [vmem:[%s1157 + $0x60] sm:$0xff]
          %v1171 = vld [vmem:[%s1157 + $0x68] sm:$0x1f]
          %v1172 = vld [vmem:[%s1157 + $0x70] sm:$0xff]
          %v1173 = vld [vmem:[%s1157 + $0x78] sm:$0x1f]
          %v1174 = vperm.slane %v240, 3
          %v1175 = vmul.f32 %v1158, %v1174
          %v1176 = vmul.f32 %v1159, %v1174
          %v1177 = vmul.f32 %v1160, %v1174
          %v1178 = vmul.f32 %v1161, %v1174
          %v1179 = vmul.f32 %v1162, %v1174
          %v1180 = vmul.f32 %v1163, %v1174
          %v1181 = vmul.f32 %v1164, %v1174
          %v1182 = vmul.f32 %v1165, %v1174
          %v1183 = vmul.f32 %v1166, %v1174
          %v1184 = vmul.f32 %v1167, %v1174
          %v1185 = vmul.f32 %v1168, %v1174
          %v1186 = vmul.f32 %v1169, %v1174
          %v1187 = vmul.f32 %v1170, %v1174
          %v1188 = vmul.f32 %v1171, %v1174
          %v1189 = vmul.f32 %v1172, %v1174
          %v1190 = vmul.f32 %v1173, %v1174
          %v1191 = vadd.f32 %v1141, %v1175
          %v1192 = vadd.f32 %v1142, %v1176
          %v1193 = vadd.f32 %v1143, %v1177
          %v1194 = vadd.f32 %v1144, %v1178
          %v1195 = vadd.f32 %v1145, %v1179
          %v1196 = vadd.f32 %v1146, %v1180
          %v1197 = vadd.f32 %v1147, %v1181
          %v1198 = vadd.f32 %v1148, %v1182
          %v1199 = vadd.f32 %v1149, %v1183
          %v1200 = vadd.f32 %v1150, %v1184
          %v1201 = vadd.f32 %v1151, %v1185
          %v1202 = vadd.f32 %v1152, %v1186
          %v1203 = vadd.f32 %v1153, %v1187
          %v1204 = vadd.f32 %v1154, %v1188
          %v1205 = vadd.f32 %v1155, %v1189
          %v1206 = vadd.f32 %v1156, %v1190
          %1207 = vst [vmem:[%s230] sm:$0xff] %v1191
          %1208 = vst [vmem:[%s230 + $0x8] sm:$0x1f] %v1192
          %1209 = vst [vmem:[%s230 + $0x10] sm:$0xff] %v1193
          %1210 = vst [vmem:[%s230 + $0x18] sm:$0x1f] %v1194
          %1211 = vst [vmem:[%s230 + $0x20] sm:$0xff] %v1195
          %1212 = vst [vmem:[%s230 + $0x28] sm:$0x1f] %v1196
          %1213 = vst [vmem:[%s230 + $0x30] sm:$0xff] %v1197
          %1214 = vst [vmem:[%s230 + $0x38] sm:$0x1f] %v1198
          %1215 = vst [vmem:[%s230 + $0x40] sm:$0xff] %v1199
          %1216 = vst [vmem:[%s230 + $0x48] sm:$0x1f] %v1200
          %1217 = vst [vmem:[%s230 + $0x50] sm:$0xff] %v1201
          %1218 = vst [vmem:[%s230 + $0x58] sm:$0x1f] %v1202
          %1219 = vst [vmem:[%s230 + $0x60] sm:$0xff] %v1203
          %1220 = vst [vmem:[%s230 + $0x68] sm:$0x1f] %v1204
          %1221 = vst [vmem:[%s230 + $0x70] sm:$0xff] %v1205
          %1222 = vst [vmem:[%s230 + $0x78] sm:$0x1f] %v1206
        $region40: #{tpu_custom_call.1} parent=27 // pred_fallthru
          _
        %p1223 = scmp.eq.s32.totalorder %s26, 1
        // Predicated region
        $region41: #{tpu_custom_call.1} parent=27 // pred_check
          %p1224 = pneg %p1223
        $region42: #{tpu_custom_call.1} parent=27 // pred_check_branch
          %1226 = sbr.rel (%p1224) target = $region44
        $region43: #{tpu_custom_call.1} parent=27 // pred_region
          %s1227 = scalar_lea.vmem %s205, 128 [#allocation5]
          %v1228 = vld [vmem:[%s1227] sm:$0xff]
          %v1229 = vld [vmem:[%s1227 + $0x8] sm:$0x1f]
          %v1230 = vld [vmem:[%s1227 + $0x10] sm:$0xff]
          %v1231 = vld [vmem:[%s1227 + $0x18] sm:$0x1f]
          %v1232 = vld [vmem:[%s1227 + $0x20] sm:$0xff]
          %v1233 = vld [vmem:[%s1227 + $0x28] sm:$0x1f]
          %v1234 = vld [vmem:[%s1227 + $0x30] sm:$0xff]
          %v1235 = vld [vmem:[%s1227 + $0x38] sm:$0x1f]
          %v1236 = vld [vmem:[%s1227 + $0x40] sm:$0xff]
          %v1237 = vld [vmem:[%s1227 + $0x48] sm:$0x1f]
          %v1238 = vld [vmem:[%s1227 + $0x50] sm:$0xff]
          %v1239 = vld [vmem:[%s1227 + $0x58] sm:$0x1f]
          %v1240 = vld [vmem:[%s1227 + $0x60] sm:$0xff]
          %v1241 = vld [vmem:[%s1227 + $0x68] sm:$0x1f]
          %v1242 = vld [vmem:[%s1227 + $0x70] sm:$0xff]
          %v1243 = vld [vmem:[%s1227 + $0x78] sm:$0x1f]
          %1244 = vst [vmem:[#allocation2] sm:$0xff] %v1228
          %1245 = vst [vmem:[#allocation2 + $0x8] sm:$0x1f] %v1229
          %1246 = vst [vmem:[#allocation2 + $0x10] sm:$0xff] %v1230
          %1247 = vst [vmem:[#allocation2 + $0x18] sm:$0x1f] %v1231
          %1248 = vst [vmem:[#allocation2 + $0x20] sm:$0xff] %v1232
          %1249 = vst [vmem:[#allocation2 + $0x28] sm:$0x1f] %v1233
          %1250 = vst [vmem:[#allocation2 + $0x30] sm:$0xff] %v1234
          %1251 = vst [vmem:[#allocation2 + $0x38] sm:$0x1f] %v1235
          %1252 = vst [vmem:[#allocation2 + $0x40] sm:$0xff] %v1236
          %1253 = vst [vmem:[#allocation2 + $0x48] sm:$0x1f] %v1237
          %1254 = vst [vmem:[#allocation2 + $0x50] sm:$0xff] %v1238
          %1255 = vst [vmem:[#allocation2 + $0x58] sm:$0x1f] %v1239
          %1256 = vst [vmem:[#allocation2 + $0x60] sm:$0xff] %v1240
          %1257 = vst [vmem:[#allocation2 + $0x68] sm:$0x1f] %v1241
          %1258 = vst [vmem:[#allocation2 + $0x70] sm:$0xff] %v1242
          %1259 = vst [vmem:[#allocation2 + $0x78] sm:$0x1f] %v1243
          %v1260 = vld [vmem:[%s1227 + $0x1] sm:$0xff]
          %v1261 = vld [vmem:[%s1227 + $0x9] sm:$0x1f]
          %v1262 = vld [vmem:[%s1227 + $0x11] sm:$0xff]
          %v1263 = vld [vmem:[%s1227 + $0x19] sm:$0x1f]
          %v1264 = vld [vmem:[%s1227 + $0x21] sm:$0xff]
          %v1265 = vld [vmem:[%s1227 + $0x29] sm:$0x1f]
          %v1266 = vld [vmem:[%s1227 + $0x31] sm:$0xff]
          %v1267 = vld [vmem:[%s1227 + $0x39] sm:$0x1f]
          %v1268 = vld [vmem:[%s1227 + $0x41] sm:$0xff]
          %v1269 = vld [vmem:[%s1227 + $0x49] sm:$0x1f]
          %v1270 = vld [vmem:[%s1227 + $0x51] sm:$0xff]
          %v1271 = vld [vmem:[%s1227 + $0x59] sm:$0x1f]
          %v1272 = vld [vmem:[%s1227 + $0x61] sm:$0xff]
          %v1273 = vld [vmem:[%s1227 + $0x69] sm:$0x1f]
          %v1274 = vld [vmem:[%s1227 + $0x71] sm:$0xff]
          %v1275 = vld [vmem:[%s1227 + $0x79] sm:$0x1f]
          %s1276 = scalar_lea.vmem [#allocation2], 176
          %1277 = vst [vmem:[%s1276] sm:$0xff] %v1260
          %1278 = vst [vmem:[%s1276 + $0x8] sm:$0x1f] %v1261
          %1279 = vst [vmem:[%s1276 + $0x10] sm:$0xff] %v1262
          %1280 = vst [vmem:[%s1276 + $0x18] sm:$0x1f] %v1263
          %1281 = vst [vmem:[%s1276 + $0x20] sm:$0xff] %v1264
          %1282 = vst [vmem:[%s1276 + $0x28] sm:$0x1f] %v1265
          %1283 = vst [vmem:[%s1276 + $0x30] sm:$0xff] %v1266
          %1284 = vst [vmem:[%s1276 + $0x38] sm:$0x1f] %v1267
          %1285 = vst [vmem:[%s1276 + $0x40] sm:$0xff] %v1268
          %1286 = vst [vmem:[%s1276 + $0x48] sm:$0x1f] %v1269
          %1287 = vst [vmem:[%s1276 + $0x50] sm:$0xff] %v1270
          %1288 = vst [vmem:[%s1276 + $0x58] sm:$0x1f] %v1271
          %1289 = vst [vmem:[%s1276 + $0x60] sm:$0xff] %v1272
          %1290 = vst [vmem:[%s1276 + $0x68] sm:$0x1f] %v1273
          %1291 = vst [vmem:[%s1276 + $0x70] sm:$0xff] %v1274
          %1292 = vst [vmem:[%s1276 + $0x78] sm:$0x1f] %v1275
          %v1293 = vld [vmem:[%s1227 + $0x2] sm:$0xff]
          %v1294 = vld [vmem:[%s1227 + $0xa] sm:$0x1f]
          %v1295 = vld [vmem:[%s1227 + $0x12] sm:$0xff]
          %v1296 = vld [vmem:[%s1227 + $0x1a] sm:$0x1f]
          %v1297 = vld [vmem:[%s1227 + $0x22] sm:$0xff]
          %v1298 = vld [vmem:[%s1227 + $0x2a] sm:$0x1f]
          %v1299 = vld [vmem:[%s1227 + $0x32] sm:$0xff]
          %v1300 = vld [vmem:[%s1227 + $0x3a] sm:$0x1f]
          %v1301 = vld [vmem:[%s1227 + $0x42] sm:$0xff]
          %v1302 = vld [vmem:[%s1227 + $0x4a] sm:$0x1f]
          %v1303 = vld [vmem:[%s1227 + $0x52] sm:$0xff]
          %v1304 = vld [vmem:[%s1227 + $0x5a] sm:$0x1f]
          %v1305 = vld [vmem:[%s1227 + $0x62] sm:$0xff]
          %v1306 = vld [vmem:[%s1227 + $0x6a] sm:$0x1f]
          %v1307 = vld [vmem:[%s1227 + $0x72] sm:$0xff]
          %v1308 = vld [vmem:[%s1227 + $0x7a] sm:$0x1f]
          %s1309 = scalar_lea.vmem [#allocation2], 352
          %1310 = vst [vmem:[%s1309] sm:$0xff] %v1293
          %1311 = vst [vmem:[%s1309 + $0x8] sm:$0x1f] %v1294
          %1312 = vst [vmem:[%s1309 + $0x10] sm:$0xff] %v1295
          %1313 = vst [vmem:[%s1309 + $0x18] sm:$0x1f] %v1296
          %1314 = vst [vmem:[%s1309 + $0x20] sm:$0xff] %v1297
          %1315 = vst [vmem:[%s1309 + $0x28] sm:$0x1f] %v1298
          %1316 = vst [vmem:[%s1309 + $0x30] sm:$0xff] %v1299
          %1317 = vst [vmem:[%s1309 + $0x38] sm:$0x1f] %v1300
          %1318 = vst [vmem:[%s1309 + $0x40] sm:$0xff] %v1301
          %1319 = vst [vmem:[%s1309 + $0x48] sm:$0x1f] %v1302
          %1320 = vst [vmem:[%s1309 + $0x50] sm:$0xff] %v1303
          %1321 = vst [vmem:[%s1309 + $0x58] sm:$0x1f] %v1304
          %1322 = vst [vmem:[%s1309 + $0x60] sm:$0xff] %v1305
          %1323 = vst [vmem:[%s1309 + $0x68] sm:$0x1f] %v1306
          %1324 = vst [vmem:[%s1309 + $0x70] sm:$0xff] %v1307
          %1325 = vst [vmem:[%s1309 + $0x78] sm:$0x1f] %v1308
          %v1326 = vld [vmem:[%s1227 + $0x3] sm:$0xff]
          %v1327 = vld [vmem:[%s1227 + $0xb] sm:$0x1f]
          %v1328 = vld [vmem:[%s1227 + $0x13] sm:$0xff]
          %v1329 = vld [vmem:[%s1227 + $0x1b] sm:$0x1f]
          %v1330 = vld [vmem:[%s1227 + $0x23] sm:$0xff]
          %v1331 = vld [vmem:[%s1227 + $0x2b] sm:$0x1f]
          %v1332 = vld [vmem:[%s1227 + $0x33] sm:$0xff]
          %v1333 = vld [vmem:[%s1227 + $0x3b] sm:$0x1f]
          %v1334 = vld [vmem:[%s1227 + $0x43] sm:$0xff]
          %v1335 = vld [vmem:[%s1227 + $0x4b] sm:$0x1f]
          %v1336 = vld [vmem:[%s1227 + $0x53] sm:$0xff]
          %v1337 = vld [vmem:[%s1227 + $0x5b] sm:$0x1f]
          %v1338 = vld [vmem:[%s1227 + $0x63] sm:$0xff]
          %v1339 = vld [vmem:[%s1227 + $0x6b] sm:$0x1f]
          %v1340 = vld [vmem:[%s1227 + $0x73] sm:$0xff]
          %v1341 = vld [vmem:[%s1227 + $0x7b] sm:$0x1f]
          %s1342 = scalar_lea.vmem [#allocation2], 528
          %1343 = vst [vmem:[%s1342] sm:$0xff] %v1326
          %1344 = vst [vmem:[%s1342 + $0x8] sm:$0x1f] %v1327
          %1345 = vst [vmem:[%s1342 + $0x10] sm:$0xff] %v1328
          %1346 = vst [vmem:[%s1342 + $0x18] sm:$0x1f] %v1329
          %1347 = vst [vmem:[%s1342 + $0x20] sm:$0xff] %v1330
          %1348 = vst [vmem:[%s1342 + $0x28] sm:$0x1f] %v1331
          %1349 = vst [vmem:[%s1342 + $0x30] sm:$0xff] %v1332
          %1350 = vst [vmem:[%s1342 + $0x38] sm:$0x1f] %v1333
          %1351 = vst [vmem:[%s1342 + $0x40] sm:$0xff] %v1334
          %1352 = vst [vmem:[%s1342 + $0x48] sm:$0x1f] %v1335
          %1353 = vst [vmem:[%s1342 + $0x50] sm:$0xff] %v1336
          %1354 = vst [vmem:[%s1342 + $0x58] sm:$0x1f] %v1337
          %1355 = vst [vmem:[%s1342 + $0x60] sm:$0xff] %v1338
          %1356 = vst [vmem:[%s1342 + $0x68] sm:$0x1f] %v1339
          %1357 = vst [vmem:[%s1342 + $0x70] sm:$0xff] %v1340
          %1358 = vst [vmem:[%s1342 + $0x78] sm:$0x1f] %v1341
          %v1359 = vld [vmem:[#allocation2] sm:$0xff]
          %v1360 = vld [vmem:[#allocation2 + $0x8] sm:$0x1f]
          %v1361 = vld [vmem:[#allocation2 + $0x10] sm:$0xff]
          %v1362 = vld [vmem:[#allocation2 + $0x18] sm:$0x1f]
          %v1363 = vld [vmem:[#allocation2 + $0x20] sm:$0xff]
          %v1364 = vld [vmem:[#allocation2 + $0x28] sm:$0x1f]
          %v1365 = vld [vmem:[#allocation2 + $0x30] sm:$0xff]
          %v1366 = vld [vmem:[#allocation2 + $0x38] sm:$0x1f]
          %v1367 = vld [vmem:[#allocation2 + $0x40] sm:$0xff]
          %v1368 = vld [vmem:[#allocation2 + $0x48] sm:$0x1f]
          %v1369 = vperm.slane %v237, 0
          %v1370 = vmul.f32 %v1359, %v1369
          %v1371 = vmul.f32 %v1360, %v1369
          %v1372 = vmul.f32 %v1361, %v1369
          %v1373 = vmul.f32 %v1362, %v1369
          %v1374 = vmul.f32 %v1363, %v1369
          %v1375 = vmul.f32 %v1364, %v1369
          %v1376 = vmul.f32 %v1365, %v1369
          %v1377 = vmul.f32 %v1366, %v1369
          %v1378 = vmul.f32 %v1367, %v1369
          %v1379 = vmul.f32 %v1368, %v1369
          %v1380 = vld [vmem:[%s1276] sm:$0xff]
          %v1381 = vld [vmem:[%s1276 + $0x8] sm:$0x1f]
          %v1382 = vld [vmem:[%s1276 + $0x10] sm:$0xff]
          %v1383 = vld [vmem:[%s1276 + $0x18] sm:$0x1f]
          %v1384 = vld [vmem:[%s1276 + $0x20] sm:$0xff]
          %v1385 = vld [vmem:[%s1276 + $0x28] sm:$0x1f]
          %v1386 = vld [vmem:[%s1276 + $0x30] sm:$0xff]
          %v1387 = vld [vmem:[%s1276 + $0x38] sm:$0x1f]
          %v1388 = vld [vmem:[%s1276 + $0x40] sm:$0xff]
          %v1389 = vld [vmem:[%s1276 + $0x48] sm:$0x1f]
          %v1390 = vperm.slane %v237, 1
          %v1391 = vmul.f32 %v1380, %v1390
          %v1392 = vmul.f32 %v1381, %v1390
          %v1393 = vmul.f32 %v1382, %v1390
          %v1394 = vmul.f32 %v1383, %v1390
          %v1395 = vmul.f32 %v1384, %v1390
          %v1396 = vmul.f32 %v1385, %v1390
          %v1397 = vmul.f32 %v1386, %v1390
          %v1398 = vmul.f32 %v1387, %v1390
          %v1399 = vmul.f32 %v1388, %v1390
          %v1400 = vmul.f32 %v1389, %v1390
          %v1401 = vadd.f32 %v1370, %v1391
          %v1402 = vadd.f32 %v1371, %v1392
          %v1403 = vadd.f32 %v1372, %v1393
          %v1404 = vadd.f32 %v1373, %v1394
          %v1405 = vadd.f32 %v1374, %v1395
          %v1406 = vadd.f32 %v1375, %v1396
          %v1407 = vadd.f32 %v1376, %v1397
          %v1408 = vadd.f32 %v1377, %v1398
          %v1409 = vadd.f32 %v1378, %v1399
          %v1410 = vadd.f32 %v1379, %v1400
          %v1411 = vld [vmem:[%s1309] sm:$0xff]
          %v1412 = vld [vmem:[%s1309 + $0x8] sm:$0x1f]
          %v1413 = vld [vmem:[%s1309 + $0x10] sm:$0xff]
          %v1414 = vld [vmem:[%s1309 + $0x18] sm:$0x1f]
          %v1415 = vld [vmem:[%s1309 + $0x20] sm:$0xff]
          %v1416 = vld [vmem:[%s1309 + $0x28] sm:$0x1f]
          %v1417 = vld [vmem:[%s1309 + $0x30] sm:$0xff]
          %v1418 = vld [vmem:[%s1309 + $0x38] sm:$0x1f]
          %v1419 = vld [vmem:[%s1309 + $0x40] sm:$0xff]
          %v1420 = vld [vmem:[%s1309 + $0x48] sm:$0x1f]
          %v1421 = vperm.slane %v237, 2
          %v1422 = vmul.f32 %v1411, %v1421
          %v1423 = vmul.f32 %v1412, %v1421
          %v1424 = vmul.f32 %v1413, %v1421
          %v1425 = vmul.f32 %v1414, %v1421
          %v1426 = vmul.f32 %v1415, %v1421
          %v1427 = vmul.f32 %v1416, %v1421
          %v1428 = vmul.f32 %v1417, %v1421
          %v1429 = vmul.f32 %v1418, %v1421
          %v1430 = vmul.f32 %v1419, %v1421
          %v1431 = vmul.f32 %v1420, %v1421
          %v1432 = vadd.f32 %v1401, %v1422
          %v1433 = vadd.f32 %v1402, %v1423
          %v1434 = vadd.f32 %v1403, %v1424
          %v1435 = vadd.f32 %v1404, %v1425
          %v1436 = vadd.f32 %v1405, %v1426
          %v1437 = vadd.f32 %v1406, %v1427
          %v1438 = vadd.f32 %v1407, %v1428
          %v1439 = vadd.f32 %v1408, %v1429
          %v1440 = vadd.f32 %v1409, %v1430
          %v1441 = vadd.f32 %v1410, %v1431
          %v1442 = vld [vmem:[%s1342] sm:$0xff]
          %v1443 = vld [vmem:[%s1342 + $0x8] sm:$0x1f]
          %v1444 = vld [vmem:[%s1342 + $0x10] sm:$0xff]
          %v1445 = vld [vmem:[%s1342 + $0x18] sm:$0x1f]
          %v1446 = vld [vmem:[%s1342 + $0x20] sm:$0xff]
          %v1447 = vld [vmem:[%s1342 + $0x28] sm:$0x1f]
          %v1448 = vld [vmem:[%s1342 + $0x30] sm:$0xff]
          %v1449 = vld [vmem:[%s1342 + $0x38] sm:$0x1f]
          %v1450 = vld [vmem:[%s1342 + $0x40] sm:$0xff]
          %v1451 = vld [vmem:[%s1342 + $0x48] sm:$0x1f]
          %v1452 = vperm.slane %v237, 3
          %v1453 = vmul.f32 %v1442, %v1452
          %v1454 = vmul.f32 %v1443, %v1452
          %v1455 = vmul.f32 %v1444, %v1452
          %v1456 = vmul.f32 %v1445, %v1452
          %v1457 = vmul.f32 %v1446, %v1452
          %v1458 = vmul.f32 %v1447, %v1452
          %v1459 = vmul.f32 %v1448, %v1452
          %v1460 = vmul.f32 %v1449, %v1452
          %v1461 = vmul.f32 %v1450, %v1452
          %v1462 = vmul.f32 %v1451, %v1452
          %v1463 = vadd.f32 %v1432, %v1453
          %v1464 = vadd.f32 %v1433, %v1454
          %v1465 = vadd.f32 %v1434, %v1455
          %v1466 = vadd.f32 %v1435, %v1456
          %v1467 = vadd.f32 %v1436, %v1457
          %v1468 = vadd.f32 %v1437, %v1458
          %v1469 = vadd.f32 %v1438, %v1459
          %v1470 = vadd.f32 %v1439, %v1460
          %v1471 = vadd.f32 %v1440, %v1461
          %v1472 = vadd.f32 %v1441, %v1462
          %s1473 = scalar_lea.vmem [#allocation2], 16
          %v1474 = vld [vmem:[%s1473] sm:$0xff]
          %v1475 = vld [vmem:[%s1473 + $0x8] sm:$0x1f]
          %v1476 = vld [vmem:[%s1473 + $0x10] sm:$0xff]
          %v1477 = vld [vmem:[%s1473 + $0x18] sm:$0x1f]
          %v1478 = vld [vmem:[%s1473 + $0x20] sm:$0xff]
          %v1479 = vld [vmem:[%s1473 + $0x28] sm:$0x1f]
          %v1480 = vld [vmem:[%s1473 + $0x30] sm:$0xff]
          %v1481 = vld [vmem:[%s1473 + $0x38] sm:$0x1f]
          %v1482 = vld [vmem:[%s1473 + $0x40] sm:$0xff]
          %v1483 = vld [vmem:[%s1473 + $0x48] sm:$0x1f]
          %v1484 = vperm.slane %v238, 0
          %v1485 = vmul.f32 %v1474, %v1484
          %v1486 = vmul.f32 %v1475, %v1484
          %v1487 = vmul.f32 %v1476, %v1484
          %v1488 = vmul.f32 %v1477, %v1484
          %v1489 = vmul.f32 %v1478, %v1484
          %v1490 = vmul.f32 %v1479, %v1484
          %v1491 = vmul.f32 %v1480, %v1484
          %v1492 = vmul.f32 %v1481, %v1484
          %v1493 = vmul.f32 %v1482, %v1484
          %v1494 = vmul.f32 %v1483, %v1484
          %v1495 = vadd.f32 %v1463, %v1485
          %v1496 = vadd.f32 %v1464, %v1486
          %v1497 = vadd.f32 %v1465, %v1487
          %v1498 = vadd.f32 %v1466, %v1488
          %v1499 = vadd.f32 %v1467, %v1489
          %v1500 = vadd.f32 %v1468, %v1490
          %v1501 = vadd.f32 %v1469, %v1491
          %v1502 = vadd.f32 %v1470, %v1492
          %v1503 = vadd.f32 %v1471, %v1493
          %v1504 = vadd.f32 %v1472, %v1494
          %s1505 = scalar_lea.vmem [#allocation2], 192
          %v1506 = vld [vmem:[%s1505] sm:$0xff]
          %v1507 = vld [vmem:[%s1505 + $0x8] sm:$0x1f]
          %v1508 = vld [vmem:[%s1505 + $0x10] sm:$0xff]
          %v1509 = vld [vmem:[%s1505 + $0x18] sm:$0x1f]
          %v1510 = vld [vmem:[%s1505 + $0x20] sm:$0xff]
          %v1511 = vld [vmem:[%s1505 + $0x28] sm:$0x1f]
          %v1512 = vld [vmem:[%s1505 + $0x30] sm:$0xff]
          %v1513 = vld [vmem:[%s1505 + $0x38] sm:$0x1f]
          %v1514 = vld [vmem:[%s1505 + $0x40] sm:$0xff]
          %v1515 = vld [vmem:[%s1505 + $0x48] sm:$0x1f]
          %v1516 = vperm.slane %v238, 1
          %v1517 = vmul.f32 %v1506, %v1516
          %v1518 = vmul.f32 %v1507, %v1516
          %v1519 = vmul.f32 %v1508, %v1516
          %v1520 = vmul.f32 %v1509, %v1516
          %v1521 = vmul.f32 %v1510, %v1516
          %v1522 = vmul.f32 %v1511, %v1516
          %v1523 = vmul.f32 %v1512, %v1516
          %v1524 = vmul.f32 %v1513, %v1516
          %v1525 = vmul.f32 %v1514, %v1516
          %v1526 = vmul.f32 %v1515, %v1516
          %v1527 = vadd.f32 %v1495, %v1517
          %v1528 = vadd.f32 %v1496, %v1518
          %v1529 = vadd.f32 %v1497, %v1519
          %v1530 = vadd.f32 %v1498, %v1520
          %v1531 = vadd.f32 %v1499, %v1521
          %v1532 = vadd.f32 %v1500, %v1522
          %v1533 = vadd.f32 %v1501, %v1523
          %v1534 = vadd.f32 %v1502, %v1524
          %v1535 = vadd.f32 %v1503, %v1525
          %v1536 = vadd.f32 %v1504, %v1526
          %s1537 = scalar_lea.vmem [#allocation2], 368
          %v1538 = vld [vmem:[%s1537] sm:$0xff]
          %v1539 = vld [vmem:[%s1537 + $0x8] sm:$0x1f]
          %v1540 = vld [vmem:[%s1537 + $0x10] sm:$0xff]
          %v1541 = vld [vmem:[%s1537 + $0x18] sm:$0x1f]
          %v1542 = vld [vmem:[%s1537 + $0x20] sm:$0xff]
          %v1543 = vld [vmem:[%s1537 + $0x28] sm:$0x1f]
          %v1544 = vld [vmem:[%s1537 + $0x30] sm:$0xff]
          %v1545 = vld [vmem:[%s1537 + $0x38] sm:$0x1f]
          %v1546 = vld [vmem:[%s1537 + $0x40] sm:$0xff]
          %v1547 = vld [vmem:[%s1537 + $0x48] sm:$0x1f]
          %v1548 = vperm.slane %v238, 2
          %v1549 = vmul.f32 %v1538, %v1548
          %v1550 = vmul.f32 %v1539, %v1548
          %v1551 = vmul.f32 %v1540, %v1548
          %v1552 = vmul.f32 %v1541, %v1548
          %v1553 = vmul.f32 %v1542, %v1548
          %v1554 = vmul.f32 %v1543, %v1548
          %v1555 = vmul.f32 %v1544, %v1548
          %v1556 = vmul.f32 %v1545, %v1548
          %v1557 = vmul.f32 %v1546, %v1548
          %v1558 = vmul.f32 %v1547, %v1548
          %v1559 = vadd.f32 %v1527, %v1549
          %v1560 = vadd.f32 %v1528, %v1550
          %v1561 = vadd.f32 %v1529, %v1551
          %v1562 = vadd.f32 %v1530, %v1552
          %v1563 = vadd.f32 %v1531, %v1553
          %v1564 = vadd.f32 %v1532, %v1554
          %v1565 = vadd.f32 %v1533, %v1555
          %v1566 = vadd.f32 %v1534, %v1556
          %v1567 = vadd.f32 %v1535, %v1557
          %v1568 = vadd.f32 %v1536, %v1558
          %s1569 = scalar_lea.vmem [#allocation2], 544
          %v1570 = vld [vmem:[%s1569] sm:$0xff]
          %v1571 = vld [vmem:[%s1569 + $0x8] sm:$0x1f]
          %v1572 = vld [vmem:[%s1569 + $0x10] sm:$0xff]
          %v1573 = vld [vmem:[%s1569 + $0x18] sm:$0x1f]
          %v1574 = vld [vmem:[%s1569 + $0x20] sm:$0xff]
          %v1575 = vld [vmem:[%s1569 + $0x28] sm:$0x1f]
          %v1576 = vld [vmem:[%s1569 + $0x30] sm:$0xff]
          %v1577 = vld [vmem:[%s1569 + $0x38] sm:$0x1f]
          %v1578 = vld [vmem:[%s1569 + $0x40] sm:$0xff]
          %v1579 = vld [vmem:[%s1569 + $0x48] sm:$0x1f]
          %v1580 = vperm.slane %v238, 3
          %v1581 = vmul.f32 %v1570, %v1580
          %v1582 = vmul.f32 %v1571, %v1580
          %v1583 = vmul.f32 %v1572, %v1580
          %v1584 = vmul.f32 %v1573, %v1580
          %v1585 = vmul.f32 %v1574, %v1580
          %v1586 = vmul.f32 %v1575, %v1580
          %v1587 = vmul.f32 %v1576, %v1580
          %v1588 = vmul.f32 %v1577, %v1580
          %v1589 = vmul.f32 %v1578, %v1580
          %v1590 = vmul.f32 %v1579, %v1580
          %v1591 = vadd.f32 %v1559, %v1581
          %v1592 = vadd.f32 %v1560, %v1582
          %v1593 = vadd.f32 %v1561, %v1583
          %v1594 = vadd.f32 %v1562, %v1584
          %v1595 = vadd.f32 %v1563, %v1585
          %v1596 = vadd.f32 %v1564, %v1586
          %v1597 = vadd.f32 %v1565, %v1587
          %v1598 = vadd.f32 %v1566, %v1588
          %v1599 = vadd.f32 %v1567, %v1589
          %v1600 = vadd.f32 %v1568, %v1590
          %s1601 = scalar_lea.vmem [#allocation2], 32
          %v1602 = vld [vmem:[%s1601] sm:$0xff]
          %v1603 = vld [vmem:[%s1601 + $0x8] sm:$0x1f]
          %v1604 = vld [vmem:[%s1601 + $0x10] sm:$0xff]
          %v1605 = vld [vmem:[%s1601 + $0x18] sm:$0x1f]
          %v1606 = vld [vmem:[%s1601 + $0x20] sm:$0xff]
          %v1607 = vld [vmem:[%s1601 + $0x28] sm:$0x1f]
          %v1608 = vld [vmem:[%s1601 + $0x30] sm:$0xff]
          %v1609 = vld [vmem:[%s1601 + $0x38] sm:$0x1f]
          %v1610 = vld [vmem:[%s1601 + $0x40] sm:$0xff]
          %v1611 = vld [vmem:[%s1601 + $0x48] sm:$0x1f]
          %v1612 = vperm.slane %v239, 0
          %v1613 = vmul.f32 %v1602, %v1612
          %v1614 = vmul.f32 %v1603, %v1612
          %v1615 = vmul.f32 %v1604, %v1612
          %v1616 = vmul.f32 %v1605, %v1612
          %v1617 = vmul.f32 %v1606, %v1612
          %v1618 = vmul.f32 %v1607, %v1612
          %v1619 = vmul.f32 %v1608, %v1612
          %v1620 = vmul.f32 %v1609, %v1612
          %v1621 = vmul.f32 %v1610, %v1612
          %v1622 = vmul.f32 %v1611, %v1612
          %v1623 = vadd.f32 %v1591, %v1613
          %v1624 = vadd.f32 %v1592, %v1614
          %v1625 = vadd.f32 %v1593, %v1615
          %v1626 = vadd.f32 %v1594, %v1616
          %v1627 = vadd.f32 %v1595, %v1617
          %v1628 = vadd.f32 %v1596, %v1618
          %v1629 = vadd.f32 %v1597, %v1619
          %v1630 = vadd.f32 %v1598, %v1620
          %v1631 = vadd.f32 %v1599, %v1621
          %v1632 = vadd.f32 %v1600, %v1622
          %s1633 = scalar_lea.vmem [#allocation2], 208
          %v1634 = vld [vmem:[%s1633] sm:$0xff]
          %v1635 = vld [vmem:[%s1633 + $0x8] sm:$0x1f]
          %v1636 = vld [vmem:[%s1633 + $0x10] sm:$0xff]
          %v1637 = vld [vmem:[%s1633 + $0x18] sm:$0x1f]
          %v1638 = vld [vmem:[%s1633 + $0x20] sm:$0xff]
          %v1639 = vld [vmem:[%s1633 + $0x28] sm:$0x1f]
          %v1640 = vld [vmem:[%s1633 + $0x30] sm:$0xff]
          %v1641 = vld [vmem:[%s1633 + $0x38] sm:$0x1f]
          %v1642 = vld [vmem:[%s1633 + $0x40] sm:$0xff]
          %v1643 = vld [vmem:[%s1633 + $0x48] sm:$0x1f]
          %v1644 = vperm.slane %v239, 1
          %v1645 = vmul.f32 %v1634, %v1644
          %v1646 = vmul.f32 %v1635, %v1644
          %v1647 = vmul.f32 %v1636, %v1644
          %v1648 = vmul.f32 %v1637, %v1644
          %v1649 = vmul.f32 %v1638, %v1644
          %v1650 = vmul.f32 %v1639, %v1644
          %v1651 = vmul.f32 %v1640, %v1644
          %v1652 = vmul.f32 %v1641, %v1644
          %v1653 = vmul.f32 %v1642, %v1644
          %v1654 = vmul.f32 %v1643, %v1644
          %v1655 = vadd.f32 %v1623, %v1645
          %v1656 = vadd.f32 %v1624, %v1646
          %v1657 = vadd.f32 %v1625, %v1647
          %v1658 = vadd.f32 %v1626, %v1648
          %v1659 = vadd.f32 %v1627, %v1649
          %v1660 = vadd.f32 %v1628, %v1650
          %v1661 = vadd.f32 %v1629, %v1651
          %v1662 = vadd.f32 %v1630, %v1652
          %v1663 = vadd.f32 %v1631, %v1653
          %v1664 = vadd.f32 %v1632, %v1654
          %s1665 = scalar_lea.vmem [#allocation2], 384
          %v1666 = vld [vmem:[%s1665] sm:$0xff]
          %v1667 = vld [vmem:[%s1665 + $0x8] sm:$0x1f]
          %v1668 = vld [vmem:[%s1665 + $0x10] sm:$0xff]
          %v1669 = vld [vmem:[%s1665 + $0x18] sm:$0x1f]
          %v1670 = vld [vmem:[%s1665 + $0x20] sm:$0xff]
          %v1671 = vld [vmem:[%s1665 + $0x28] sm:$0x1f]
          %v1672 = vld [vmem:[%s1665 + $0x30] sm:$0xff]
          %v1673 = vld [vmem:[%s1665 + $0x38] sm:$0x1f]
          %v1674 = vld [vmem:[%s1665 + $0x40] sm:$0xff]
          %v1675 = vld [vmem:[%s1665 + $0x48] sm:$0x1f]
          %v1676 = vperm.slane %v239, 2
          %v1677 = vmul.f32 %v1666, %v1676
          %v1678 = vmul.f32 %v1667, %v1676
          %v1679 = vmul.f32 %v1668, %v1676
          %v1680 = vmul.f32 %v1669, %v1676
          %v1681 = vmul.f32 %v1670, %v1676
          %v1682 = vmul.f32 %v1671, %v1676
          %v1683 = vmul.f32 %v1672, %v1676
          %v1684 = vmul.f32 %v1673, %v1676
          %v1685 = vmul.f32 %v1674, %v1676
          %v1686 = vmul.f32 %v1675, %v1676
          %v1687 = vadd.f32 %v1655, %v1677
          %v1688 = vadd.f32 %v1656, %v1678
          %v1689 = vadd.f32 %v1657, %v1679
          %v1690 = vadd.f32 %v1658, %v1680
          %v1691 = vadd.f32 %v1659, %v1681
          %v1692 = vadd.f32 %v1660, %v1682
          %v1693 = vadd.f32 %v1661, %v1683
          %v1694 = vadd.f32 %v1662, %v1684
          %v1695 = vadd.f32 %v1663, %v1685
          %v1696 = vadd.f32 %v1664, %v1686
          %s1697 = scalar_lea.vmem [#allocation2], 560
          %v1698 = vld [vmem:[%s1697] sm:$0xff]
          %v1699 = vld [vmem:[%s1697 + $0x8] sm:$0x1f]
          %v1700 = vld [vmem:[%s1697 + $0x10] sm:$0xff]
          %v1701 = vld [vmem:[%s1697 + $0x18] sm:$0x1f]
          %v1702 = vld [vmem:[%s1697 + $0x20] sm:$0xff]
          %v1703 = vld [vmem:[%s1697 + $0x28] sm:$0x1f]
          %v1704 = vld [vmem:[%s1697 + $0x30] sm:$0xff]
          %v1705 = vld [vmem:[%s1697 + $0x38] sm:$0x1f]
          %v1706 = vld [vmem:[%s1697 + $0x40] sm:$0xff]
          %v1707 = vld [vmem:[%s1697 + $0x48] sm:$0x1f]
          %v1708 = vperm.slane %v239, 3
          %v1709 = vmul.f32 %v1698, %v1708
          %v1710 = vmul.f32 %v1699, %v1708
          %v1711 = vmul.f32 %v1700, %v1708
          %v1712 = vmul.f32 %v1701, %v1708
          %v1713 = vmul.f32 %v1702, %v1708
          %v1714 = vmul.f32 %v1703, %v1708
          %v1715 = vmul.f32 %v1704, %v1708
          %v1716 = vmul.f32 %v1705, %v1708
          %v1717 = vmul.f32 %v1706, %v1708
          %v1718 = vmul.f32 %v1707, %v1708
          %v1719 = vadd.f32 %v1687, %v1709
          %v1720 = vadd.f32 %v1688, %v1710
          %v1721 = vadd.f32 %v1689, %v1711
          %v1722 = vadd.f32 %v1690, %v1712
          %v1723 = vadd.f32 %v1691, %v1713
          %v1724 = vadd.f32 %v1692, %v1714
          %v1725 = vadd.f32 %v1693, %v1715
          %v1726 = vadd.f32 %v1694, %v1716
          %v1727 = vadd.f32 %v1695, %v1717
          %v1728 = vadd.f32 %v1696, %v1718
          %s1729 = scalar_lea.vmem [#allocation2], 48
          %v1730 = vld [vmem:[%s1729] sm:$0xff]
          %v1731 = vld [vmem:[%s1729 + $0x8] sm:$0x1f]
          %v1732 = vld [vmem:[%s1729 + $0x10] sm:$0xff]
          %v1733 = vld [vmem:[%s1729 + $0x18] sm:$0x1f]
          %v1734 = vld [vmem:[%s1729 + $0x20] sm:$0xff]
          %v1735 = vld [vmem:[%s1729 + $0x28] sm:$0x1f]
          %v1736 = vld [vmem:[%s1729 + $0x30] sm:$0xff]
          %v1737 = vld [vmem:[%s1729 + $0x38] sm:$0x1f]
          %v1738 = vld [vmem:[%s1729 + $0x40] sm:$0xff]
          %v1739 = vld [vmem:[%s1729 + $0x48] sm:$0x1f]
          %v1740 = vperm.slane %v240, 0
          %v1741 = vmul.f32 %v1730, %v1740
          %v1742 = vmul.f32 %v1731, %v1740
          %v1743 = vmul.f32 %v1732, %v1740
          %v1744 = vmul.f32 %v1733, %v1740
          %v1745 = vmul.f32 %v1734, %v1740
          %v1746 = vmul.f32 %v1735, %v1740
          %v1747 = vmul.f32 %v1736, %v1740
          %v1748 = vmul.f32 %v1737, %v1740
          %v1749 = vmul.f32 %v1738, %v1740
          %v1750 = vmul.f32 %v1739, %v1740
          %v1751 = vadd.f32 %v1719, %v1741
          %v1752 = vadd.f32 %v1720, %v1742
          %v1753 = vadd.f32 %v1721, %v1743
          %v1754 = vadd.f32 %v1722, %v1744
          %v1755 = vadd.f32 %v1723, %v1745
          %v1756 = vadd.f32 %v1724, %v1746
          %v1757 = vadd.f32 %v1725, %v1747
          %v1758 = vadd.f32 %v1726, %v1748
          %v1759 = vadd.f32 %v1727, %v1749
          %v1760 = vadd.f32 %v1728, %v1750
          %s1761 = scalar_lea.vmem [#allocation2], 224
          %v1762 = vld [vmem:[%s1761] sm:$0xff]
          %v1763 = vld [vmem:[%s1761 + $0x8] sm:$0x1f]
          %v1764 = vld [vmem:[%s1761 + $0x10] sm:$0xff]
          %v1765 = vld [vmem:[%s1761 + $0x18] sm:$0x1f]
          %v1766 = vld [vmem:[%s1761 + $0x20] sm:$0xff]
          %v1767 = vld [vmem:[%s1761 + $0x28] sm:$0x1f]
          %v1768 = vld [vmem:[%s1761 + $0x30] sm:$0xff]
          %v1769 = vld [vmem:[%s1761 + $0x38] sm:$0x1f]
          %v1770 = vld [vmem:[%s1761 + $0x40] sm:$0xff]
          %v1771 = vld [vmem:[%s1761 + $0x48] sm:$0x1f]
          %v1772 = vperm.slane %v240, 1
          %v1773 = vmul.f32 %v1762, %v1772
          %v1774 = vmul.f32 %v1763, %v1772
          %v1775 = vmul.f32 %v1764, %v1772
          %v1776 = vmul.f32 %v1765, %v1772
          %v1777 = vmul.f32 %v1766, %v1772
          %v1778 = vmul.f32 %v1767, %v1772
          %v1779 = vmul.f32 %v1768, %v1772
          %v1780 = vmul.f32 %v1769, %v1772
          %v1781 = vmul.f32 %v1770, %v1772
          %v1782 = vmul.f32 %v1771, %v1772
          %v1783 = vadd.f32 %v1751, %v1773
          %v1784 = vadd.f32 %v1752, %v1774
          %v1785 = vadd.f32 %v1753, %v1775
          %v1786 = vadd.f32 %v1754, %v1776
          %v1787 = vadd.f32 %v1755, %v1777
          %v1788 = vadd.f32 %v1756, %v1778
          %v1789 = vadd.f32 %v1757, %v1779
          %v1790 = vadd.f32 %v1758, %v1780
          %v1791 = vadd.f32 %v1759, %v1781
          %v1792 = vadd.f32 %v1760, %v1782
          %s1793 = scalar_lea.vmem [#allocation2], 400
          %v1794 = vld [vmem:[%s1793] sm:$0xff]
          %v1795 = vld [vmem:[%s1793 + $0x8] sm:$0x1f]
          %v1796 = vld [vmem:[%s1793 + $0x10] sm:$0xff]
          %v1797 = vld [vmem:[%s1793 + $0x18] sm:$0x1f]
          %v1798 = vld [vmem:[%s1793 + $0x20] sm:$0xff]
          %v1799 = vld [vmem:[%s1793 + $0x28] sm:$0x1f]
          %v1800 = vld [vmem:[%s1793 + $0x30] sm:$0xff]
          %v1801 = vld [vmem:[%s1793 + $0x38] sm:$0x1f]
          %v1802 = vld [vmem:[%s1793 + $0x40] sm:$0xff]
          %v1803 = vld [vmem:[%s1793 + $0x48] sm:$0x1f]
          %v1804 = vperm.slane %v240, 2
          %v1805 = vmul.f32 %v1794, %v1804
          %v1806 = vmul.f32 %v1795, %v1804
          %v1807 = vmul.f32 %v1796, %v1804
          %v1808 = vmul.f32 %v1797, %v1804
          %v1809 = vmul.f32 %v1798, %v1804
          %v1810 = vmul.f32 %v1799, %v1804
          %v1811 = vmul.f32 %v1800, %v1804
          %v1812 = vmul.f32 %v1801, %v1804
          %v1813 = vmul.f32 %v1802, %v1804
          %v1814 = vmul.f32 %v1803, %v1804
          %v1815 = vadd.f32 %v1783, %v1805
          %v1816 = vadd.f32 %v1784, %v1806
          %v1817 = vadd.f32 %v1785, %v1807
          %v1818 = vadd.f32 %v1786, %v1808
          %v1819 = vadd.f32 %v1787, %v1809
          %v1820 = vadd.f32 %v1788, %v1810
          %v1821 = vadd.f32 %v1789, %v1811
          %v1822 = vadd.f32 %v1790, %v1812
          %v1823 = vadd.f32 %v1791, %v1813
          %v1824 = vadd.f32 %v1792, %v1814
          %s1825 = scalar_lea.vmem [#allocation2], 576
          %v1826 = vld [vmem:[%s1825] sm:$0xff]
          %v1827 = vld [vmem:[%s1825 + $0x8] sm:$0x1f]
          %v1828 = vld [vmem:[%s1825 + $0x10] sm:$0xff]
          %v1829 = vld [vmem:[%s1825 + $0x18] sm:$0x1f]
          %v1830 = vld [vmem:[%s1825 + $0x20] sm:$0xff]
          %v1831 = vld [vmem:[%s1825 + $0x28] sm:$0x1f]
          %v1832 = vld [vmem:[%s1825 + $0x30] sm:$0xff]
          %v1833 = vld [vmem:[%s1825 + $0x38] sm:$0x1f]
          %v1834 = vld [vmem:[%s1825 + $0x40] sm:$0xff]
          %v1835 = vld [vmem:[%s1825 + $0x48] sm:$0x1f]
          %v1836 = vperm.slane %v240, 3
          %v1837 = vmul.f32 %v1826, %v1836
          %v1838 = vmul.f32 %v1827, %v1836
          %v1839 = vmul.f32 %v1828, %v1836
          %v1840 = vmul.f32 %v1829, %v1836
          %v1841 = vmul.f32 %v1830, %v1836
          %v1842 = vmul.f32 %v1831, %v1836
          %v1843 = vmul.f32 %v1832, %v1836
          %v1844 = vmul.f32 %v1833, %v1836
          %v1845 = vmul.f32 %v1834, %v1836
          %v1846 = vmul.f32 %v1835, %v1836
          %v1847 = vadd.f32 %v1815, %v1837
          %v1848 = vadd.f32 %v1816, %v1838
          %v1849 = vadd.f32 %v1817, %v1839
          %v1850 = vadd.f32 %v1818, %v1840
          %v1851 = vadd.f32 %v1819, %v1841
          %v1852 = vadd.f32 %v1820, %v1842
          %v1853 = vadd.f32 %v1821, %v1843
          %v1854 = vadd.f32 %v1822, %v1844
          %v1855 = vadd.f32 %v1823, %v1845
          %v1856 = vadd.f32 %v1824, %v1846
          %1857 = vst [vmem:[%s230] sm:$0xff] %v1847
          %1858 = vst [vmem:[%s230 + $0x8] sm:$0x1f] %v1848
          %1859 = vst [vmem:[%s230 + $0x10] sm:$0xff] %v1849
          %1860 = vst [vmem:[%s230 + $0x18] sm:$0x1f] %v1850
          %1861 = vst [vmem:[%s230 + $0x20] sm:$0xff] %v1851
          %1862 = vst [vmem:[%s230 + $0x28] sm:$0x1f] %v1852
          %1863 = vst [vmem:[%s230 + $0x30] sm:$0xff] %v1853
          %1864 = vst [vmem:[%s230 + $0x38] sm:$0x1f] %v1854
          %1865 = vst [vmem:[%s230 + $0x40] sm:$0xff] %v1855
          %1866 = vst [vmem:[%s230 + $0x48] sm:$0x1f] %v1856
        $region44: #{tpu_custom_call.1} parent=27 // pred_fallthru
          _
        %s1867 = sand.u32 %s106, 1
        %s1868 = sand.u32 %s106, 1
        %s1869 = smul.addr %s1868, 128
        %s1870 = scalar_lea.vmem [#allocation7], %s1869
        // Predicated region
        $region45: #{tpu_custom_call.1} parent=27 // pred_check
          %p1871 = pneg %p116
        $region46: #{tpu_custom_call.1} parent=27 // pred_check_branch
          %1873 = sbr.rel (%p1871) target = $region48
        $region47: #{tpu_custom_call.1} parent=27 // pred_region
          %s1874 = smul.u32 8, %s26
          %s1875 = ssub.s32 13, %s1874
          %p1876 = scmp.lt.s32.totalorder %s1875, 8
          %s1877 = scalar_select %p1876, %s1875, 8
          %s1878 = smul.u32 8, %s1877
          %s1879 = smul.u32 %s1878, 2
          %p1880 = scmp.ne.s32.totalorder 0, %s1879
          %s1881 = smul.addr %s1874, 2
          %s1882 = sadd.s32 %s25, %s1881
          %s1883 = smul.addr %s24, 26
          %s1884 = sadd.s32 %s1882, %s1883
          %s1885 = smul.addr %s1884, 8
          %s1886 = scalar_lea.vmem %s2, %s1885
          %s1887 = smul.u32 %s1877, 2
          // Predicated region
          $region49: #{tpu_custom_call.1} parent=47 // pred_check
            %p1888 = pneg %p1880
          $region50: #{tpu_custom_call.1} parent=47 // pred_check_branch
            %1890 = sbr.rel (%p1888) target = $region52
          $region51: #{tpu_custom_call.1} parent=47 // pred_region
            // Predicated region
            $region53: #{tpu_custom_call.1} parent=51 // pred_check
              _
            $region54: #{tpu_custom_call.1} parent=51 // pred_check_branch
              %1892 = sbr.rel (0) target = $region56
            $region55: #{tpu_custom_call.1} parent=51 // pred_region
              // Predicated region
              $region75: #{tpu_custom_call.1} parent=55 // pred_check
                _
              $region76: #{tpu_custom_call.1} parent=55 // pred_check_branch
                %1972 = sbr.rel (0) target = $region78
              $region77: #{tpu_custom_call.1} parent=55 // pred_region
                %s1973 = sshrl.u32 %s1887, 4
                // While loop
                $region79: #{tpu_custom_call.1} parent=77 // loop_pre_header
                  _
                $region80: #{tpu_custom_call.1} parent=77 // loop_header
                  %s1975 = sphi 0, %s1977
                  %p1976 = scmp.ge.s32.totalorder %s1975, %s1973
                  %s1980 = sphi 0, %s2017
                  %s1981 = sphi %s1870, %s2020
                  %s1982 = sphi %s1886, %s2021
                $region81: #{tpu_custom_call.1} parent=77 // loop_header_branch
                  %1979 = sbr.rel (%p1976) target = $region85
                $region82: #{tpu_custom_call.1} parent=77 // loop_body
                  %v1983 = vld [vmem:[%s1981] sm:$0xff]
                  %1984 = vst [vmem:[%s1982] sm:$0xff] %v1983
                  %v1985 = vld [vmem:[%s1981 + $0x8] sm:$0xff]
                  %1986 = vst [vmem:[%s1982 + $0x8] sm:$0xff] %v1985
                  %v1987 = vld [vmem:[%s1981 + $0x10] sm:$0xff]
                  %1988 = vst [vmem:[%s1982 + $0x10] sm:$0xff] %v1987
                  %v1989 = vld [vmem:[%s1981 + $0x18] sm:$0xff]
                  %1990 = vst [vmem:[%s1982 + $0x18] sm:$0xff] %v1989
                  %v1991 = vld [vmem:[%s1981 + $0x20] sm:$0xff]
                  %1992 = vst [vmem:[%s1982 + $0x20] sm:$0xff] %v1991
                  %v1993 = vld [vmem:[%s1981 + $0x28] sm:$0xff]
                  %1994 = vst [vmem:[%s1982 + $0x28] sm:$0xff] %v1993
                  %v1995 = vld [vmem:[%s1981 + $0x30] sm:$0xff]
                  %1996 = vst [vmem:[%s1982 + $0x30] sm:$0xff] %v1995
                  %v1997 = vld [vmem:[%s1981 + $0x38] sm:$0xff]
                  %1998 = vst [vmem:[%s1982 + $0x38] sm:$0xff] %v1997
                  %v1999 = vld [vmem:[%s1981 + $0x40] sm:$0xff]
                  %2000 = vst [vmem:[%s1982 + $0x40] sm:$0xff] %v1999
                  %v2001 = vld [vmem:[%s1981 + $0x48] sm:$0xff]
                  %2002 = vst [vmem:[%s1982 + $0x48] sm:$0xff] %v2001
                  %v2003 = vld [vmem:[%s1981 + $0x50] sm:$0xff]
                  %2004 = vst [vmem:[%s1982 + $0x50] sm:$0xff] %v2003
                  %v2005 = vld [vmem:[%s1981 + $0x58] sm:$0xff]
                  %2006 = vst [vmem:[%s1982 + $0x58] sm:$0xff] %v2005
                  %v2007 = vld [vmem:[%s1981 + $0x60] sm:$0xff]
                  %2008 = vst [vmem:[%s1982 + $0x60] sm:$0xff] %v2007
                  %v2009 = vld [vmem:[%s1981 + $0x68] sm:$0xff]
                  %2010 = vst [vmem:[%s1982 + $0x68] sm:$0xff] %v2009
                  %v2011 = vld [vmem:[%s1981 + $0x70] sm:$0xff]
                  %2012 = vst [vmem:[%s1982 + $0x70] sm:$0xff] %v2011
                  %v2013 = vld [vmem:[%s1981 + $0x78] sm:$0xff]
                  %2014 = vst [vmem:[%s1982 + $0x78] sm:$0xff] %v2013
                  %s2015 = sadd.s32 1, %s1980
                  %p2016 = scmp.ge.s32.totalorder %s2015, %s1973
                  %s2017 = scalar_select %p2016, 0, %s2015
                  %s2018 = smul.u32 %s2017, 128
                  %s2019 = smul.u32 %s2017, 128
                  %s2020 = scalar_lea.vmem %s1870, %s2018 [#allocation7]
                  %s2021 = scalar_lea.vmem %s1886, %s2019
                $region83: #{tpu_custom_call.1} parent=77 // loop_footer
                  %s1977 = sadd.s32 %s1975, 1
                $region84: #{tpu_custom_call.1} parent=77 // loop_footer_branch
                  %1974 = sbr.rel target = $region80
                $region85: #{tpu_custom_call.1} parent=77 // loop_exit
                  _
                %s2022 = sshrl.u32 %s1887, 4
                %s2023 = sand.u32 %s1887, 15
                %s2024 = smul.u32 %s2022, 16
                %s2025 = smul.u32 8, %s2024
                %s2026 = scalar_lea.vmem %s1870, %s2025 [#allocation7]
                %s2027 = smul.u32 8, %s2024
                %s2028 = scalar_lea.vmem %s1886, %s2027
                // While loop
                $region86: #{tpu_custom_call.1} parent=77 // loop_pre_header
                  _
                $region87: #{tpu_custom_call.1} parent=77 // loop_header
                  %s2030 = sphi 0, %s2032
                  %p2031 = scmp.ge.s32.totalorder %s2030, %s2023
                  %s2035 = sphi 0, %s2042
                  %s2036 = sphi %s2026, %s2045
                  %s2037 = sphi %s2028, %s2046
                $region88: #{tpu_custom_call.1} parent=77 // loop_header_branch
                  %2034 = sbr.rel (%p2031) target = $region92
                $region89: #{tpu_custom_call.1} parent=77 // loop_body
                  %v2038 = vld [vmem:[%s2036] sm:$0xff]
                  %2039 = vst [vmem:[%s2037] sm:$0xff] %v2038
                  %s2040 = sadd.s32 1, %s2035
                  %p2041 = scmp.ge.s32.totalorder %s2040, %s2023
                  %s2042 = scalar_select %p2041, 0, %s2040
                  %s2043 = smul.u32 %s2042, 8
                  %s2044 = smul.u32 %s2042, 8
                  %s2045 = scalar_lea.vmem %s2026, %s2043 [#allocation7]
                  %s2046 = scalar_lea.vmem %s2028, %s2044
                $region90: #{tpu_custom_call.1} parent=77 // loop_footer
                  %s2032 = sadd.s32 %s2030, 1
                $region91: #{tpu_custom_call.1} parent=77 // loop_footer_branch
                  %2029 = sbr.rel target = $region87
                $region92: #{tpu_custom_call.1} parent=77 // loop_exit
                  _
              $region78: #{tpu_custom_call.1} parent=55 // pred_fallthru
                _
              // Predicated region
              $region93: #{tpu_custom_call.1} parent=55 // pred_check
                _
              $region94: #{tpu_custom_call.1} parent=55 // pred_check_branch
                %2048 = sbr.rel target = $region96
              $region95: #{tpu_custom_call.1} parent=55 // pred_region
                _
              $region96: #{tpu_custom_call.1} parent=55 // pred_fallthru
                _
            $region56: #{tpu_custom_call.1} parent=51 // pred_fallthru
              _
            // Predicated region
            $region57: #{tpu_custom_call.1} parent=51 // pred_check
              _
            $region58: #{tpu_custom_call.1} parent=51 // pred_check_branch
              %1894 = sbr.rel target = $region60
            $region59: #{tpu_custom_call.1} parent=51 // pred_region
              %s1896 = ssub.s32 256, 1
              %s1897 = sshrl.u32 %s1887, 4
              // While loop
              $region61: #{tpu_custom_call.1} parent=59 // loop_pre_header
                _
              $region62: #{tpu_custom_call.1} parent=59 // loop_header
                %s1899 = sphi 0, %s1901
                %p1900 = scmp.ge.s32.totalorder %s1899, %s1897
                %s1904 = sphi 0, %s1941
                %s1905 = sphi %s1870, %s1944
                %s1906 = sphi %s1886, %s1945
              $region63: #{tpu_custom_call.1} parent=59 // loop_header_branch
                %1903 = sbr.rel (%p1900) target = $region67
              $region64: #{tpu_custom_call.1} parent=59 // loop_body
                %v1907 = vld [vmem:[%s1905] sm:%s1896]
                %1908 = vst [vmem:[%s1906] sm:%s1896] %v1907
                %v1909 = vld [vmem:[%s1905 + $0x8] sm:%s1896]
                %1910 = vst [vmem:[%s1906 + $0x8] sm:%s1896] %v1909
                %v1911 = vld [vmem:[%s1905 + $0x10] sm:%s1896]
                %1912 = vst [vmem:[%s1906 + $0x10] sm:%s1896] %v1911
                %v1913 = vld [vmem:[%s1905 + $0x18] sm:%s1896]
                %1914 = vst [vmem:[%s1906 + $0x18] sm:%s1896] %v1913
                %v1915 = vld [vmem:[%s1905 + $0x20] sm:%s1896]
                %1916 = vst [vmem:[%s1906 + $0x20] sm:%s1896] %v1915
                %v1917 = vld [vmem:[%s1905 + $0x28] sm:%s1896]
                %1918 = vst [vmem:[%s1906 + $0x28] sm:%s1896] %v1917
                %v1919 = vld [vmem:[%s1905 + $0x30] sm:%s1896]
                %1920 = vst [vmem:[%s1906 + $0x30] sm:%s1896] %v1919
                %v1921 = vld [vmem:[%s1905 + $0x38] sm:%s1896]
                %1922 = vst [vmem:[%s1906 + $0x38] sm:%s1896] %v1921
                %v1923 = vld [vmem:[%s1905 + $0x40] sm:%s1896]
                %1924 = vst [vmem:[%s1906 + $0x40] sm:%s1896] %v1923
                %v1925 = vld [vmem:[%s1905 + $0x48] sm:%s1896]
                %1926 = vst [vmem:[%s1906 + $0x48] sm:%s1896] %v1925
                %v1927 = vld [vmem:[%s1905 + $0x50] sm:%s1896]
                %1928 = vst [vmem:[%s1906 + $0x50] sm:%s1896] %v1927
                %v1929 = vld [vmem:[%s1905 + $0x58] sm:%s1896]
                %1930 = vst [vmem:[%s1906 + $0x58] sm:%s1896] %v1929
                %v1931 = vld [vmem:[%s1905 + $0x60] sm:%s1896]
                %1932 = vst [vmem:[%s1906 + $0x60] sm:%s1896] %v1931
                %v1933 = vld [vmem:[%s1905 + $0x68] sm:%s1896]
                %1934 = vst [vmem:[%s1906 + $0x68] sm:%s1896] %v1933
                %v1935 = vld [vmem:[%s1905 + $0x70] sm:%s1896]
                %1936 = vst [vmem:[%s1906 + $0x70] sm:%s1896] %v1935
                %v1937 = vld [vmem:[%s1905 + $0x78] sm:%s1896]
                %1938 = vst [vmem:[%s1906 + $0x78] sm:%s1896] %v1937
                %s1939 = sadd.s32 1, %s1904
                %p1940 = scmp.ge.s32.totalorder %s1939, %s1897
                %s1941 = scalar_select %p1940, 0, %s1939
                %s1942 = smul.u32 %s1941, 128
                %s1943 = smul.u32 %s1941, 128
                %s1944 = scalar_lea.vmem %s1870, %s1942 [#allocation7]
                %s1945 = scalar_lea.vmem %s1886, %s1943
              $region65: #{tpu_custom_call.1} parent=59 // loop_footer
                %s1901 = sadd.s32 %s1899, 1
              $region66: #{tpu_custom_call.1} parent=59 // loop_footer_branch
                %1898 = sbr.rel target = $region62
              $region67: #{tpu_custom_call.1} parent=59 // loop_exit
                _
              %s1946 = sshrl.u32 %s1887, 4
              %s1947 = sand.u32 %s1887, 15
              %s1948 = smul.u32 %s1946, 16
              %s1949 = smul.u32 8, %s1948
              %s1950 = scalar_lea.vmem %s1870, %s1949 [#allocation7]
              %s1951 = smul.u32 8, %s1948
              %s1952 = scalar_lea.vmem %s1886, %s1951
              // While loop
              $region68: #{tpu_custom_call.1} parent=59 // loop_pre_header
                _
              $region69: #{tpu_custom_call.1} parent=59 // loop_header
                %s1954 = sphi 0, %s1956
                %p1955 = scmp.ge.s32.totalorder %s1954, %s1947
                %s1959 = sphi 0, %s1966
                %s1960 = sphi %s1950, %s1969
                %s1961 = sphi %s1952, %s1970
              $region70: #{tpu_custom_call.1} parent=59 // loop_header_branch
                %1958 = sbr.rel (%p1955) target = $region74
              $region71: #{tpu_custom_call.1} parent=59 // loop_body
                %v1962 = vld [vmem:[%s1960] sm:%s1896]
                %1963 = vst [vmem:[%s1961] sm:%s1896] %v1962
                %s1964 = sadd.s32 1, %s1959
                %p1965 = scmp.ge.s32.totalorder %s1964, %s1947
                %s1966 = scalar_select %p1965, 0, %s1964
                %s1967 = smul.u32 %s1966, 8
                %s1968 = smul.u32 %s1966, 8
                %s1969 = scalar_lea.vmem %s1950, %s1967 [#allocation7]
                %s1970 = scalar_lea.vmem %s1952, %s1968
              $region72: #{tpu_custom_call.1} parent=59 // loop_footer
                %s1956 = sadd.s32 %s1954, 1
              $region73: #{tpu_custom_call.1} parent=59 // loop_footer_branch
                %1953 = sbr.rel target = $region69
              $region74: #{tpu_custom_call.1} parent=59 // loop_exit
                _
            $region60: #{tpu_custom_call.1} parent=51 // pred_fallthru
              _
          $region52: #{tpu_custom_call.1} parent=47 // pred_fallthru
            _
          %2049 = vnop
        $region48: #{tpu_custom_call.1} parent=27 // pred_fallthru
          _
      $region28: #{tpu_custom_call.1} parent=5 // pred_fallthru
        _
      %p2050 = scmp.le.s32.totalorder 2, %s14
      // Predicated region
      $region97: #{tpu_custom_call.1} parent=5 // pred_check
        %p2051 = pneg %p2050
      $region98: #{tpu_custom_call.1} parent=5 // pred_check_branch
        %2053 = sbr.rel (%p2051) target = $region100
      $region99: #{tpu_custom_call.1} parent=5 // pred_region
        %s2054 = ssub.s32 %s14, 2
        // Predicated region
        $region101: #{tpu_custom_call.1} parent=99 // pred_check
          %p2055 = pneg %p122
        $region102: #{tpu_custom_call.1} parent=99 // pred_check_branch
          %2057 = sbr.rel (%p2055) target = $region104
        $region103: #{tpu_custom_call.1} parent=99 // pred_region
          %s2058 = sand.u32 %s107, 1
          %s2059 = sand.u32 %s107, 1
          %s2060 = smul.addr %s2059, 128
          %s2061 = scalar_lea.vmem [#allocation7], %s2060
        $region104: #{tpu_custom_call.1} parent=99 // pred_fallthru
          _
      $region100: #{tpu_custom_call.1} parent=5 // pred_fallthru
        _
    $region6: #{tpu_custom_call.1} parent=1 // loop_footer
      %s18 = sadd.s32 1, %s14
    $region7: #{tpu_custom_call.1} parent=1 // loop_footer_branch
      %13 = sbr.rel target = $region3
    $region8: #{tpu_custom_call.1} parent=1 // loop_exit
      _
    %2062 = vsyncpa [#allocation4], 1
    %s2063 = scalar_lea.sflag [#allocation4], 1
    %2064 = vsyncpa %s2063, 1
    %2065 = vsyncpa [#allocation6], 1
    %s2066 = scalar_lea.sflag [#allocation6], 1
    %2067 = vsyncpa %s2066, 1

</llo_original>
